<compile_context>
chip_gen: v5e
topology: v5e:2x2
jax: 0.10.0
libtpu: 0.0.40
codegen_flags: <defaults>
</compile_context>

<pallas_src>
import jax
import jax.numpy as jnp
from jax.experimental import pallas as pl

# ---------------- config (small shapes consistent with MambaMIM.__init__) ----------
B = 2
IN_CHANS = 1
INPUT_SIZE = 16
DOWNSAMPLE = 8                          # sparse_encoder.downsample_raito
FMAP = INPUT_SIZE // DOWNSAMPLE         # fmap_h = fmap_w = fmap_d = 2
ENC_CHS = (16, 32)                      # sparse_encoder.enc_feat_map_chs (shallow->deep)
DEC_WIDTH = 24                          # dense_decoder.width
MASK_RATIO = 0.6
N_PATCH = FMAP ** 3                     # 8 tokens at the deepest resolution
LEN_KEEP = round(N_PATCH * (1 - MASK_RATIO))   # = 3
K4 = DOWNSAMPLE // 2                    # stage-1 patch size = 4
F1 = INPUT_SIZE // K4                   # stage-1 feature resolution = 4
NPOS = (DOWNSAMPLE // 2) ** 3           # 64 distinct decoder positions per deep patch


# ================================ Pallas kernels ====================================

def _matmul_bias_kernel(x_ref, w_ref, b_ref, o_ref):
    # bf16 operands, f32 accumulation, f32 store.
    o_ref[...] = (jnp.dot(x_ref[...], w_ref[...], preferred_element_type=jnp.float32)
                  + b_ref[...]).astype(o_ref.dtype)


def _matmul_bias_mask_kernel(x_ref, w_ref, b_ref, m_ref, o_ref):
    # matmul + bias with the sparse-mask "where(active, y, 0)" fused as an epilogue.
    acc = jnp.dot(x_ref[...], w_ref[...], preferred_element_type=jnp.float32) + b_ref[...]
    o_ref[...] = jnp.where(m_ref[...] != 0.0, acc, 0.0).astype(o_ref.dtype)


def _manba_ax_kernel(x_ref, w_ref, sel_ref, fold_ref, o_ref):
    # S6T interpolation AX[p] = A^power[p] @ X[p] for ALL B*N tokens at once.
    #   x    : (P, C)      interpolated tokens
    #   w    : (C, K*C)    concat of (A^k)^T over k = 0..K-1 (lane-dense, MXU)
    #   sel  : (P, K*C)    one-hot(power[p]) broadcast over the C lanes of block k
    #   fold : (K*C, C)    tiled identity -> sums the selected block back to C lanes
    y = jnp.dot(x_ref[...], w_ref[...], preferred_element_type=jnp.float32)     # (P, K*C)
    o_ref[...] = jnp.dot(y * sel_ref[...], fold_ref[...],
                         preferred_element_type=jnp.float32)                    # (P, C)


def _densify_decode_loss_kernel(f2_ref, mtok_ref, act_ref,         # densify hierarchy 0
                                pw_ref, pb_ref,                    # 1x1x1 proj 32->24
                                skip_ref,                          # densified hierarchy 1
                                w0_ref, b0_ref, w1_ref, b1_ref,    # fused decoder
                                w2_ref, b2_ref, wp_ref, bp_ref,
                                inp_ref, o_ref):
    """Fused: where(active, f2, manba_mask) -> densify proj0 -> light decoder
    (block-diagonal wide matmuls, one row per deepest patch, up-sampled grid on the
    lane axis) -> patch-normalised masked reconstruction loss."""
    bf = jnp.bfloat16
    act = act_ref[...]                                                               # (R, 1)
    # densify hierarchy 0 (where prologue + 1x1x1 conv 32 -> 24)
    x = jnp.where(act != 0.0, f2_ref[...], mtok_ref[...])                            # (R, 32)
    x0 = jnp.dot(x.astype(bf), pw_ref[...],
                 preferred_element_type=jnp.float32) + pb_ref[...]                   # (R, 24)
    # decoder stage 0: relu(up2(x) @ W0 + b0) + skip   (skip already lane-packed)
    v = jnp.maximum(jnp.dot(x0.astype(bf), w0_ref[...],
                            preferred_element_type=jnp.float32) + b0_ref[...], 0.0)
    v = v + skip_ref[...]                                                            # (R, 768)
    # decoder stages 1..3 (block-diagonal 1x1x1 convs 12->6->3->IN_CHANS)
    v = jnp.maximum(jnp.dot(v.astype(bf), w1_ref[...],
                            preferred_element_type=jnp.float32) + b1_ref[...], 0.0)  # (R, 384)
    v = jnp.maximum(jnp.dot(v.astype(bf), w2_ref[...],
                            preferred_element_type=jnp.float32) + b2_ref[...], 0.0)  # (R, 192)
    rec = jnp.dot(v.astype(bf), wp_ref[...],
                  preferred_element_type=jnp.float32) + bp_ref[...]                  # (R, 64)
    # reconstructed 16^3 volume is constant over 2x2x2 blocks -> lane-tile to the
    # permuted/grouped patch layout used for the (permutation-invariant) loss.
    rec_full = jnp.concatenate([rec] * 8, axis=1)                                    # (R, 512)

    # patch-normalised masked reconstruction loss
    inp = inp_ref[...]                                                               # (R, 512)
    E = inp.shape[-1]
    mean = jnp.sum(inp, axis=-1, keepdims=True) * (1.0 / E)
    cent = inp - mean
    var = jnp.sum(cent * cent, axis=-1, keepdims=True) * (1.0 / (E - 1))  # unbiased (torch.var)
    inp_n = cent * jax.lax.rsqrt(var + 1e-6)
    diff = rec_full - inp_n
    l2 = jnp.sum(diff * diff, axis=-1, keepdims=True) * (1.0 / E)                    # (R, 1)
    na = 1.0 - act                                                                   # (R, 1)
    num = jnp.sum(l2 * na)
    den = jnp.sum(na)
    o_ref[...] = (num / (den + 1e-8)).reshape(1, 1)


# ================================ kernel wrappers ===================================

def pallas_matmul_bias(x, w, b):
    M, _ = x.shape
    N = w.shape[1]
    return pl.pallas_call(
        _matmul_bias_kernel,
        out_shape=jax.ShapeDtypeStruct((M, N), jnp.float32),
    )(x, w, b.reshape(1, N).astype(jnp.float32))


def pallas_matmul_bias_mask(x, w, b, mask_rows):
    M, _ = x.shape
    N = w.shape[1]
    return pl.pallas_call(
        _matmul_bias_mask_kernel,
        out_shape=jax.ShapeDtypeStruct((M, N), jnp.float32),
    )(x, w, b.reshape(1, N).astype(jnp.float32), mask_rows)


def pallas_manba_ax(x_pc, w_cat, sel_exp, fold):
    P, C = x_pc.shape
    return pl.pallas_call(
        _manba_ax_kernel,
        out_shape=jax.ShapeDtypeStruct((P, C), jnp.float32),
    )(x_pc.astype(jnp.float32), w_cat.astype(jnp.float32),
      sel_exp.astype(jnp.float32), fold.astype(jnp.float32))


# ---------------------------- S6T "manba_mask" ---------------------------------------

def manba_mask_cl(x_bnc, cur_active_bn, A):
    """Vectorised MambaMIM.manba_mask / mask_token_every_batch on channel-last tokens.

    Returns the mask tokens as channel-last (B, N, C) rows, including the reference's
    raw (position-major -> channel-major) reshape of AX, reproduced bit-faithfully.
    """
    Bn, N, C = x_bnc.shape
    flag = cur_active_bn
    flag = flag.at[:, 0].set(True).at[:, -1].set(True)

    idx = jnp.arange(N)
    prev = jax.lax.associative_scan(jnp.maximum, jnp.where(flag, idx, -1), axis=1)
    big = N + 1
    nxt_incl = jax.lax.associative_scan(jnp.minimum, jnp.where(flag, idx, big),
                                        axis=1, reverse=True)
    nxt = jnp.concatenate([nxt_incl[:, 1:], jnp.full((Bn, 1), big, idx.dtype)], axis=1)

    is_last = (idx[None, :] == N - 1)
    gap = nxt - prev
    power = jnp.where(is_last, 1, nxt - 1 - idx[None, :])            # A^(max_power - j)
    alpha = jnp.where(gap > 1,
                      (idx[None, :] - prev).astype(jnp.float32)
                      / jnp.maximum(gap - 1, 1).astype(jnp.float32),
                      0.0)
    alpha = jnp.where(is_last, 0.0, alpha)                           # torch.linspace(0,1,g)

    # matrix powers A^0 .. A^(N-1) (torch.linalg.matrix_power) - tiny, host side.
    # Packed so the per-token power selection runs on the MXU inside the kernel
    # (no (B, N, C, C) gather materialised in HBM).
    pows = [jnp.eye(C, dtype=jnp.float32)]
    for _ in range(N - 1):
        pows.append(pows[-1] @ A)
    A_pows = jnp.stack(pows, axis=0)                                 # (N, C, C)
    w_cat = jnp.transpose(A_pows, (2, 0, 1)).reshape(C, N * C)       # [ (A^k)^T ]_k
    fold = jnp.tile(jnp.eye(C, dtype=jnp.float32), (N, 1))           # (N*C, C)
    onehot = (power[..., None] == jnp.arange(N)).astype(jnp.float32) # (B, N, K)
    sel_exp = jnp.repeat(onehot.reshape(Bn * N, N), C, axis=1)       # (B*N, K*C)

    nxt_safe = jnp.clip(nxt, 0, N - 1)
    gather = lambda ind: jnp.take_along_axis(
        x_bnc, jnp.broadcast_to(ind[..., None], (Bn, N, C)), axis=1)
    X_tok = (1.0 - alpha[..., None]) * gather(prev) + alpha[..., None] * gather(nxt_safe)

    # AX = A^power @ X_token : single Pallas invocation, two lane-dense MXU matmuls
    AX = pallas_manba_ax(X_tok.reshape(Bn * N, C), w_cat, sel_exp, fold).reshape(Bn, N, C)

    # segmented cumulative sum over each [segment_start, p] range (list(accumulate(.)))
    cs = jnp.cumsum(AX, axis=1)
    cs_pad = jnp.concatenate([jnp.zeros((Bn, 1, C), cs.dtype), cs], axis=1)
    base = jnp.take_along_axis(cs_pad, jnp.broadcast_to(prev[..., None], (Bn, N, C)), axis=1)
    mask_token = cs - base                                           # (B, N, C) token-major

    # Faithful to the PyTorch reference: `AX.reshape(B, N, H, L, W)` (with N == C)
    # is a raw position-major -> channel-major reinterpretation.  Converting that
    # scrambled (B, C, H, L, W) tensor back into channel-last token rows gives:
    return mask_token.reshape(Bn, C, N).swapaxes(1, 2)               # (B, N, C)


# ------------------------------ mask generation --------------------------------------

def make_mask(key):
    noise = jax.random.uniform(key, (B, N_PATCH))
    idx = jnp.argsort(noise, axis=1)[:, :LEN_KEEP]
    act = jnp.zeros((B, N_PATCH), dtype=bool)
    act = act.at[jnp.arange(B)[:, None], idx].set(True)
    return act.reshape(B, 1, FMAP, FMAP, FMAP)


# ------------------------------ parameters -------------------------------------------

def init_params(key):
    ks = jax.random.split(key, 16)
    scale = 0.02
    p = {}
    # MambaMIM parameters
    p["A"] = jnp.zeros((1, ENC_CHS[-1], ENC_CHS[-1]), jnp.float32)   # A_interpolation
    p["mask_tokens"] = [
        scale * jax.random.truncated_normal(ks[0], -1.0, 1.0, (1, ENC_CHS[-1], 1, 1, 1)),
        scale * jax.random.truncated_normal(ks[1], -1.0, 1.0, (1, ENC_CHS[0], 1, 1, 1)),
    ]
    # densify_projs: i=0 -> 1x1x1 conv 32->24 ; i=1 -> 3x3x3 conv 16->12
    p["proj0_w"] = scale * jax.random.normal(ks[2], (ENC_CHS[-1], DEC_WIDTH))
    p["proj0_b"] = jnp.zeros((DEC_WIDTH,), jnp.float32)
    p["proj1_w"] = scale * jax.random.normal(ks[3], (27 * ENC_CHS[0], DEC_WIDTH // 2))
    p["proj1_b"] = jnp.zeros((DEC_WIDTH // 2,), jnp.float32)
    # synthetic sparse encoder (patch-embed style stages)
    p["enc_w1"] = scale * jax.random.normal(ks[4], (IN_CHANS * K4 ** 3, ENC_CHS[0]))
    p["enc_b1"] = jnp.zeros((ENC_CHS[0],), jnp.float32)
    p["enc_w2"] = scale * jax.random.normal(ks[5], (ENC_CHS[0] * 2 ** 3, ENC_CHS[1]))
    p["enc_b2"] = jnp.zeros((ENC_CHS[1],), jnp.float32)
    # synthetic light decoder: 24 -> 12 -> 6 -> 3 -> IN_CHANS (1x1x1 convs after up2)
    dec_w0 = scale * jax.random.normal(ks[6], (DEC_WIDTH, DEC_WIDTH // 2))
    dec_b0 = jnp.zeros((DEC_WIDTH // 2,), jnp.float32)
    dec_w1 = scale * jax.random.normal(ks[7], (DEC_WIDTH // 2, DEC_WIDTH // 4))
    dec_b1 = jnp.zeros((DEC_WIDTH // 4,), jnp.float32)
    dec_w2 = scale * jax.random.normal(ks[8], (DEC_WIDTH // 4, DEC_WIDTH // 8))
    dec_b2 = jnp.zeros((DEC_WIDTH // 8,), jnp.float32)
    dec_pw = scale * jax.random.normal(ks[9], (DEC_WIDTH // 8, IN_CHANS))
    dec_pb = jnp.zeros((IN_CHANS,), jnp.float32)
    # Pre-packed "wide" decoder weights for the fused kernel: one row per deepest
    # patch, the up-sampled 4x4x4 grid lives on the lane axis, so each 1x1x1 conv
    # becomes a block-diagonal (kron) matmul; weights are stored bf16 for the MXU.
    eye = jnp.eye(NPOS, dtype=jnp.float32)
    p["dec_w0_wide"] = jnp.tile(dec_w0, (1, NPOS)).astype(jnp.bfloat16)   # (24, 768)
    p["dec_b0_wide"] = jnp.tile(dec_b0, NPOS)                              # (768,)
    p["dec_w1_bd"] = jnp.kron(eye, dec_w1).astype(jnp.bfloat16)            # (768, 384)
    p["dec_b1_wide"] = jnp.tile(dec_b1, NPOS)
    p["dec_w2_bd"] = jnp.kron(eye, dec_w2).astype(jnp.bfloat16)            # (384, 192)
    p["dec_b2_wide"] = jnp.tile(dec_b2, NPOS)
    p["dec_pw_bd"] = jnp.kron(eye, dec_pw).astype(jnp.bfloat16)            # (192, 64)
    p["dec_pb_wide"] = jnp.tile(dec_pb, NPOS)
    return p


# ------------------------------ MambaMIM forward -------------------------------------

def mambamim_forward(params, inp_bchwd, active_b1fff):
    Bn = inp_bchwd.shape[0]
    bf = jnp.bfloat16

    act2 = active_b1fff[:, 0]                                      # (B, 2, 2, 2) bool
    act_flat = act2.reshape(Bn, N_PATCH)                           # (B, 8)
    act_rows = act_flat.reshape(Bn * N_PATCH, 1).astype(jnp.float32)
    act4 = jnp.broadcast_to(act2.reshape(Bn, FMAP, 1, FMAP, 1, FMAP, 1),
                            (Bn, FMAP, 2, FMAP, 2, FMAP, 2)).reshape(Bn, F1, F1, F1)
    act4_rows = act4.reshape(Bn * F1 ** 3, 1).astype(jnp.float32)

    # --- synthetic sparse encoder stand-in --------------------------------------------
    # TODO(synk): real SparseEncoder (Mamba backbone) is external; replaced by masked
    #             patch-embed stages with the same feature-map channels / resolutions.
    # Each 4^3 / 2^3 patch lies entirely inside one mask cell, so masking the input
    # (512x repeat_interleave in the reference) is equivalent to masking the conv
    # output -> the where is fused into the matmul kernels and no full-resolution
    # repeated mask is ever materialised.
    rows1 = inp_bchwd.reshape(Bn, IN_CHANS, F1, K4, F1, K4, F1, K4)
    rows1 = rows1.transpose(0, 2, 4, 6, 3, 5, 7, 1).reshape(Bn * F1 ** 3, K4 ** 3 * IN_CHANS)
    f1 = pallas_matmul_bias_mask(rows1.astype(bf), params["enc_w1"].astype(bf),
                                 params["enc_b1"], act4_rows)                  # (B*64, 16)
    f1_5d = f1.reshape(Bn, F1, F1, F1, ENC_CHS[0])

    rows2 = f1_5d.reshape(Bn, FMAP, 2, FMAP, 2, FMAP, 2, ENC_CHS[0])
    rows2 = rows2.transpose(0, 1, 3, 5, 2, 4, 6, 7).reshape(Bn * N_PATCH, 8 * ENC_CHS[0])
    f2 = pallas_matmul_bias_mask(rows2.astype(bf), params["enc_w2"].astype(bf),
                                 params["enc_b2"], act_rows)                   # (B*8, 32)

    # --- densify hierarchy 0: S6T manba_mask tokens (where + proj fused further down) -
    mtok0 = manba_mask_cl(f2.reshape(Bn, N_PATCH, ENC_CHS[-1]), act_flat, params["A"][0])
    mtok0 = mtok0.reshape(Bn * N_PATCH, ENC_CHS[-1]).astype(jnp.float32)

    # --- densify hierarchy 1: where(active, f1, mask_token) + 3x3x3 conv 16 -> 12 -----
    mtok1 = params["mask_tokens"][1].reshape(ENC_CHS[0])
    y = jnp.where(act4[..., None], f1_5d, mtok1)
    ypad = jnp.pad(y, ((0, 0), (1, 1), (1, 1), (1, 1), (0, 0)))
    # TODO(synk): at realistic sizes build this halo/im2col in-kernel from a haloed
    #             VMEM block instead of materialising the 27-tap tensor in HBM.
    taps = [ypad[:, dh:dh + F1, dw:dw + F1, dd:dd + F1, :]
            for dh in range(3) for dw in range(3) for dd in range(3)]
    cols = jnp.stack(taps, axis=4).reshape(Bn * F1 ** 3, 27 * ENC_CHS[0])
    to_dec1 = pallas_matmul_bias(cols.astype(bf), params["proj1_w"].astype(bf),
                                 params["proj1_b"])                            # (B*64, 12)

    # regroup the skip feature to (row = deepest patch, lanes = up-sampled grid x chan)
    skip = to_dec1.reshape(Bn, FMAP, 2, FMAP, 2, FMAP, 2, DEC_WIDTH // 2)
    skip = skip.transpose(0, 1, 3, 5, 2, 4, 6, 7)                  # (B, i,j,k, P,Q,S, 12)
    skip = skip.reshape(Bn * N_PATCH, 2, 1, 2, 1, 2, 1, DEC_WIDTH // 2)
    skip = jnp.broadcast_to(skip, (Bn * N_PATCH, 2, 2, 2, 2, 2, 2, DEC_WIDTH // 2))
    skip = skip.reshape(Bn * N_PATCH, NPOS * (DEC_WIDTH // 2)).astype(jnp.float32)

    # permuted/grouped patchify of the input (columns reordered so each reconstructed
    # value covers 8 consecutive lane groups; the per-patch loss is permutation
    # invariant so this matches the reference patchify semantics exactly).
    inp_g = inp_bchwd.reshape(Bn, IN_CHANS, FMAP, 4, 2, FMAP, 4, 2, FMAP, 4, 2)
    inp_g = inp_g.transpose(0, 2, 5, 8, 4, 7, 10, 3, 6, 9, 1)
    inp_g = inp_g.reshape(Bn * N_PATCH, 8 * NPOS * IN_CHANS)       # (B*8, 512)

    # --- fused: densify-proj0 + dense decoder + masked patch-norm loss ---------------
    # TODO(synk): real LightDecoder (deconv UNet blocks) is external; replaced by
    #             nearest-upsample + 1x1x1 conv blocks of matching widths, fused here.
    loss = pl.pallas_call(
        _densify_decode_loss_kernel,
        out_shape=jax.ShapeDtypeStruct((1, 1), jnp.float32),
    )(f2, mtok0, act_rows,
      params["proj0_w"].astype(bf), params["proj0_b"].reshape(1, -1),
      skip,
      params["dec_w0_wide"], params["dec_b0_wide"].reshape(1, -1),
      params["dec_w1_bd"], params["dec_b1_wide"].reshape(1, -1),
      params["dec_w2_bd"], params["dec_b2_wide"].reshape(1, -1),
      params["dec_pw_bd"], params["dec_pb_wide"].reshape(1, -1),
      inp_g)
    return loss[0, 0]


# ======================================================================================

if __name__ == "__main__":
    key = jax.random.PRNGKey(0)
    k_param, k_inp, k_mask = jax.random.split(key, 3)

    params = init_params(k_param)
    inp = jax.random.normal(k_inp, (B, IN_CHANS, INPUT_SIZE, INPUT_SIZE, INPUT_SIZE),
                            dtype=jnp.float32)
    active_b1fff = make_mask(k_mask)

    fwd = jax.jit(mambamim_forward)
    loss = fwd(params, inp, active_b1fff)
    jax.block_until_ready(loss)
    assert loss.shape == () and jnp.isfinite(loss)
    print("KERNEL_OK")
</pallas_src>

<mosaic_0001>
module attributes {stable_mosaic.version = 11 : i64} {
  func.func @_matmul_bias_mask_kernel(%arg0: memref<128x64xbf16, #tpu.memory_space<vmem>>, %arg1: memref<64x16xbf16, #tpu.memory_space<vmem>>, %arg2: memref<1x16xf32, #tpu.memory_space<vmem>>, %arg3: memref<128x1xf32, #tpu.memory_space<vmem>>, %arg4: memref<128x16xf32, #tpu.memory_space<vmem>>) attributes {dimension_semantics = [], scalar_prefetch = 0 : i64, scratch_operands = 0 : i64, tpu.core_type = #tpu.core_type<tc>} {
    %c0 = arith.constant 0 : index
    %c0_0 = arith.constant 0 : index
    %0 = vector.load %arg0[%c0, %c0_0] : memref<128x64xbf16, #tpu.memory_space<vmem>>, vector<128x64xbf16>
    %c0_1 = arith.constant 0 : index
    %c0_2 = arith.constant 0 : index
    %1 = vector.load %arg1[%c0_1, %c0_2] : memref<64x16xbf16, #tpu.memory_space<vmem>>, vector<64x16xbf16>
    %cst = arith.constant dense<0.000000e+00> : vector<128x16xf32>
    %2 = tpu.matmul %0, %1, %cst {dimension_numbers = #tpu.dot_dimension_numbers<[1], [0], [0], [1], [0, 0, 1, 1], [], []>} : vector<128x64xbf16>, vector<64x16xbf16>, vector<128x16xf32> -> vector<128x16xf32>
    %c0_3 = arith.constant 0 : index
    %c0_4 = arith.constant 0 : index
    %3 = vector.load %arg2[%c0_3, %c0_4] : memref<1x16xf32, #tpu.memory_space<vmem>>, vector<1x16xf32>
    %4 = vector.broadcast %3 : vector<1x16xf32> to vector<128x16xf32>
    %5 = arith.addf %2, %4 : vector<128x16xf32>
    %c0_5 = arith.constant 0 : index
    %c0_6 = arith.constant 0 : index
    %6 = vector.load %arg3[%c0_5, %c0_6] : memref<128x1xf32, #tpu.memory_space<vmem>>, vector<128x1xf32>
    %cst_7 = arith.constant 0.000000e+00 : f32
    %7 = vector.broadcast %cst_7 : f32 to vector<128x1xf32>
    %8 = arith.cmpf one, %6, %7 : vector<128x1xf32>
    %cst_8 = arith.constant 0.000000e+00 : f32
    %9 = vector.shape_cast %8 : vector<128x1xi1> to vector<128x1xi1>
    %10 = vector.broadcast %9 : vector<128x1xi1> to vector<128x16xi1>
    %11 = vector.broadcast %cst_8 : f32 to vector<128x16xf32>
    %12 = arith.select %10, %5, %11 : vector<128x16xi1>, vector<128x16xf32>
    %c0_9 = arith.constant 0 : index
    %c0_10 = arith.constant 0 : index
    %13 = vector.load %arg4[%c0_9, %c0_10] : memref<128x16xf32, #tpu.memory_space<vmem>>, vector<128x16xf32>
    tpu.vector_store %arg4[%c0_9, %c0_10], %12 {strides = array<i32>} : memref<128x16xf32, #tpu.memory_space<vmem>>, vector<128x16xf32>,
    return
  }
}

module attributes {stable_mosaic.version = 11 : i64} {
  func.func @_matmul_bias_kernel(%arg0: memref<128x432xbf16, #tpu.memory_space<vmem>>, %arg1: memref<432x12xbf16, #tpu.memory_space<vmem>>, %arg2: memref<1x12xf32, #tpu.memory_space<vmem>>, %arg3: memref<128x12xf32, #tpu.memory_space<vmem>>) attributes {dimension_semantics = [], scalar_prefetch = 0 : i64, scratch_operands = 0 : i64, tpu.core_type = #tpu.core_type<tc>} {
    %c0 = arith.constant 0 : index
    %c0_0 = arith.constant 0 : index
    %0 = vector.load %arg0[%c0, %c0_0] : memref<128x432xbf16, #tpu.memory_space<vmem>>, vector<128x432xbf16>
    %c0_1 = arith.constant 0 : index
    %c0_2 = arith.constant 0 : index
    %1 = vector.load %arg1[%c0_1, %c0_2] : memref<432x12xbf16, #tpu.memory_space<vmem>>, vector<432x12xbf16>
    %cst = arith.constant dense<0.000000e+00> : vector<128x12xf32>
    %2 = tpu.matmul %0, %1, %cst {dimension_numbers = #tpu.dot_dimension_numbers<[1], [0], [0], [1], [0, 0, 1, 1], [], []>} : vector<128x432xbf16>, vector<432x12xbf16>, vector<128x12xf32> -> vector<128x12xf32>
    %c0_3 = arith.constant 0 : index
    %c0_4 = arith.constant 0 : index
    %3 = vector.load %arg2[%c0_3, %c0_4] : memref<1x12xf32, #tpu.memory_space<vmem>>, vector<1x12xf32>
    %4 = vector.broadcast %3 : vector<1x12xf32> to vector<128x12xf32>
    %5 = arith.addf %2, %4 : vector<128x12xf32>
    %c0_5 = arith.constant 0 : index
    %c0_6 = arith.constant 0 : index
    %6 = vector.load %arg3[%c0_5, %c0_6] : memref<128x12xf32, #tpu.memory_space<vmem>>, vector<128x12xf32>
    tpu.vector_store %arg3[%c0_5, %c0_6], %5 {strides = array<i32>} : memref<128x12xf32, #tpu.memory_space<vmem>>, vector<128x12xf32>,
    return
  }
}

module attributes {stable_mosaic.version = 11 : i64} {
  func.func @_matmul_bias_mask_kernel(%arg0: memref<16x128xbf16, #tpu.memory_space<vmem>>, %arg1: memref<128x32xbf16, #tpu.memory_space<vmem>>, %arg2: memref<1x32xf32, #tpu.memory_space<vmem>>, %arg3: memref<16x1xf32, #tpu.memory_space<vmem>>, %arg4: memref<16x32xf32, #tpu.memory_space<vmem>>) attributes {dimension_semantics = [], scalar_prefetch = 0 : i64, scratch_operands = 0 : i64, tpu.core_type = #tpu.core_type<tc>} {
    %c0 = arith.constant 0 : index
    %c0_0 = arith.constant 0 : index
    %0 = vector.load %arg0[%c0, %c0_0] : memref<16x128xbf16, #tpu.memory_space<vmem>>, vector<16x128xbf16>
    %c0_1 = arith.constant 0 : index
    %c0_2 = arith.constant 0 : index
    %1 = vector.load %arg1[%c0_1, %c0_2] : memref<128x32xbf16, #tpu.memory_space<vmem>>, vector<128x32xbf16>
    %cst = arith.constant dense<0.000000e+00> : vector<16x32xf32>
    %2 = tpu.matmul %0, %1, %cst {dimension_numbers = #tpu.dot_dimension_numbers<[1], [0], [0], [1], [0, 0, 1, 1], [], []>} : vector<16x128xbf16>, vector<128x32xbf16>, vector<16x32xf32> -> vector<16x32xf32>
    %c0_3 = arith.constant 0 : index
    %c0_4 = arith.constant 0 : index
    %3 = vector.load %arg2[%c0_3, %c0_4] : memref<1x32xf32, #tpu.memory_space<vmem>>, vector<1x32xf32>
    %4 = vector.broadcast %3 : vector<1x32xf32> to vector<16x32xf32>
    %5 = arith.addf %2, %4 : vector<16x32xf32>
    %c0_5 = arith.constant 0 : index
    %c0_6 = arith.constant 0 : index
    %6 = vector.load %arg3[%c0_5, %c0_6] : memref<16x1xf32, #tpu.memory_space<vmem>>, vector<16x1xf32>
    %cst_7 = arith.constant 0.000000e+00 : f32
    %7 = vector.broadcast %cst_7 : f32 to vector<16x1xf32>
    %8 = arith.cmpf one, %6, %7 : vector<16x1xf32>
    %cst_8 = arith.constant 0.000000e+00 : f32
    %9 = vector.shape_cast %8 : vector<16x1xi1> to vector<16x1xi1>
    %10 = vector.broadcast %9 : vector<16x1xi1> to vector<16x32xi1>
    %11 = vector.broadcast %cst_8 : f32 to vector<16x32xf32>
    %12 = arith.select %10, %5, %11 : vector<16x32xi1>, vector<16x32xf32>
    %c0_9 = arith.constant 0 : index
    %c0_10 = arith.constant 0 : index
    %13 = vector.load %arg4[%c0_9, %c0_10] : memref<16x32xf32, #tpu.memory_space<vmem>>, vector<16x32xf32>
    tpu.vector_store %arg4[%c0_9, %c0_10], %12 {strides = array<i32>} : memref<16x32xf32, #tpu.memory_space<vmem>>, vector<16x32xf32>,
    return
  }
}

module attributes {stable_mosaic.version = 11 : i64} {
  func.func @_manba_ax_kernel(%arg0: memref<16x32xf32, #tpu.memory_space<vmem>>, %arg1: memref<32x256xf32, #tpu.memory_space<vmem>>, %arg2: memref<16x256xf32, #tpu.memory_space<vmem>>, %arg3: memref<256x32xf32, #tpu.memory_space<vmem>>, %arg4: memref<16x32xf32, #tpu.memory_space<vmem>>) attributes {dimension_semantics = [], scalar_prefetch = 0 : i64, scratch_operands = 0 : i64, tpu.core_type = #tpu.core_type<tc>} {
    %c0 = arith.constant 0 : index
    %c0_0 = arith.constant 0 : index
    %0 = vector.load %arg0[%c0, %c0_0] : memref<16x32xf32, #tpu.memory_space<vmem>>, vector<16x32xf32>
    %c0_1 = arith.constant 0 : index
    %c0_2 = arith.constant 0 : index
    %1 = vector.load %arg1[%c0_1, %c0_2] : memref<32x256xf32, #tpu.memory_space<vmem>>, vector<32x256xf32>
    %cst = arith.constant dense<0.000000e+00> : vector<16x256xf32>
    %2 = tpu.matmul %0, %1, %cst {dimension_numbers = #tpu.dot_dimension_numbers<[1], [0], [0], [1], [0, 0, 1, 1], [], []>} : vector<16x32xf32>, vector<32x256xf32>, vector<16x256xf32> -> vector<16x256xf32>
    %c0_3 = arith.constant 0 : index
    %c0_4 = arith.constant 0 : index
    %3 = vector.load %arg2[%c0_3, %c0_4] : memref<16x256xf32, #tpu.memory_space<vmem>>, vector<16x256xf32>
    %4 = arith.mulf %2, %3 : vector<16x256xf32>
    %c0_5 = arith.constant 0 : index
    %c0_6 = arith.constant 0 : index
    %5 = vector.load %arg3[%c0_5, %c0_6] : memref<256x32xf32, #tpu.memory_space<vmem>>, vector<256x32xf32>
    %cst_7 = arith.constant dense<0.000000e+00> : vector<16x32xf32>
    %6 = tpu.matmul %4, %5, %cst_7 {dimension_numbers = #tpu.dot_dimension_numbers<[1], [0], [0], [1], [0, 0, 1, 1], [], []>} : vector<16x256xf32>, vector<256x32xf32>, vector<16x32xf32> -> vector<16x32xf32>
    %c0_8 = arith.constant 0 : index
    %c0_9 = arith.constant 0 : index
    %7 = vector.load %arg4[%c0_8, %c0_9] : memref<16x32xf32, #tpu.memory_space<vmem>>, vector<16x32xf32>
    tpu.vector_store %arg4[%c0_8, %c0_9], %6 {strides = array<i32>} : memref<16x32xf32, #tpu.memory_space<vmem>>, vector<16x32xf32>,
    return
  }
}

module attributes {stable_mosaic.version = 11 : i64} {
  func.func @_densify_decode_loss_kernel(%arg0: memref<16x32xf32, #tpu.memory_space<vmem>>, %arg1: memref<16x32xf32, #tpu.memory_space<vmem>>, %arg2: memref<16x1xf32, #tpu.memory_space<vmem>>, %arg3: memref<32x24xbf16, #tpu.memory_space<vmem>>, %arg4: memref<1x24xf32, #tpu.memory_space<vmem>>, %arg5: memref<16x768xf32, #tpu.memory_space<vmem>>, %arg6: memref<24x768xbf16, #tpu.memory_space<vmem>>, %arg7: memref<1x768xf32, #tpu.memory_space<vmem>>, %arg8: memref<768x384xbf16, #tpu.memory_space<vmem>>, %arg9: memref<1x384xf32, #tpu.memory_space<vmem>>, %arg10: memref<384x192xbf16, #tpu.memory_space<vmem>>, %arg11: memref<1x192xf32, #tpu.memory_space<vmem>>, %arg12: memref<192x64xbf16, #tpu.memory_space<vmem>>, %arg13: memref<1x64xf32, #tpu.memory_space<vmem>>, %arg14: memref<16x512xf32, #tpu.memory_space<vmem>>, %arg15: memref<1x1xf32, #tpu.memory_space<vmem>>) attributes {dimension_semantics = [], scalar_prefetch = 0 : i64, scratch_operands = 0 : i64, tpu.core_type = #tpu.core_type<tc>} {
    %c0 = arith.constant 0 : index
    %c0_0 = arith.constant 0 : index
    %0 = vector.load %arg2[%c0, %c0_0] : memref<16x1xf32, #tpu.memory_space<vmem>>, vector<16x1xf32>
    %cst = arith.constant 0.000000e+00 : f32
    %1 = vector.broadcast %cst : f32 to vector<16x1xf32>
    %2 = arith.cmpf one, %0, %1 : vector<16x1xf32>
    %c0_1 = arith.constant 0 : index
    %c0_2 = arith.constant 0 : index
    %3 = vector.load %arg0[%c0_1, %c0_2] : memref<16x32xf32, #tpu.memory_space<vmem>>, vector<16x32xf32>
    %c0_3 = arith.constant 0 : index
    %c0_4 = arith.constant 0 : index
    %4 = vector.load %arg1[%c0_3, %c0_4] : memref<16x32xf32, #tpu.memory_space<vmem>>, vector<16x32xf32>
    %5 = vector.shape_cast %2 : vector<16x1xi1> to vector<16x1xi1>
    %6 = vector.broadcast %5 : vector<16x1xi1> to vector<16x32xi1>
    %7 = arith.select %6, %3, %4 : vector<16x32xi1>, vector<16x32xf32>
    %8 = arith.truncf %7 : vector<16x32xf32> to vector<16x32xbf16>
    %c0_5 = arith.constant 0 : index
    %c0_6 = arith.constant 0 : index
    %9 = vector.load %arg3[%c0_5, %c0_6] : memref<32x24xbf16, #tpu.memory_space<vmem>>, vector<32x24xbf16>
    %cst_7 = arith.constant dense<0.000000e+00> : vector<16x24xf32>
    %10 = tpu.matmul %8, %9, %cst_7 {dimension_numbers = #tpu.dot_dimension_numbers<[1], [0], [0], [1], [0, 0, 1, 1], [], []>} : vector<16x32xbf16>, vector<32x24xbf16>, vector<16x24xf32> -> vector<16x24xf32>
    %c0_8 = arith.constant 0 : index
    %c0_9 = arith.constant 0 : index
    %11 = vector.load %arg4[%c0_8, %c0_9] : memref<1x24xf32, #tpu.memory_space<vmem>>, vector<1x24xf32>
    %12 = vector.broadcast %11 : vector<1x24xf32> to vector<16x24xf32>
    %13 = arith.addf %10, %12 : vector<16x24xf32>
    %14 = arith.truncf %13 : vector<16x24xf32> to vector<16x24xbf16>
    %c0_10 = arith.constant 0 : index
    %c0_11 = arith.constant 0 : index
    %15 = vector.load %arg6[%c0_10, %c0_11] : memref<24x768xbf16, #tpu.memory_space<vmem>>, vector<24x768xbf16>
    %cst_12 = arith.constant dense<0.000000e+00> : vector<16x768xf32>
    %16 = tpu.matmul %14, %15, %cst_12 {dimension_numbers = #tpu.dot_dimension_numbers<[1], [0], [0], [1], [0, 0, 1, 1], [], []>} : vector<16x24xbf16>, vector<24x768xbf16>, vector<16x768xf32> -> vector<16x768xf32>
    %c0_13 = arith.constant 0 : index
    %c0_14 = arith.constant 0 : index
    %17 = vector.load %arg7[%c0_13, %c0_14] : memref<1x768xf32, #tpu.memory_space<vmem>>, vector<1x768xf32>
    %18 = vector.broadcast %17 : vector<1x768xf32> to vector<16x768xf32>
    %19 = arith.addf %16, %18 : vector<16x768xf32>
    %cst_15 = arith.constant 0.000000e+00 : f32
    %20 = vector.broadcast %cst_15 : f32 to vector<16x768xf32>
    %21 = arith.maximumf %19, %20 : vector<16x768xf32>
    %c0_16 = arith.constant 0 : index
    %c0_17 = arith.constant 0 : index
    %22 = vector.load %arg5[%c0_16, %c0_17] : memref<16x768xf32, #tpu.memory_space<vmem>>, vector<16x768xf32>
    %23 = arith.addf %21, %22 : vector<16x768xf32>
    %24 = arith.truncf %23 : vector<16x768xf32> to vector<16x768xbf16>
    %c0_18 = arith.constant 0 : index
    %c0_19 = arith.constant 0 : index
    %25 = vector.load %arg8[%c0_18, %c0_19] : memref<768x384xbf16, #tpu.memory_space<vmem>>, vector<768x384xbf16>
    %cst_20 = arith.constant dense<0.000000e+00> : vector<16x384xf32>
    %26 = tpu.matmul %24, %25, %cst_20 {dimension_numbers = #tpu.dot_dimension_numbers<[1], [0], [0], [1], [0, 0, 1, 1], [], []>} : vector<16x768xbf16>, vector<768x384xbf16>, vector<16x384xf32> -> vector<16x384xf32>
    %c0_21 = arith.constant 0 : index
    %c0_22 = arith.constant 0 : index
    %27 = vector.load %arg9[%c0_21, %c0_22] : memref<1x384xf32, #tpu.memory_space<vmem>>, vector<1x384xf32>
    %28 = vector.broadcast %27 : vector<1x384xf32> to vector<16x384xf32>
    %29 = arith.addf %26, %28 : vector<16x384xf32>
    %cst_23 = arith.constant 0.000000e+00 : f32
    %30 = vector.broadcast %cst_23 : f32 to vector<16x384xf32>
    %31 = arith.maximumf %29, %30 : vector<16x384xf32>
    %32 = arith.truncf %31 : vector<16x384xf32> to vector<16x384xbf16>
    %c0_24 = arith.constant 0 : index
    %c0_25 = arith.constant 0 : index
    %33 = vector.load %arg10[%c0_24, %c0_25] : memref<384x192xbf16, #tpu.memory_space<vmem>>, vector<384x192xbf16>
    %cst_26 = arith.constant dense<0.000000e+00> : vector<16x192xf32>
    %34 = tpu.matmul %32, %33, %cst_26 {dimension_numbers = #tpu.dot_dimension_numbers<[1], [0], [0], [1], [0, 0, 1, 1], [], []>} : vector<16x384xbf16>, vector<384x192xbf16>, vector<16x192xf32> -> vector<16x192xf32>
    %c0_27 = arith.constant 0 : index
    %c0_28 = arith.constant 0 : index
    %35 = vector.load %arg11[%c0_27, %c0_28] : memref<1x192xf32, #tpu.memory_space<vmem>>, vector<1x192xf32>
    %36 = vector.broadcast %35 : vector<1x192xf32> to vector<16x192xf32>
    %37 = arith.addf %34, %36 : vector<16x192xf32>
    %cst_29 = arith.constant 0.000000e+00 : f32
    %38 = vector.broadcast %cst_29 : f32 to vector<16x192xf32>
    %39 = arith.maximumf %37, %38 : vector<16x192xf32>
    %40 = arith.truncf %39 : vector<16x192xf32> to vector<16x192xbf16>
    %c0_30 = arith.constant 0 : index
    %c0_31 = arith.constant 0 : index
    %41 = vector.load %arg12[%c0_30, %c0_31] : memref<192x64xbf16, #tpu.memory_space<vmem>>, vector<192x64xbf16>
    %cst_32 = arith.constant dense<0.000000e+00> : vector<16x64xf32>
    %42 = tpu.matmul %40, %41, %cst_32 {dimension_numbers = #tpu.dot_dimension_numbers<[1], [0], [0], [1], [0, 0, 1, 1], [], []>} : vector<16x192xbf16>, vector<192x64xbf16>, vector<16x64xf32> -> vector<16x64xf32>
    %c0_33 = arith.constant 0 : index
    %c0_34 = arith.constant 0 : index
    %43 = vector.load %arg13[%c0_33, %c0_34] : memref<1x64xf32, #tpu.memory_space<vmem>>, vector<1x64xf32>
    %44 = vector.broadcast %43 : vector<1x64xf32> to vector<16x64xf32>
    %45 = arith.addf %42, %44 : vector<16x64xf32>
    %46 = tpu.concatenate %45, %45, %45, %45, %45, %45, %45, %45 in 1 : vector<16x64xf32>, vector<16x64xf32>, vector<16x64xf32>, vector<16x64xf32>, vector<16x64xf32>, vector<16x64xf32>, vector<16x64xf32>, vector<16x64xf32> -> vector<16x512xf32>
    %c0_35 = arith.constant 0 : index
    %c0_36 = arith.constant 0 : index
    %47 = vector.load %arg14[%c0_35, %c0_36] : memref<16x512xf32, #tpu.memory_space<vmem>>, vector<16x512xf32>
    %cst_37 = arith.constant dense<0.000000e+00> : vector<16xf32>
    %48 = vector.multi_reduction <add>, %47, %cst_37 [1] : vector<16x512xf32> to vector<16xf32>
    %49 = vector.shape_cast %48 : vector<16xf32> to vector<16x1xf32>
    %cst_38 = arith.constant 0.001953125 : f32
    %50 = vector.broadcast %cst_38 : f32 to vector<16x1xf32>
    %51 = arith.mulf %49, %50 : vector<16x1xf32>
    %52 = vector.broadcast %51 : vector<16x1xf32> to vector<16x512xf32>
    %53 = arith.subf %47, %52 : vector<16x512xf32>
    %54 = arith.mulf %53, %53 : vector<16x512xf32>
    %cst_39 = arith.constant dense<0.000000e+00> : vector<16xf32>
    %55 = vector.multi_reduction <add>, %54, %cst_39 [1] : vector<16x512xf32> to vector<16xf32>
    %56 = vector.shape_cast %55 : vector<16xf32> to vector<16x1xf32>
    %cst_40 = arith.constant 0.00195694715 : f32
    %57 = vector.broadcast %cst_40 : f32 to vector<16x1xf32>
    %58 = arith.mulf %56, %57 : vector<16x1xf32>
    %cst_41 = arith.constant 9.99999997E-7 : f32
    %59 = vector.broadcast %cst_41 : f32 to vector<16x1xf32>
    %60 = arith.addf %58, %59 : vector<16x1xf32>
    %61 = math.rsqrt %60 : vector<16x1xf32>
    %62 = vector.broadcast %61 : vector<16x1xf32> to vector<16x512xf32>
    %63 = arith.mulf %53, %62 : vector<16x512xf32>
    %64 = arith.subf %46, %63 : vector<16x512xf32>
    %65 = arith.mulf %64, %64 : vector<16x512xf32>
    %cst_42 = arith.constant dense<0.000000e+00> : vector<16xf32>
    %66 = vector.multi_reduction <add>, %65, %cst_42 [1] : vector<16x512xf32> to vector<16xf32>
    %67 = vector.shape_cast %66 : vector<16xf32> to vector<16x1xf32>
    %cst_43 = arith.constant 0.001953125 : f32
    %68 = vector.broadcast %cst_43 : f32 to vector<16x1xf32>
    %69 = arith.mulf %67, %68 : vector<16x1xf32>
    %cst_44 = arith.constant 1.000000e+00 : f32
    %70 = vector.broadcast %cst_44 : f32 to vector<16x1xf32>
    %71 = arith.subf %70, %0 : vector<16x1xf32>
    %72 = arith.mulf %69, %71 : vector<16x1xf32>
    %73 = vector.shape_cast %72 : vector<16x1xf32> to vector<1x16x1xf32>
    %cst_45 = arith.constant dense<0.000000e+00> : vector<1xf32>
    %74 = vector.multi_reduction <add>, %73, %cst_45 [1, 2] : vector<1x16x1xf32> to vector<1xf32>
    %75 = vector.shape_cast %74 : vector<1xf32> to vector<1x1x1xf32>
    %76 = vector.extract %75[0, 0, 0] : f32 from vector<1x1x1xf32>
    %77 = vector.shape_cast %71 : vector<16x1xf32> to vector<1x16x1xf32>
    %cst_46 = arith.constant dense<0.000000e+00> : vector<1xf32>
    %78 = vector.multi_reduction <add>, %77, %cst_46 [1, 2] : vector<1x16x1xf32> to vector<1xf32>
    %79 = vector.shape_cast %78 : vector<1xf32> to vector<1x1x1xf32>
    %80 = vector.extract %79[0, 0, 0] : f32 from vector<1x1x1xf32>
    %cst_47 = arith.constant 9.99999993E-9 : f32
    %81 = arith.addf %80, %cst_47 : f32
    %82 = arith.divf %76, %81 : f32
    %83 = vector.broadcast %82 : f32 to vector<1x1xf32>
    %c0_48 = arith.constant 0 : index
    %c0_49 = arith.constant 0 : index
    %84 = vector.load %arg15[%c0_48, %c0_49] : memref<1x1xf32, #tpu.memory_space<vmem>>, vector<1x1xf32>
    tpu.vector_store %arg15[%c0_48, %c0_49], %83 {strides = array<i32>} : memref<1x1xf32, #tpu.memory_space<vmem>>, vector<1x1xf32>,
    return
  }
}

</mosaic_0001>

<llo_original>
// kernel: mambamim_forward.5
$region0: #{mambamim_forward.5}
  #allocation0 [shape = 'u32[]', space=smem, size = 0x4, offset = 0x4, fixed_abs, tag = 'smem constant byte address 0x4 - core index']
  #allocation1 [shape = 'u32[72,128]{1,0:T(1,128)}', space=vmem, size = 0x9000, scoped, tag = 'internal scratch']
  %s0 = inlined_call_operand.vmem [shape: bf16[128,64], index: 0, kind: input, shape index: {}]
  %s1 = inlined_call_operand.vmem [shape: bf16[64,16], index: 1, kind: input, shape index: {}]
  %s2 = inlined_call_operand.vmem [shape: f32[1,16], index: 2, kind: input, shape index: {}]
  %s3 = inlined_call_operand.vmem [shape: f32[128,1], index: 3, kind: input, shape index: {}]
  %s4 = inlined_call_operand.vmem [shape: f32[128,16], index: 4, kind: output, shape index: {}]
  %s5 = sld [smem:[#allocation0]]
  $region26: #{mambamim_forward.5} parent=0
    _
  %s7 = ssub.s32 1, %s5
  %s8 = scalar_select 0, %s7, %s5
  // Predicated region
  $region2: #{mambamim_forward.5} parent=0 // pred_check
    _
  $region3: #{mambamim_forward.5} parent=0 // pred_check_branch
    %10 = sbr.rel (0) target = $region5
  $region4: #{mambamim_forward.5} parent=0 // pred_region
    _
  $region5: #{mambamim_forward.5} parent=0 // pred_fallthru
    _
  // Predicated region
  $region6: #{mambamim_forward.5} parent=0 // pred_check
    _
  $region7: #{mambamim_forward.5} parent=0 // pred_check_branch
    %12 = sbr.rel (0) target = $region9
  $region8: #{mambamim_forward.5} parent=0 // pred_region
    _
  $region9: #{mambamim_forward.5} parent=0 // pred_fallthru
    _
  // Predicated region
  $region10: #{mambamim_forward.5} parent=0 // pred_check
    _
  $region11: #{mambamim_forward.5} parent=0 // pred_check_branch
    %14 = sbr.rel (0) target = $region13
  $region12: #{mambamim_forward.5} parent=0 // pred_region
    _
  $region13: #{mambamim_forward.5} parent=0 // pred_fallthru
    _
  // Predicated region
  $region14: #{mambamim_forward.5} parent=0 // pred_check
    _
  $region15: #{mambamim_forward.5} parent=0 // pred_check_branch
    %16 = sbr.rel (0) target = $region17
  $region16: #{mambamim_forward.5} parent=0 // pred_region
    _
  $region17: #{mambamim_forward.5} parent=0 // pred_fallthru
    _
  %v18 = vld [vmem:[%s0] sm:$0xf]
  %v19 = vld [vmem:[%s0 + $0x4] sm:$0xf]
  %v20 = vld [vmem:[%s0 + $0x8] sm:$0xf]
  %v21 = vld [vmem:[%s0 + $0xc] sm:$0xf]
  %v22 = vld [vmem:[%s0 + $0x10] sm:$0xf]
  %v23 = vld [vmem:[%s0 + $0x14] sm:$0xf]
  %v24 = vld [vmem:[%s0 + $0x18] sm:$0xf]
  %v25 = vld [vmem:[%s0 + $0x1c] sm:$0xf]
  %v26 = vld [vmem:[%s0 + $0x20] sm:$0xf]
  %v27 = vld [vmem:[%s0 + $0x24] sm:$0xf]
  %v28 = vld [vmem:[%s0 + $0x28] sm:$0xf]
  %v29 = vld [vmem:[%s0 + $0x2c] sm:$0xf]
  %v30 = vld [vmem:[%s0 + $0x30] sm:$0xf]
  %v31 = vld [vmem:[%s0 + $0x34] sm:$0xf]
  %v32 = vld [vmem:[%s0 + $0x38] sm:$0xf]
  %v33 = vld [vmem:[%s0 + $0x3c] sm:$0xf]
  %v34 = vld [vmem:[%s1] sm:$0xf]
  %v35 = vld [vmem:[%s1 + $0x4] sm:$0xf]
  %v36 = vld [vmem:[%s1 + $0x8] sm:$0xf]
  %v37 = vld [vmem:[%s1 + $0xc] sm:$0xf]
  %v38 = vld [vmem:[%s1 + $0x10] sm:$0xf]
  %v39 = vld [vmem:[%s1 + $0x14] sm:$0xf]
  %v40 = vld [vmem:[%s1 + $0x18] sm:$0xf]
  %v41 = vld [vmem:[%s1 + $0x1c] sm:$0xf]
  %v42 = vld [vmem:[%s2] sm:$0x1]
  %v44 = vperm.slane %v42, 0
  %v62 = vunpack.c.l.b16 %v18
  %v63 = vunpack.c.l.b16 %v19
  %v64 = vunpack.c.l.b16 %v20
  %v65 = vunpack.c.l.b16 %v21
  %v66 = vunpack.c.l.b16 %v22
  %v67 = vunpack.c.l.b16 %v23
  %v68 = vunpack.c.l.b16 %v24
  %v69 = vunpack.c.l.b16 %v25
  %v70 = vunpack.c.l.b16 %v26
  %v71 = vunpack.c.l.b16 %v27
  %v72 = vunpack.c.l.b16 %v28
  %v73 = vunpack.c.l.b16 %v29
  %v74 = vunpack.c.l.b16 %v30
  %v75 = vunpack.c.l.b16 %v31
  %v76 = vunpack.c.l.b16 %v32
  %v77 = vunpack.c.l.b16 %v33
  %v78 = vpack.c.b16 %v63, %v62
  %v79 = vpack.c.b16 %v65, %v64
  %v80 = vpack.c.b16 %v67, %v66
  %v81 = vpack.c.b16 %v69, %v68
  %v82 = vpack.c.b16 %v71, %v70
  %v83 = vpack.c.b16 %v73, %v72
  %v84 = vpack.c.b16 %v75, %v74
  %v85 = vpack.c.b16 %v77, %v76
  %v94 = vunpack.c.l.b16 %v34
  %v95 = vunpack.c.l.b16 %v35
  %v96 = vunpack.c.l.b16 %v36
  %v97 = vunpack.c.l.b16 %v37
  %v98 = vunpack.c.l.b16 %v38
  %v99 = vunpack.c.l.b16 %v39
  %v100 = vunpack.c.l.b16 %v40
  %v101 = vunpack.c.l.b16 %v41
  %v102 = vpack.c.b16 %v95, %v94
  %v103 = vpack.c.b16 %v97, %v96
  %v104 = vpack.c.b16 %v99, %v98
  %v105 = vpack.c.b16 %v101, %v100
  %vm110 = vcmask 523264
  %v112 = vsel %vm110, %v78, 0
  %v115 = vsel %vm110, %v79, 0
  %v118 = vsel %vm110, %v80, 0
  %v121 = vsel %vm110, %v81, 0
  %v124 = vsel %vm110, %v82, 0
  %v127 = vsel %vm110, %v83, 0
  %v130 = vsel %vm110, %v84, 0
  %v133 = vsel %vm110, %v85, 0
  %135 = vmatpush.bf16.msra.mxu0 0
  %136 = vmatpush.bf16.msra.mxu0 0
  %137 = vmatpush.bf16.msra.mxu0 0
  %138 = vmatpush.bf16.msra.mxu0 0
  %139 = vmatpush.bf16.msra.mxu0 %v105
  %140 = vmatpush.bf16.msra.mxu0 %v104
  %141 = vmatpush.bf16.msra.mxu0 %v103
  %142 = vmatpush.bf16.msra.mxu0 %v102
  %143 = vmatmul.bf16.gmra.mxu0 %v112
  %v144 = vpop.f32.mrf.mxu0
  %v145 = vadd.f32 %v44, %v144
  %v146 = vpop.f32.mrf.mxu0
  %v147 = vadd.f32 %v44, %v146
  %148 = vmatmul.bf16.gmra.mxu0 %v115
  %v149 = vpop.f32.mrf.mxu0
  %v150 = vadd.f32 %v44, %v149
  %v151 = vpop.f32.mrf.mxu0
  %v152 = vadd.f32 %v44, %v151
  %153 = vmatmul.bf16.gmra.mxu0 %v118
  %v154 = vpop.f32.mrf.mxu0
  %v155 = vadd.f32 %v44, %v154
  %v156 = vpop.f32.mrf.mxu0
  %v157 = vadd.f32 %v44, %v156
  %158 = vmatmul.bf16.gmra.mxu0 %v121
  %v159 = vpop.f32.mrf.mxu0
  %v160 = vadd.f32 %v44, %v159
  %v161 = vpop.f32.mrf.mxu0
  %v162 = vadd.f32 %v44, %v161
  %163 = vmatmul.bf16.gmra.mxu0 %v124
  %v164 = vpop.f32.mrf.mxu0
  %v165 = vadd.f32 %v44, %v164
  %v166 = vpop.f32.mrf.mxu0
  %v167 = vadd.f32 %v44, %v166
  %168 = vmatmul.bf16.gmra.mxu0 %v127
  %v169 = vpop.f32.mrf.mxu0
  %v170 = vadd.f32 %v44, %v169
  %v171 = vpop.f32.mrf.mxu0
  %v172 = vadd.f32 %v44, %v171
  %173 = vmatmul.bf16.gmra.mxu0 %v130
  %v174 = vpop.f32.mrf.mxu0
  %v175 = vadd.f32 %v44, %v174
  %v176 = vpop.f32.mrf.mxu0
  %v177 = vadd.f32 %v44, %v176
  %178 = vmatmul.bf16.gmra.mxu0 %v133
  %v179 = vpop.f32.mrf.mxu0
  %v180 = vadd.f32 %v44, %v179
  %v181 = vpop.f32.mrf.mxu0
  %v182 = vadd.f32 %v44, %v181
  %183 = vdwg.mxu0
  %v184 = vld [vmem:[%s3] sm:$0xff]
  %v185 = vld [vmem:[%s3 + $0x8] sm:$0xff]
  %v186 = vld [vmem:[%s3 + $0x10] sm:$0xff]
  %v187 = vld [vmem:[%s3 + $0x18] sm:$0xff]
  %v188 = vld [vmem:[%s3 + $0x20] sm:$0xff]
  %v189 = vld [vmem:[%s3 + $0x28] sm:$0xff]
  %v190 = vld [vmem:[%s3 + $0x30] sm:$0xff]
  %v191 = vld [vmem:[%s3 + $0x38] sm:$0xff]
  %v192 = vld [vmem:[%s3 + $0x40] sm:$0xff]
  %v193 = vld [vmem:[%s3 + $0x48] sm:$0xff]
  %v194 = vld [vmem:[%s3 + $0x50] sm:$0xff]
  %v195 = vld [vmem:[%s3 + $0x58] sm:$0xff]
  %v196 = vld [vmem:[%s3 + $0x60] sm:$0xff]
  %v197 = vld [vmem:[%s3 + $0x68] sm:$0xff]
  %v198 = vld [vmem:[%s3 + $0x70] sm:$0xff]
  %v199 = vld [vmem:[%s3 + $0x78] sm:$0xff]
  %vm200 = vcmp.ne.f32.partialorder %v184, 0.0
  %vm201 = vcmp.ne.f32.partialorder %v185, 0.0
  %vm202 = vcmp.ne.f32.partialorder %v186, 0.0
  %vm203 = vcmp.ne.f32.partialorder %v187, 0.0
  %vm204 = vcmp.ne.f32.partialorder %v188, 0.0
  %vm205 = vcmp.ne.f32.partialorder %v189, 0.0
  %vm206 = vcmp.ne.f32.partialorder %v190, 0.0
  %vm207 = vcmp.ne.f32.partialorder %v191, 0.0
  %vm208 = vcmp.ne.f32.partialorder %v192, 0.0
  %vm209 = vcmp.ne.f32.partialorder %v193, 0.0
  %vm210 = vcmp.ne.f32.partialorder %v194, 0.0
  %vm211 = vcmp.ne.f32.partialorder %v195, 0.0
  %vm212 = vcmp.ne.f32.partialorder %v196, 0.0
  %vm213 = vcmp.ne.f32.partialorder %v197, 0.0
  %vm214 = vcmp.ne.f32.partialorder %v198, 0.0
  %vm215 = vcmp.ne.f32.partialorder %v199, 0.0
  %v216 = vsel %vm200, 1, 0
  %v217 = vsel %vm201, 1, 0
  %v218 = vsel %vm202, 1, 0
  %v219 = vsel %vm203, 1, 0
  %v220 = vsel %vm204, 1, 0
  %v221 = vsel %vm205, 1, 0
  %v222 = vsel %vm206, 1, 0
  %v223 = vsel %vm207, 1, 0
  %v224 = vsel %vm208, 1, 0
  %v225 = vsel %vm209, 1, 0
  %v226 = vsel %vm210, 1, 0
  %v227 = vsel %vm211, 1, 0
  %v228 = vsel %vm212, 1, 0
  %v229 = vsel %vm213, 1, 0
  %v230 = vsel %vm214, 1, 0
  %v231 = vsel %vm215, 1, 0
  %232 = vset.pattern.permute.xlu0 0
  %233 = vperm.xlu0 %232, %v216
  %v234 = vpop.permute.xlu0 %233
  %235 = vset.pattern.permute.xlu0 0
  %236 = vperm.xlu0 %235, %v217
  %v237 = vpop.permute.xlu0 %236
  %238 = vset.pattern.permute.xlu0 0
  %239 = vperm.xlu0 %238, %v218
  %v240 = vpop.permute.xlu0 %239
  %241 = vset.pattern.permute.xlu0 0
  %242 = vperm.xlu0 %241, %v219
  %v243 = vpop.permute.xlu0 %242
  %244 = vset.pattern.permute.xlu0 0
  %245 = vperm.xlu0 %244, %v220
  %v246 = vpop.permute.xlu0 %245
  %247 = vset.pattern.permute.xlu0 0
  %248 = vperm.xlu0 %247, %v221
  %v249 = vpop.permute.xlu0 %248
  %250 = vset.pattern.permute.xlu0 0
  %251 = vperm.xlu0 %250, %v222
  %v252 = vpop.permute.xlu0 %251
  %253 = vset.pattern.permute.xlu0 0
  %254 = vperm.xlu0 %253, %v223
  %v255 = vpop.permute.xlu0 %254
  %256 = vset.pattern.permute.xlu0 0
  %257 = vperm.xlu0 %256, %v224
  %v258 = vpop.permute.xlu0 %257
  %259 = vset.pattern.permute.xlu0 0
  %260 = vperm.xlu0 %259, %v225
  %v261 = vpop.permute.xlu0 %260
  %262 = vset.pattern.permute.xlu0 0
  %263 = vperm.xlu0 %262, %v226
  %v264 = vpop.permute.xlu0 %263
  %265 = vset.pattern.permute.xlu0 0
  %266 = vperm.xlu0 %265, %v227
  %v267 = vpop.permute.xlu0 %266
  %268 = vset.pattern.permute.xlu0 0
  %269 = vperm.xlu0 %268, %v228
  %v270 = vpop.permute.xlu0 %269
  %271 = vset.pattern.permute.xlu0 0
  %272 = vperm.xlu0 %271, %v229
  %v273 = vpop.permute.xlu0 %272
  %274 = vset.pattern.permute.xlu0 0
  %275 = vperm.xlu0 %274, %v230
  %v276 = vpop.permute.xlu0 %275
  %277 = vset.pattern.permute.xlu0 0
  %278 = vperm.xlu0 %277, %v231
  %v279 = vpop.permute.xlu0 %278
  %vm280 = vcmp.eq.s32.totalorder %v234, 1
  %vm281 = vcmp.eq.s32.totalorder %v237, 1
  %vm282 = vcmp.eq.s32.totalorder %v240, 1
  %vm283 = vcmp.eq.s32.totalorder %v243, 1
  %vm284 = vcmp.eq.s32.totalorder %v246, 1
  %vm285 = vcmp.eq.s32.totalorder %v249, 1
  %vm286 = vcmp.eq.s32.totalorder %v252, 1
  %vm287 = vcmp.eq.s32.totalorder %v255, 1
  %vm288 = vcmp.eq.s32.totalorder %v258, 1
  %vm289 = vcmp.eq.s32.totalorder %v261, 1
  %vm290 = vcmp.eq.s32.totalorder %v264, 1
  %vm291 = vcmp.eq.s32.totalorder %v267, 1
  %vm292 = vcmp.eq.s32.totalorder %v270, 1
  %vm293 = vcmp.eq.s32.totalorder %v273, 1
  %vm294 = vcmp.eq.s32.totalorder %v276, 1
  %vm295 = vcmp.eq.s32.totalorder %v279, 1
  %v296 = vsel %vm280, %v145, 0.0
  %v297 = vsel %vm281, %v147, 0.0
  %v298 = vsel %vm282, %v150, 0.0
  %v299 = vsel %vm283, %v152, 0.0
  %v300 = vsel %vm284, %v155, 0.0
  %v301 = vsel %vm285, %v157, 0.0
  %v302 = vsel %vm286, %v160, 0.0
  %v303 = vsel %vm287, %v162, 0.0
  %v304 = vsel %vm288, %v165, 0.0
  %v305 = vsel %vm289, %v167, 0.0
  %v306 = vsel %vm290, %v170, 0.0
  %v307 = vsel %vm291, %v172, 0.0
  %v308 = vsel %vm292, %v175, 0.0
  %v309 = vsel %vm293, %v177, 0.0
  %v310 = vsel %vm294, %v180, 0.0
  %v311 = vsel %vm295, %v182, 0.0
  %vm312 = vcmask 130048
  %313 = vst.msk [vmem:[%s4] sm:$0xff] %vm312, %v296
  %314 = vst.msk [vmem:[%s4 + $0x8] sm:$0xff] %vm312, %v297
  %315 = vst.msk [vmem:[%s4 + $0x10] sm:$0xff] %vm312, %v298
  %316 = vst.msk [vmem:[%s4 + $0x18] sm:$0xff] %vm312, %v299
  %317 = vst.msk [vmem:[%s4 + $0x20] sm:$0xff] %vm312, %v300
  %318 = vst.msk [vmem:[%s4 + $0x28] sm:$0xff] %vm312, %v301
  %319 = vst.msk [vmem:[%s4 + $0x30] sm:$0xff] %vm312, %v302
  %320 = vst.msk [vmem:[%s4 + $0x38] sm:$0xff] %vm312, %v303
  %321 = vst.msk [vmem:[%s4 + $0x40] sm:$0xff] %vm312, %v304
  %322 = vst.msk [vmem:[%s4 + $0x48] sm:$0xff] %vm312, %v305
  %323 = vst.msk [vmem:[%s4 + $0x50] sm:$0xff] %vm312, %v306
  %324 = vst.msk [vmem:[%s4 + $0x58] sm:$0xff] %vm312, %v307
  %325 = vst.msk [vmem:[%s4 + $0x60] sm:$0xff] %vm312, %v308
  %326 = vst.msk [vmem:[%s4 + $0x68] sm:$0xff] %vm312, %v309
  %327 = vst.msk [vmem:[%s4 + $0x70] sm:$0xff] %vm312, %v310
  %328 = vst.msk [vmem:[%s4 + $0x78] sm:$0xff] %vm312, %v311
  // Predicated region
  $region18: #{mambamim_forward.5} parent=0 // pred_check
    _
  $region19: #{mambamim_forward.5} parent=0 // pred_check_branch
    %330 = sbr.rel (0) target = $region21
  $region20: #{mambamim_forward.5} parent=0 // pred_region
    _
  $region21: #{mambamim_forward.5} parent=0 // pred_fallthru
    _
  // Predicated region
  $region22: #{mambamim_forward.5} parent=0 // pred_check
    _
  $region23: #{mambamim_forward.5} parent=0 // pred_check_branch
    %332 = sbr.rel (0) target = $region25
  $region24: #{mambamim_forward.5} parent=0 // pred_region
    _
  $region25: #{mambamim_forward.5} parent=0 // pred_fallthru
    _

// kernel: mambamim_forward.8
$region0: #{mambamim_forward.8}
  #allocation0 [shape = 'u32[]', space=smem, size = 0x4, offset = 0x4, fixed_abs, tag = 'smem constant byte address 0x4 - core index']
  #allocation1 [shape = 'u32[72,128]{1,0:T(1,128)}', space=vmem, size = 0x9000, scoped, tag = 'internal scratch']
  %s0 = inlined_call_operand.vmem [shape: bf16[128,432], index: 0, kind: input, shape index: {}]
  %s1 = inlined_call_operand.vmem [shape: bf16[432,12], index: 1, kind: input, shape index: {}]
  %s2 = inlined_call_operand.vmem [shape: f32[1,12], index: 2, kind: input, shape index: {}]
  %s3 = inlined_call_operand.vmem [shape: f32[128,12], index: 3, kind: output, shape index: {}]
  %s4 = sld [smem:[#allocation0]]
  $region22: #{mambamim_forward.8} parent=0
    _
  %s6 = ssub.s32 1, %s4
  %s7 = scalar_select 0, %s6, %s4
  // Predicated region
  $region2: #{mambamim_forward.8} parent=0 // pred_check
    _
  $region3: #{mambamim_forward.8} parent=0 // pred_check_branch
    %9 = sbr.rel (0) target = $region5
  $region4: #{mambamim_forward.8} parent=0 // pred_region
    _
  $region5: #{mambamim_forward.8} parent=0 // pred_fallthru
    _
  // Predicated region
  $region6: #{mambamim_forward.8} parent=0 // pred_check
    _
  $region7: #{mambamim_forward.8} parent=0 // pred_check_branch
    %11 = sbr.rel (0) target = $region9
  $region8: #{mambamim_forward.8} parent=0 // pred_region
    _
  $region9: #{mambamim_forward.8} parent=0 // pred_fallthru
    _
  // Predicated region
  $region10: #{mambamim_forward.8} parent=0 // pred_check
    _
  $region11: #{mambamim_forward.8} parent=0 // pred_check_branch
    %13 = sbr.rel (0) target = $region13
  $region12: #{mambamim_forward.8} parent=0 // pred_region
    _
  $region13: #{mambamim_forward.8} parent=0 // pred_fallthru
    _
  %v15 = vld [vmem:[%s0] sm:$0xff]
  %v16 = vld [vmem:[%s0 + $0x8] sm:$0xff]
  %v17 = vld [vmem:[%s0 + $0x10] sm:$0xff]
  %v18 = vld [vmem:[%s0 + $0x18] sm:$0xff]
  %v19 = vld [vmem:[%s0 + $0x20] sm:$0xff]
  %v20 = vld [vmem:[%s0 + $0x28] sm:$0xff]
  %v21 = vld [vmem:[%s0 + $0x30] sm:$0xff]
  %v22 = vld [vmem:[%s0 + $0x38] sm:$0xff]
  %v23 = vld [vmem:[%s0 + $0x40] sm:$0xff]
  %v24 = vld [vmem:[%s0 + $0x48] sm:$0xff]
  %v25 = vld [vmem:[%s0 + $0x50] sm:$0xff]
  %v26 = vld [vmem:[%s0 + $0x58] sm:$0xff]
  %v27 = vld [vmem:[%s0 + $0x60] sm:$0xff]
  %v28 = vld [vmem:[%s0 + $0x68] sm:$0xff]
  %v29 = vld [vmem:[%s0 + $0x70] sm:$0xff]
  %v30 = vld [vmem:[%s0 + $0x78] sm:$0xff]
  %v31 = vld [vmem:[%s0 + $0x80] sm:$0xff]
  %v32 = vld [vmem:[%s0 + $0x88] sm:$0xff]
  %v33 = vld [vmem:[%s0 + $0x90] sm:$0xff]
  %v34 = vld [vmem:[%s0 + $0x98] sm:$0xff]
  %v35 = vld [vmem:[%s0 + $0xa0] sm:$0xff]
  %v36 = vld [vmem:[%s0 + $0xa8] sm:$0xff]
  %v37 = vld [vmem:[%s0 + $0xb0] sm:$0xff]
  %v38 = vld [vmem:[%s0 + $0xb8] sm:$0xff]
  %v39 = vld [vmem:[%s0 + $0xc0] sm:$0xff]
  %v40 = vld [vmem:[%s0 + $0xc8] sm:$0xff]
  %v41 = vld [vmem:[%s0 + $0xd0] sm:$0xff]
  %v42 = vld [vmem:[%s0 + $0xd8] sm:$0xff]
  %v43 = vld [vmem:[%s0 + $0xe0] sm:$0xff]
  %v44 = vld [vmem:[%s0 + $0xe8] sm:$0xff]
  %v45 = vld [vmem:[%s0 + $0xf0] sm:$0xff]
  %v46 = vld [vmem:[%s0 + $0xf8] sm:$0xff]
  %v47 = vld [vmem:[%s1] sm:$0xf]
  %v48 = vld [vmem:[%s1 + $0x4] sm:$0xf]
  %v49 = vld [vmem:[%s1 + $0x8] sm:$0xf]
  %v50 = vld [vmem:[%s1 + $0xc] sm:$0xf]
  %v51 = vld [vmem:[%s1 + $0x10] sm:$0xf]
  %v52 = vld [vmem:[%s1 + $0x14] sm:$0xf]
  %v53 = vld [vmem:[%s1 + $0x18] sm:$0xf]
  %v54 = vld [vmem:[%s1 + $0x1c] sm:$0xf]
  %v55 = vld [vmem:[%s1 + $0x20] sm:$0xf]
  %v56 = vld [vmem:[%s1 + $0x24] sm:$0xf]
  %v57 = vld [vmem:[%s1 + $0x28] sm:$0xf]
  %v58 = vld [vmem:[%s1 + $0x2c] sm:$0xf]
  %v59 = vld [vmem:[%s1 + $0x30] sm:$0xf]
  %v60 = vld [vmem:[%s1 + $0x34] sm:$0xf]
  %v61 = vld [vmem:[%s1 + $0x38] sm:$0xf]
  %v62 = vld [vmem:[%s1 + $0x3c] sm:$0xf]
  %v63 = vld [vmem:[%s1 + $0x40] sm:$0xf]
  %v64 = vld [vmem:[%s1 + $0x44] sm:$0xf]
  %v65 = vld [vmem:[%s1 + $0x48] sm:$0xf]
  %v66 = vld [vmem:[%s1 + $0x4c] sm:$0xf]
  %v67 = vld [vmem:[%s1 + $0x50] sm:$0xf]
  %v68 = vld [vmem:[%s1 + $0x54] sm:$0xf]
  %v69 = vld [vmem:[%s1 + $0x58] sm:$0xf]
  %v70 = vld [vmem:[%s1 + $0x5c] sm:$0xf]
  %v71 = vld [vmem:[%s1 + $0x60] sm:$0xf]
  %v72 = vld [vmem:[%s1 + $0x64] sm:$0xf]
  %v73 = vld [vmem:[%s1 + $0x68] sm:$0xf]
  %v74 = vld [vmem:[%s1 + $0x6c] sm:$0xf]
  %v75 = vld [vmem:[%s1 + $0x70] sm:$0xf]
  %v76 = vld [vmem:[%s1 + $0x74] sm:$0xf]
  %v77 = vld [vmem:[%s1 + $0x78] sm:$0xf]
  %v78 = vld [vmem:[%s1 + $0x7c] sm:$0xf]
  %v79 = vld [vmem:[%s1 + $0x80] sm:$0xf]
  %v80 = vld [vmem:[%s1 + $0x84] sm:$0xf]
  %v81 = vld [vmem:[%s1 + $0x88] sm:$0xf]
  %v82 = vld [vmem:[%s1 + $0x8c] sm:$0xf]
  %v83 = vld [vmem:[%s1 + $0x90] sm:$0xf]
  %v84 = vld [vmem:[%s1 + $0x94] sm:$0xf]
  %v85 = vld [vmem:[%s1 + $0x98] sm:$0xf]
  %v86 = vld [vmem:[%s1 + $0x9c] sm:$0xf]
  %v87 = vld [vmem:[%s1 + $0xa0] sm:$0xf]
  %v88 = vld [vmem:[%s1 + $0xa4] sm:$0xf]
  %v89 = vld [vmem:[%s1 + $0xa8] sm:$0xf]
  %v90 = vld [vmem:[%s1 + $0xac] sm:$0xf]
  %v91 = vld [vmem:[%s1 + $0xb0] sm:$0xf]
  %v92 = vld [vmem:[%s1 + $0xb4] sm:$0xf]
  %v93 = vld [vmem:[%s1 + $0xb8] sm:$0xf]
  %v94 = vld [vmem:[%s1 + $0xbc] sm:$0xf]
  %v95 = vld [vmem:[%s1 + $0xc0] sm:$0xf]
  %v96 = vld [vmem:[%s1 + $0xc4] sm:$0xf]
  %v97 = vld [vmem:[%s1 + $0xc8] sm:$0xf]
  %v98 = vld [vmem:[%s1 + $0xcc] sm:$0xf]
  %v99 = vld [vmem:[%s1 + $0xd0] sm:$0xf]
  %v100 = vld [vmem:[%s1 + $0xd4] sm:$0xf]
  %v101 = vld [vmem:[%s2] sm:$0x1]
  %v103 = vperm.slane %v101, 0
  %v137 = vunpack.c.l.b16 %v15
  %v138 = vunpack.c.h.b16 %v15
  %v139 = vunpack.c.l.b16 %v16
  %v140 = vunpack.c.h.b16 %v16
  %v141 = vunpack.c.l.b16 %v17
  %v142 = vunpack.c.h.b16 %v17
  %v143 = vunpack.c.l.b16 %v18
  %v144 = vunpack.c.h.b16 %v18
  %v145 = vunpack.c.l.b16 %v19
  %v146 = vunpack.c.h.b16 %v19
  %v147 = vunpack.c.l.b16 %v20
  %v148 = vunpack.c.h.b16 %v20
  %v149 = vunpack.c.l.b16 %v21
  %v150 = vunpack.c.h.b16 %v21
  %v151 = vunpack.c.l.b16 %v22
  %v152 = vunpack.c.h.b16 %v22
  %v153 = vunpack.c.l.b16 %v23
  %v154 = vunpack.c.h.b16 %v23
  %v155 = vunpack.c.l.b16 %v24
  %v156 = vunpack.c.h.b16 %v24
  %v157 = vunpack.c.l.b16 %v25
  %v158 = vunpack.c.h.b16 %v25
  %v159 = vunpack.c.l.b16 %v26
  %v160 = vunpack.c.h.b16 %v26
  %v161 = vunpack.c.l.b16 %v27
  %v162 = vunpack.c.h.b16 %v27
  %v163 = vunpack.c.l.b16 %v28
  %v164 = vunpack.c.h.b16 %v28
  %v165 = vunpack.c.l.b16 %v29
  %v166 = vunpack.c.h.b16 %v29
  %v167 = vunpack.c.l.b16 %v30
  %v168 = vunpack.c.h.b16 %v30
  %v169 = vunpack.c.l.b16 %v31
  %v170 = vunpack.c.h.b16 %v31
  %v171 = vunpack.c.l.b16 %v32
  %v172 = vunpack.c.h.b16 %v32
  %v173 = vunpack.c.l.b16 %v33
  %v174 = vunpack.c.h.b16 %v33
  %v175 = vunpack.c.l.b16 %v34
  %v176 = vunpack.c.h.b16 %v34
  %v177 = vunpack.c.l.b16 %v35
  %v178 = vunpack.c.h.b16 %v35
  %v179 = vunpack.c.l.b16 %v36
  %v180 = vunpack.c.h.b16 %v36
  %v181 = vunpack.c.l.b16 %v37
  %v182 = vunpack.c.h.b16 %v37
  %v183 = vunpack.c.l.b16 %v38
  %v184 = vunpack.c.h.b16 %v38
  %v185 = vunpack.c.l.b16 %v39
  %v186 = vunpack.c.h.b16 %v39
  %v187 = vunpack.c.l.b16 %v40
  %v188 = vunpack.c.h.b16 %v40
  %v189 = vunpack.c.l.b16 %v41
  %v190 = vunpack.c.h.b16 %v41
  %v191 = vunpack.c.l.b16 %v42
  %v192 = vunpack.c.h.b16 %v42
  %v193 = vunpack.c.l.b16 %v43
  %v194 = vunpack.c.h.b16 %v43
  %v195 = vunpack.c.l.b16 %v44
  %v196 = vunpack.c.h.b16 %v44
  %v197 = vunpack.c.l.b16 %v45
  %v198 = vunpack.c.h.b16 %v45
  %v199 = vunpack.c.l.b16 %v46
  %v200 = vunpack.c.h.b16 %v46
  %v201 = vpack.c.b16 %v141, %v137
  %v202 = vpack.c.b16 %v142, %v138
  %v203 = vpack.c.b16 %v143, %v139
  %v204 = vpack.c.b16 %v144, %v140
  %v205 = vpack.c.b16 %v149, %v145
  %v206 = vpack.c.b16 %v150, %v146
  %v207 = vpack.c.b16 %v151, %v147
  %v208 = vpack.c.b16 %v152, %v148
  %v209 = vpack.c.b16 %v157, %v153
  %v210 = vpack.c.b16 %v158, %v154
  %v211 = vpack.c.b16 %v159, %v155
  %v212 = vpack.c.b16 %v160, %v156
  %v213 = vpack.c.b16 %v165, %v161
  %v214 = vpack.c.b16 %v166, %v162
  %v215 = vpack.c.b16 %v167, %v163
  %v216 = vpack.c.b16 %v168, %v164
  %v217 = vpack.c.b16 %v173, %v169
  %v218 = vpack.c.b16 %v174, %v170
  %v219 = vpack.c.b16 %v175, %v171
  %v220 = vpack.c.b16 %v176, %v172
  %v221 = vpack.c.b16 %v181, %v177
  %v222 = vpack.c.b16 %v182, %v178
  %v223 = vpack.c.b16 %v183, %v179
  %v224 = vpack.c.b16 %v184, %v180
  %v225 = vpack.c.b16 %v189, %v185
  %v226 = vpack.c.b16 %v190, %v186
  %v227 = vpack.c.b16 %v191, %v187
  %v228 = vpack.c.b16 %v192, %v188
  %v229 = vpack.c.b16 %v197, %v193
  %v230 = vpack.c.b16 %v198, %v194
  %v231 = vpack.c.b16 %v199, %v195
  %v232 = vpack.c.b16 %v200, %v196
  %v311 = vunpack.c.l.b16 %v47
  %v312 = vunpack.c.l.b16 %v48
  %v313 = vunpack.c.l.b16 %v49
  %v314 = vunpack.c.l.b16 %v50
  %v315 = vunpack.c.l.b16 %v51
  %v316 = vunpack.c.l.b16 %v52
  %v317 = vunpack.c.l.b16 %v53
  %v318 = vunpack.c.l.b16 %v54
  %v319 = vunpack.c.l.b16 %v55
  %v320 = vunpack.c.l.b16 %v56
  %v321 = vunpack.c.l.b16 %v57
  %v322 = vunpack.c.l.b16 %v58
  %v323 = vunpack.c.l.b16 %v59
  %v324 = vunpack.c.l.b16 %v60
  %v325 = vunpack.c.l.b16 %v61
  %v326 = vunpack.c.l.b16 %v62
  %v327 = vunpack.c.l.b16 %v63
  %v328 = vunpack.c.l.b16 %v64
  %v329 = vunpack.c.l.b16 %v65
  %v330 = vunpack.c.l.b16 %v66
  %v331 = vunpack.c.l.b16 %v67
  %v332 = vunpack.c.l.b16 %v68
  %v333 = vunpack.c.l.b16 %v69
  %v334 = vunpack.c.l.b16 %v70
  %v335 = vunpack.c.l.b16 %v71
  %v336 = vunpack.c.l.b16 %v72
  %v337 = vunpack.c.l.b16 %v73
  %v338 = vunpack.c.l.b16 %v74
  %v339 = vunpack.c.l.b16 %v75
  %v340 = vunpack.c.l.b16 %v76
  %v341 = vunpack.c.l.b16 %v77
  %v342 = vunpack.c.l.b16 %v78
  %v343 = vunpack.c.l.b16 %v79
  %v344 = vunpack.c.l.b16 %v80
  %v345 = vunpack.c.l.b16 %v81
  %v346 = vunpack.c.l.b16 %v82
  %v347 = vunpack.c.l.b16 %v83
  %v348 = vunpack.c.l.b16 %v84
  %v349 = vunpack.c.l.b16 %v85
  %v350 = vunpack.c.l.b16 %v86
  %v351 = vunpack.c.l.b16 %v87
  %v352 = vunpack.c.l.b16 %v88
  %v353 = vunpack.c.l.b16 %v89
  %v354 = vunpack.c.l.b16 %v90
  %v355 = vunpack.c.l.b16 %v91
  %v356 = vunpack.c.l.b16 %v92
  %v357 = vunpack.c.l.b16 %v93
  %v358 = vunpack.c.l.b16 %v94
  %v359 = vunpack.c.l.b16 %v95
  %v360 = vunpack.c.l.b16 %v96
  %v361 = vunpack.c.l.b16 %v97
  %v362 = vunpack.c.l.b16 %v98
  %v363 = vunpack.c.l.b16 %v99
  %v364 = vunpack.c.l.b16 %v100
  %v365 = vpack.c.b16 %v312, %v311
  %v366 = vpack.c.b16 %v314, %v313
  %v367 = vpack.c.b16 %v316, %v315
  %v368 = vpack.c.b16 %v318, %v317
  %v369 = vpack.c.b16 %v320, %v319
  %v370 = vpack.c.b16 %v322, %v321
  %v371 = vpack.c.b16 %v324, %v323
  %v372 = vpack.c.b16 %v326, %v325
  %v373 = vpack.c.b16 %v328, %v327
  %v374 = vpack.c.b16 %v330, %v329
  %v375 = vpack.c.b16 %v332, %v331
  %v376 = vpack.c.b16 %v334, %v333
  %v377 = vpack.c.b16 %v336, %v335
  %v378 = vpack.c.b16 %v338, %v337
  %v379 = vpack.c.b16 %v340, %v339
  %v380 = vpack.c.b16 %v342, %v341
  %v381 = vpack.c.b16 %v344, %v343
  %v382 = vpack.c.b16 %v346, %v345
  %v383 = vpack.c.b16 %v348, %v347
  %v384 = vpack.c.b16 %v350, %v349
  %v385 = vpack.c.b16 %v352, %v351
  %v386 = vpack.c.b16 %v354, %v353
  %v387 = vpack.c.b16 %v356, %v355
  %v388 = vpack.c.b16 %v358, %v357
  %v389 = vpack.c.b16 %v360, %v359
  %v390 = vpack.c.b16 %v362, %v361
  %v391 = vpack.c.b16 %v364, %v363
  %vm419 = vcmask 392192
  %v421 = vsel %vm419, %v204, 0
  %v424 = vsel %vm419, %v208, 0
  %v427 = vsel %vm419, %v212, 0
  %v430 = vsel %vm419, %v216, 0
  %v433 = vsel %vm419, %v220, 0
  %v436 = vsel %vm419, %v224, 0
  %v439 = vsel %vm419, %v228, 0
  %v442 = vsel %vm419, %v232, 0
  %444 = vmatpush.bf16.msra.mxu0 %v372
  %445 = vmatpush.bf16.msra.mxu0 %v371
  %446 = vmatpush.bf16.msra.mxu0 %v370
  %447 = vmatpush.bf16.msra.mxu0 %v369
  %448 = vmatpush.bf16.msra.mxu0 %v368
  %449 = vmatpush.bf16.msra.mxu0 %v367
  %450 = vmatpush.bf16.msra.mxu0 %v366
  %451 = vmatpush.bf16.msra.mxu0 %v365
  %452 = vmatmul.bf16.gmra.mxu0 %v201
  %v453 = vpop.f32.mrf.mxu0
  %v454 = vadd.f32 %v103, %v453
  %v455 = vpop.f32.mrf.mxu0
  %v456 = vadd.f32 %v103, %v455
  %457 = vmatmul.bf16.gmra.mxu0 %v205
  %v458 = vpop.f32.mrf.mxu0
  %v459 = vadd.f32 %v103, %v458
  %v460 = vpop.f32.mrf.mxu0
  %v461 = vadd.f32 %v103, %v460
  %462 = vmatmul.bf16.gmra.mxu0 %v209
  %v463 = vpop.f32.mrf.mxu0
  %v464 = vadd.f32 %v103, %v463
  %v465 = vpop.f32.mrf.mxu0
  %v466 = vadd.f32 %v103, %v465
  %467 = vmatmul.bf16.gmra.mxu0 %v213
  %v468 = vpop.f32.mrf.mxu0
  %v469 = vadd.f32 %v103, %v468
  %v470 = vpop.f32.mrf.mxu0
  %v471 = vadd.f32 %v103, %v470
  %472 = vmatmul.bf16.gmra.mxu0 %v217
  %v473 = vpop.f32.mrf.mxu0
  %v474 = vadd.f32 %v103, %v473
  %v475 = vpop.f32.mrf.mxu0
  %v476 = vadd.f32 %v103, %v475
  %477 = vmatmul.bf16.gmra.mxu0 %v221
  %v478 = vpop.f32.mrf.mxu0
  %v479 = vadd.f32 %v103, %v478
  %v480 = vpop.f32.mrf.mxu0
  %v481 = vadd.f32 %v103, %v480
  %482 = vmatmul.bf16.gmra.mxu0 %v225
  %v483 = vpop.f32.mrf.mxu0
  %v484 = vadd.f32 %v103, %v483
  %v485 = vpop.f32.mrf.mxu0
  %v486 = vadd.f32 %v103, %v485
  %487 = vmatmul.bf16.gmra.mxu0 %v229
  %v488 = vpop.f32.mrf.mxu0
  %v489 = vadd.f32 %v103, %v488
  %v490 = vpop.f32.mrf.mxu0
  %v491 = vadd.f32 %v103, %v490
  %492 = vdwg.mxu0
  %493 = vmatpush.bf16.msra.mxu0 %v380
  %494 = vmatpush.bf16.msra.mxu0 %v379
  %495 = vmatpush.bf16.msra.mxu0 %v378
  %496 = vmatpush.bf16.msra.mxu0 %v377
  %497 = vmatpush.bf16.msra.mxu0 %v376
  %498 = vmatpush.bf16.msra.mxu0 %v375
  %499 = vmatpush.bf16.msra.mxu0 %v374
  %500 = vmatpush.bf16.msra.mxu0 %v373
  %501 = vmatmul.bf16.gmra.mxu0 %v202
  %v502 = vpop.f32.mrf.mxu0
  %v503 = vadd.f32 %v454, %v502
  %v504 = vpop.f32.mrf.mxu0
  %v505 = vadd.f32 %v456, %v504
  %506 = vmatmul.bf16.gmra.mxu0 %v206
  %v507 = vpop.f32.mrf.mxu0
  %v508 = vadd.f32 %v459, %v507
  %v509 = vpop.f32.mrf.mxu0
  %v510 = vadd.f32 %v461, %v509
  %511 = vmatmul.bf16.gmra.mxu0 %v210
  %v512 = vpop.f32.mrf.mxu0
  %v513 = vadd.f32 %v464, %v512
  %v514 = vpop.f32.mrf.mxu0
  %v515 = vadd.f32 %v466, %v514
  %516 = vmatmul.bf16.gmra.mxu0 %v214
  %v517 = vpop.f32.mrf.mxu0
  %v518 = vadd.f32 %v469, %v517
  %v519 = vpop.f32.mrf.mxu0
  %v520 = vadd.f32 %v471, %v519
  %521 = vmatmul.bf16.gmra.mxu0 %v218
  %v522 = vpop.f32.mrf.mxu0
  %v523 = vadd.f32 %v474, %v522
  %v524 = vpop.f32.mrf.mxu0
  %v525 = vadd.f32 %v476, %v524
  %526 = vmatmul.bf16.gmra.mxu0 %v222
  %v527 = vpop.f32.mrf.mxu0
  %v528 = vadd.f32 %v479, %v527
  %v529 = vpop.f32.mrf.mxu0
  %v530 = vadd.f32 %v481, %v529
  %531 = vmatmul.bf16.gmra.mxu0 %v226
  %v532 = vpop.f32.mrf.mxu0
  %v533 = vadd.f32 %v484, %v532
  %v534 = vpop.f32.mrf.mxu0
  %v535 = vadd.f32 %v486, %v534
  %536 = vmatmul.bf16.gmra.mxu0 %v230
  %v537 = vpop.f32.mrf.mxu0
  %v538 = vadd.f32 %v489, %v537
  %v539 = vpop.f32.mrf.mxu0
  %v540 = vadd.f32 %v491, %v539
  %541 = vdwg.mxu0
  %542 = vmatpush.bf16.msra.mxu0 %v388
  %543 = vmatpush.bf16.msra.mxu0 %v387
  %544 = vmatpush.bf16.msra.mxu0 %v386
  %545 = vmatpush.bf16.msra.mxu0 %v385
  %546 = vmatpush.bf16.msra.mxu0 %v384
  %547 = vmatpush.bf16.msra.mxu0 %v383
  %548 = vmatpush.bf16.msra.mxu0 %v382
  %549 = vmatpush.bf16.msra.mxu0 %v381
  %550 = vmatmul.bf16.gmra.mxu0 %v203
  %v551 = vpop.f32.mrf.mxu0
  %v552 = vadd.f32 %v503, %v551
  %v553 = vpop.f32.mrf.mxu0
  %v554 = vadd.f32 %v505, %v553
  %555 = vmatmul.bf16.gmra.mxu0 %v207
  %v556 = vpop.f32.mrf.mxu0
  %v557 = vadd.f32 %v508, %v556
  %v558 = vpop.f32.mrf.mxu0
  %v559 = vadd.f32 %v510, %v558
  %560 = vmatmul.bf16.gmra.mxu0 %v211
  %v561 = vpop.f32.mrf.mxu0
  %v562 = vadd.f32 %v513, %v561
  %v563 = vpop.f32.mrf.mxu0
  %v564 = vadd.f32 %v515, %v563
  %565 = vmatmul.bf16.gmra.mxu0 %v215
  %v566 = vpop.f32.mrf.mxu0
  %v567 = vadd.f32 %v518, %v566
  %v568 = vpop.f32.mrf.mxu0
  %v569 = vadd.f32 %v520, %v568
  %570 = vmatmul.bf16.gmra.mxu0 %v219
  %v571 = vpop.f32.mrf.mxu0
  %v572 = vadd.f32 %v523, %v571
  %v573 = vpop.f32.mrf.mxu0
  %v574 = vadd.f32 %v525, %v573
  %575 = vmatmul.bf16.gmra.mxu0 %v223
  %v576 = vpop.f32.mrf.mxu0
  %v577 = vadd.f32 %v528, %v576
  %v578 = vpop.f32.mrf.mxu0
  %v579 = vadd.f32 %v530, %v578
  %580 = vmatmul.bf16.gmra.mxu0 %v227
  %v581 = vpop.f32.mrf.mxu0
  %v582 = vadd.f32 %v533, %v581
  %v583 = vpop.f32.mrf.mxu0
  %v584 = vadd.f32 %v535, %v583
  %585 = vmatmul.bf16.gmra.mxu0 %v231
  %v586 = vpop.f32.mrf.mxu0
  %v587 = vadd.f32 %v538, %v586
  %v588 = vpop.f32.mrf.mxu0
  %v589 = vadd.f32 %v540, %v588
  %590 = vdwg.mxu0
  %591 = vmatpush.bf16.msra.mxu0 0
  %592 = vmatpush.bf16.msra.mxu0 0
  %593 = vmatpush.bf16.msra.mxu0 0
  %594 = vmatpush.bf16.msra.mxu0 0
  %595 = vmatpush.bf16.msra.mxu0 0
  %596 = vmatpush.bf16.msra.mxu0 %v391
  %597 = vmatpush.bf16.msra.mxu0 %v390
  %598 = vmatpush.bf16.msra.mxu0 %v389
  %599 = vmatmul.bf16.gmra.mxu0 %v421
  %v600 = vpop.f32.mrf.mxu0
  %v601 = vadd.f32 %v552, %v600
  %v602 = vpop.f32.mrf.mxu0
  %v603 = vadd.f32 %v554, %v602
  %604 = vmatmul.bf16.gmra.mxu0 %v424
  %v605 = vpop.f32.mrf.mxu0
  %v606 = vadd.f32 %v557, %v605
  %v607 = vpop.f32.mrf.mxu0
  %v608 = vadd.f32 %v559, %v607
  %609 = vmatmul.bf16.gmra.mxu0 %v427
  %v610 = vpop.f32.mrf.mxu0
  %v611 = vadd.f32 %v562, %v610
  %v612 = vpop.f32.mrf.mxu0
  %v613 = vadd.f32 %v564, %v612
  %614 = vmatmul.bf16.gmra.mxu0 %v430
  %v615 = vpop.f32.mrf.mxu0
  %v616 = vadd.f32 %v567, %v615
  %v617 = vpop.f32.mrf.mxu0
  %v618 = vadd.f32 %v569, %v617
  %619 = vmatmul.bf16.gmra.mxu0 %v433
  %v620 = vpop.f32.mrf.mxu0
  %v621 = vadd.f32 %v572, %v620
  %v622 = vpop.f32.mrf.mxu0
  %v623 = vadd.f32 %v574, %v622
  %624 = vmatmul.bf16.gmra.mxu0 %v436
  %v625 = vpop.f32.mrf.mxu0
  %v626 = vadd.f32 %v577, %v625
  %v627 = vpop.f32.mrf.mxu0
  %v628 = vadd.f32 %v579, %v627
  %629 = vmatmul.bf16.gmra.mxu0 %v439
  %v630 = vpop.f32.mrf.mxu0
  %v631 = vadd.f32 %v582, %v630
  %v632 = vpop.f32.mrf.mxu0
  %v633 = vadd.f32 %v584, %v632
  %634 = vmatmul.bf16.gmra.mxu0 %v442
  %v635 = vpop.f32.mrf.mxu0
  %v636 = vadd.f32 %v587, %v635
  %v637 = vpop.f32.mrf.mxu0
  %v638 = vadd.f32 %v589, %v637
  %639 = vdwg.mxu0
  %vm640 = vcmask 97280
  %641 = vst.msk [vmem:[%s3] sm:$0xff] %vm640, %v601
  %642 = vst.msk [vmem:[%s3 + $0x8] sm:$0xff] %vm640, %v603
  %643 = vst.msk [vmem:[%s3 + $0x10] sm:$0xff] %vm640, %v606
  %644 = vst.msk [vmem:[%s3 + $0x18] sm:$0xff] %vm640, %v608
  %645 = vst.msk [vmem:[%s3 + $0x20] sm:$0xff] %vm640, %v611
  %646 = vst.msk [vmem:[%s3 + $0x28] sm:$0xff] %vm640, %v613
  %647 = vst.msk [vmem:[%s3 + $0x30] sm:$0xff] %vm640, %v616
  %648 = vst.msk [vmem:[%s3 + $0x38] sm:$0xff] %vm640, %v618
  %649 = vst.msk [vmem:[%s3 + $0x40] sm:$0xff] %vm640, %v621
  %650 = vst.msk [vmem:[%s3 + $0x48] sm:$0xff] %vm640, %v623
  %651 = vst.msk [vmem:[%s3 + $0x50] sm:$0xff] %vm640, %v626
  %652 = vst.msk [vmem:[%s3 + $0x58] sm:$0xff] %vm640, %v628
  %653 = vst.msk [vmem:[%s3 + $0x60] sm:$0xff] %vm640, %v631
  %654 = vst.msk [vmem:[%s3 + $0x68] sm:$0xff] %vm640, %v633
  %655 = vst.msk [vmem:[%s3 + $0x70] sm:$0xff] %vm640, %v636
  %656 = vst.msk [vmem:[%s3 + $0x78] sm:$0xff] %vm640, %v638
  // Predicated region
  $region14: #{mambamim_forward.8} parent=0 // pred_check
    _
  $region15: #{mambamim_forward.8} parent=0 // pred_check_branch
    %658 = sbr.rel (0) target = $region17
  $region16: #{mambamim_forward.8} parent=0 // pred_region
    _
  $region17: #{mambamim_forward.8} parent=0 // pred_fallthru
    _
  // Predicated region
  $region18: #{mambamim_forward.8} parent=0 // pred_check
    _
  $region19: #{mambamim_forward.8} parent=0 // pred_check_branch
    %660 = sbr.rel (0) target = $region21
  $region20: #{mambamim_forward.8} parent=0 // pred_region
    _
  $region21: #{mambamim_forward.8} parent=0 // pred_fallthru
    _

// kernel: squeeze.5
$region0: #{squeeze.5}
  %s0 = inlined_call_operand.vmem [shape: pred[2,1,2,2,2], index: 0, kind: input, shape index: {}]
  %s1 = inlined_call_operand.vmem [shape: pred[2,8], index: 1, kind: output, shape index: {}]
  $region1: #{squeeze.5} parent=0
    #allocation0 [shape = 'u8[4096]{0}', space=vmem, size = 0x1000, scoped, tag = 'scoped mem for output reshape']
    #allocation1 [shape = 'u8[16384]{0}', space=vmem, size = 0x4000, scoped, tag = 'scoped mem for input reshape']
    %s3 = ssub.s32 16, 1
    %s4 = sand.u32 %s3, 15
    %p5 = scmp.ne.s32.totalorder %s4, 0
    %s6 = scalar_select %p5, 1, 0
    %s7 = sand.u32 %s3, 240
    %p8 = scmp.ne.s32.totalorder %s7, 0
    %s9 = scalar_select %p8, 2, 0
    %s10 = sor.u32 %s6, %s9
    %s11 = scalar_lea.vmem %s0, 3
    %v12 = vld [vmem:[%s11] sm:%s10]
    %v13 = vunpack.c.0.s8 %v12
    %v14 = vunpack.c.1.s8 %v12
    %v15 = vunpack.c.2.s8 %v12
    %v16 = vunpack.c.3.s8 %v12
    %s17 = scalar_lea.vmem [#allocation1], 24
    %18 = vst [vmem:[%s17] sm:%s3] %v13
    %s19 = sand.u32 %s3, 15
    %p20 = scmp.ne.s32.totalorder %s19, 0
    %s21 = scalar_select %p20, 1, 0
    %s22 = sand.u32 %s3, 240
    %p23 = scmp.ne.s32.totalorder %s22, 0
    %s24 = scalar_select %p23, 2, 0
    %s25 = sor.u32 %s21, %s24
    %s26 = scalar_lea.vmem %s0, 2
    %v27 = vld [vmem:[%s26] sm:%s25]
    %v28 = vunpack.c.0.s8 %v27
    %v29 = vunpack.c.1.s8 %v27
    %v30 = vunpack.c.2.s8 %v27
    %v31 = vunpack.c.3.s8 %v27
    %s32 = scalar_lea.vmem [#allocation1], 16
    %33 = vst [vmem:[%s32] sm:%s3] %v28
    %s34 = sand.u32 %s3, 15
    %p35 = scmp.ne.s32.totalorder %s34, 0
    %s36 = scalar_select %p35, 1, 0
    %s37 = sand.u32 %s3, 240
    %p38 = scmp.ne.s32.totalorder %s37, 0
    %s39 = scalar_select %p38, 2, 0
    %s40 = sor.u32 %s36, %s39
    %s41 = scalar_lea.vmem %s0, 1
    %v42 = vld [vmem:[%s41] sm:%s40]
    %v43 = vunpack.c.0.s8 %v42
    %v44 = vunpack.c.1.s8 %v42
    %v45 = vunpack.c.2.s8 %v42
    %v46 = vunpack.c.3.s8 %v42
    %s47 = scalar_lea.vmem [#allocation1], 8
    %48 = vst [vmem:[%s47] sm:%s3] %v43
    %s49 = sand.u32 %s3, 15
    %p50 = scmp.ne.s32.totalorder %s49, 0
    %s51 = scalar_select %p50, 1, 0
    %s52 = sand.u32 %s3, 240
    %p53 = scmp.ne.s32.totalorder %s52, 0
    %s54 = scalar_select %p53, 2, 0
    %s55 = sor.u32 %s51, %s54
    %v56 = vld [vmem:[%s0] sm:%s55]
    %v57 = vunpack.c.0.s8 %v56
    %v58 = vunpack.c.1.s8 %v56
    %v59 = vunpack.c.2.s8 %v56
    %v60 = vunpack.c.3.s8 %v56
    %61 = vst [vmem:[#allocation1] sm:%s3] %v57
    %s62 = smov 3
    %v63 = vld [vmem:[#allocation1] ss:$16 sm:%s62]
    %vm64 = vcmask 15360
    %65 = vst.msk [vmem:[#allocation0] sm:$0x3] %vm64, %v63
    %s66 = scalar_lea.vmem [#allocation1], 9
    %s67 = smov 3
    %v68 = vld [vmem:[%s66] ss:$16 sm:%s67]
    %69 = vrot.lane.b32.xlu0 %v68, 6
    %v70 = vpop.permute.xlu0 %69
    %vm71 = vcmask 64560
    %72 = vst.msk [vmem:[#allocation0] sm:$0x3] %vm71, %v70
    %s73 = scalar_lea.vmem [#allocation1], 8
    %s74 = smov 3
    %v75 = vld [vmem:[%s73] ss:$16 sm:%s74]
    %76 = vrot.lane.b32.xlu0 %v75, 4
    %v77 = vpop.permute.xlu0 %76
    %vm78 = vcmask 48160
    %79 = vst.msk [vmem:[#allocation0] sm:$0x3] %vm78, %v77
    %s80 = scalar_lea.vmem [#allocation1], 1
    %s81 = smov 3
    %v82 = vld [vmem:[%s80] ss:$16 sm:%s81]
    %83 = vrot.lane.b32.xlu0 %v82, 2
    %v84 = vpop.permute.xlu0 %83
    %vm85 = vcmask 31760
    %86 = vst.msk [vmem:[#allocation0] sm:$0x3] %vm85, %v84
    %s88 = ssub.s32 16, 1
    %v89 = vld [vmem:[#allocation0] sm:%s88]
    %s91 = ssub.s32 2, 1
    %v92 = vpack.c.b16 0, %v89
    %v93 = vpack.c.b8 0, %v92
    %94 = vst [vmem:[%s1] sm:%s91] %v93

// kernel: mambamim_forward.6
$region0: #{mambamim_forward.6}
  #allocation0 [shape = 'u32[]', space=smem, size = 0x4, offset = 0x4, fixed_abs, tag = 'smem constant byte address 0x4 - core index']
  #allocation1 [shape = 'u32[72,128]{1,0:T(1,128)}', space=vmem, size = 0x9000, scoped, tag = 'internal scratch']
  %s0 = inlined_call_operand.vmem [shape: bf16[16,128], index: 0, kind: input, shape index: {}]
  %s1 = inlined_call_operand.vmem [shape: bf16[128,32], index: 1, kind: input, shape index: {}]
  %s2 = inlined_call_operand.vmem [shape: f32[1,32], index: 2, kind: input, shape index: {}]
  %s3 = inlined_call_operand.vmem [shape: f32[16,1], index: 3, kind: input, shape index: {}]
  %s4 = inlined_call_operand.vmem [shape: f32[16,32], index: 4, kind: output, shape index: {}]
  %s5 = sld [smem:[#allocation0]]
  $region26: #{mambamim_forward.6} parent=0
    _
  %s7 = ssub.s32 1, %s5
  %s8 = scalar_select 0, %s7, %s5
  // Predicated region
  $region2: #{mambamim_forward.6} parent=0 // pred_check
    _
  $region3: #{mambamim_forward.6} parent=0 // pred_check_branch
    %10 = sbr.rel (0) target = $region5
  $region4: #{mambamim_forward.6} parent=0 // pred_region
    _
  $region5: #{mambamim_forward.6} parent=0 // pred_fallthru
    _
  // Predicated region
  $region6: #{mambamim_forward.6} parent=0 // pred_check
    _
  $region7: #{mambamim_forward.6} parent=0 // pred_check_branch
    %12 = sbr.rel (0) target = $region9
  $region8: #{mambamim_forward.6} parent=0 // pred_region
    _
  $region9: #{mambamim_forward.6} parent=0 // pred_fallthru
    _
  // Predicated region
  $region10: #{mambamim_forward.6} parent=0 // pred_check
    _
  $region11: #{mambamim_forward.6} parent=0 // pred_check_branch
    %14 = sbr.rel (0) target = $region13
  $region12: #{mambamim_forward.6} parent=0 // pred_region
    _
  $region13: #{mambamim_forward.6} parent=0 // pred_fallthru
    _
  // Predicated region
  $region14: #{mambamim_forward.6} parent=0 // pred_check
    _
  $region15: #{mambamim_forward.6} parent=0 // pred_check_branch
    %16 = sbr.rel (0) target = $region17
  $region16: #{mambamim_forward.6} parent=0 // pred_region
    _
  $region17: #{mambamim_forward.6} parent=0 // pred_fallthru
    _
  %v17 = vld [vmem:[%s0] sm:$0xf]
  %v18 = vld [vmem:[%s0 + $0x4] sm:$0xf]
  %v19 = vld [vmem:[%s1] sm:$0xf]
  %v20 = vld [vmem:[%s1 + $0x4] sm:$0xf]
  %v21 = vld [vmem:[%s1 + $0x8] sm:$0xf]
  %v22 = vld [vmem:[%s1 + $0xc] sm:$0xf]
  %v23 = vld [vmem:[%s1 + $0x10] sm:$0xf]
  %v24 = vld [vmem:[%s1 + $0x14] sm:$0xf]
  %v25 = vld [vmem:[%s1 + $0x18] sm:$0xf]
  %v26 = vld [vmem:[%s1 + $0x1c] sm:$0xf]
  %v27 = vld [vmem:[%s1 + $0x20] sm:$0xf]
  %v28 = vld [vmem:[%s1 + $0x24] sm:$0xf]
  %v29 = vld [vmem:[%s1 + $0x28] sm:$0xf]
  %v30 = vld [vmem:[%s1 + $0x2c] sm:$0xf]
  %v31 = vld [vmem:[%s1 + $0x30] sm:$0xf]
  %v32 = vld [vmem:[%s1 + $0x34] sm:$0xf]
  %v33 = vld [vmem:[%s1 + $0x38] sm:$0xf]
  %v34 = vld [vmem:[%s1 + $0x3c] sm:$0xf]
  %v35 = vld [vmem:[%s2] sm:$0x1]
  %v37 = vperm.slane %v35, 0
  %v41 = vunpack.c.l.b16 %v17
  %v42 = vunpack.c.l.b16 %v18
  %v43 = vpack.c.b16 %v42, %v41
  %v61 = vunpack.c.l.b16 %v19
  %v62 = vunpack.c.l.b16 %v20
  %v63 = vunpack.c.l.b16 %v21
  %v64 = vunpack.c.l.b16 %v22
  %v65 = vunpack.c.l.b16 %v23
  %v66 = vunpack.c.l.b16 %v24
  %v67 = vunpack.c.l.b16 %v25
  %v68 = vunpack.c.l.b16 %v26
  %v69 = vunpack.c.l.b16 %v27
  %v70 = vunpack.c.l.b16 %v28
  %v71 = vunpack.c.l.b16 %v29
  %v72 = vunpack.c.l.b16 %v30
  %v73 = vunpack.c.l.b16 %v31
  %v74 = vunpack.c.l.b16 %v32
  %v75 = vunpack.c.l.b16 %v33
  %v76 = vunpack.c.l.b16 %v34
  %v77 = vpack.c.b16 %v62, %v61
  %v78 = vpack.c.b16 %v64, %v63
  %v79 = vpack.c.b16 %v66, %v65
  %v80 = vpack.c.b16 %v68, %v67
  %v81 = vpack.c.b16 %v70, %v69
  %v82 = vpack.c.b16 %v72, %v71
  %v83 = vpack.c.b16 %v74, %v73
  %v84 = vpack.c.b16 %v76, %v75
  %93 = vmatpush.bf16.msra.mxu0 %v84
  %94 = vmatpush.bf16.msra.mxu0 %v83
  %95 = vmatpush.bf16.msra.mxu0 %v82
  %96 = vmatpush.bf16.msra.mxu0 %v81
  %97 = vmatpush.bf16.msra.mxu0 %v80
  %98 = vmatpush.bf16.msra.mxu0 %v79
  %99 = vmatpush.bf16.msra.mxu0 %v78
  %100 = vmatpush.bf16.msra.mxu0 %v77
  %101 = vmatmul.bf16.gmra.mxu0 %v43
  %v102 = vpop.f32.mrf.mxu0
  %v103 = vadd.f32 %v37, %v102
  %v104 = vpop.f32.mrf.mxu0
  %v105 = vadd.f32 %v37, %v104
  %106 = vdwg.mxu0
  %v107 = vld [vmem:[%s3] sm:$0xff]
  %v108 = vld [vmem:[%s3 + $0x8] sm:$0xff]
  %vm109 = vcmp.ne.f32.partialorder %v107, 0.0
  %vm110 = vcmp.ne.f32.partialorder %v108, 0.0
  %v111 = vsel %vm109, 1, 0
  %v112 = vsel %vm110, 1, 0
  %113 = vset.pattern.permute.xlu0 0
  %114 = vperm.xlu0 %113, %v111
  %v115 = vpop.permute.xlu0 %114
  %116 = vset.pattern.permute.xlu0 0
  %117 = vperm.xlu0 %116, %v112
  %v118 = vpop.permute.xlu0 %117
  %vm119 = vcmp.eq.s32.totalorder %v115, 1
  %vm120 = vcmp.eq.s32.totalorder %v118, 1
  %v121 = vsel %vm119, %v103, 0.0
  %v122 = vsel %vm120, %v105, 0.0
  %vm123 = vcmask 261120
  %124 = vst.msk [vmem:[%s4] sm:$0xff] %vm123, %v121
  %125 = vst.msk [vmem:[%s4 + $0x8] sm:$0xff] %vm123, %v122
  // Predicated region
  $region18: #{mambamim_forward.6} parent=0 // pred_check
    _
  $region19: #{mambamim_forward.6} parent=0 // pred_check_branch
    %127 = sbr.rel (0) target = $region21
  $region20: #{mambamim_forward.6} parent=0 // pred_region
    _
  $region21: #{mambamim_forward.6} parent=0 // pred_fallthru
    _
  // Predicated region
  $region22: #{mambamim_forward.6} parent=0 // pred_check
    _
  $region23: #{mambamim_forward.6} parent=0 // pred_check_branch
    %129 = sbr.rel (0) target = $region25
  $region24: #{mambamim_forward.6} parent=0 // pred_region
    _
  $region25: #{mambamim_forward.6} parent=0 // pred_fallthru
    _

// kernel: reverse.1
$region0: #{reverse.1}
  %s0 = inlined_call_operand.vmem [shape: s32[2,4], index: 0, kind: input, shape index: {}]
  %s1 = inlined_call_operand.vmem [shape: s32[2,4], index: 1, kind: output, shape index: {}]
  %v2 = vlaneseq
  %v3 = vsub.s32 3, %v2
  %4 = vset.pattern.permute.xlu0 %v3
  $region1: #{reverse.1} parent=0
    #allocation0 [shape = 'u8[4096]{0}', space=vmem, size = 0x1000, scoped, tag = 'operand span for operand 0']
    #allocation1 [shape = 'u8[1024]{0}', space=vmem, size = 0x400, scoped, tag = 'packed  for operand 0']
    #allocation2 [shape = 'u8[4096]{0}', space=vmem, size = 0x1000, scoped, tag = 'operand span for operand 1']
    #allocation3 [shape = 'u8[1024]{0}', space=vmem, size = 0x400, scoped, tag = 'packed  for operand 1']
    // Predicated region
    $region2: #{reverse.1} parent=1 // pred_check
      _
    $region3: #{reverse.1} parent=1 // pred_check_branch
      %6 = sbr.rel (0) target = $region5
    $region4: #{reverse.1} parent=1 // pred_region
      // Predicated region
      $region6: #{reverse.1} parent=4 // pred_check
        _
      $region7: #{reverse.1} parent=4 // pred_check_branch
        %8 = sbr.rel target = $region9
      $region8: #{reverse.1} parent=4 // pred_region
        // Predicated region
        $region21: #{reverse.1} parent=8 // pred_check
          _
        $region22: #{reverse.1} parent=8 // pred_check_branch
          %24 = sbr.rel (0) target = $region24
        $region23: #{reverse.1} parent=8 // pred_region
          %s26 = ssub.s32 4, 1
          loop: start=0, step=1, limit=1
          $region25: #{reverse.1} parent=23 // loop_pre_header
            _
          $region26: #{reverse.1} parent=23 // loop_header
            %s28 = sphi 0, %s32
            %p29 = scmp.ge.s32.totalorder %s28, 1
            %s33 = sphi %s0, %s0
            %s34 = sphi [#allocation1], [#allocation1]
          $region27: #{reverse.1} parent=23 // loop_header_branch
            %31 = sbr.rel (%p29) target = $region31
          $region28: #{reverse.1} parent=23 // loop_body
            %v35 = vld [vmem:[%s33] sm:%s26]
            %36 = vst [vmem:[%s34] sm:%s26] %v35
          $region29: #{reverse.1} parent=23 // loop_footer
            %s32 = sadd.s32 1, %s28
          $region30: #{reverse.1} parent=23 // loop_footer_branch
            %27 = sbr.rel target = $region26
          $region31: #{reverse.1} parent=23 // loop_exit
            _
        $region24: #{reverse.1} parent=8 // pred_fallthru
          _
      $region9: #{reverse.1} parent=4 // pred_fallthru
        _
      // Predicated region
      $region10: #{reverse.1} parent=4 // pred_check
        _
      $region11: #{reverse.1} parent=4 // pred_check_branch
        %10 = sbr.rel (0) target = $region13
      $region12: #{reverse.1} parent=4 // pred_region
        %s12 = ssub.s32 4, 1
        loop: start=0, step=1, limit=1
        $region14: #{reverse.1} parent=12 // loop_pre_header
          _
        $region15: #{reverse.1} parent=12 // loop_header
          %s14 = sphi 0, %s18
          %p15 = scmp.ge.s32.totalorder %s14, 1
          %s19 = sphi %s0, %s0
          %s20 = sphi [#allocation1], [#allocation1]
        $region16: #{reverse.1} parent=12 // loop_header_branch
          %17 = sbr.rel (%p15) target = $region20
        $region17: #{reverse.1} parent=12 // loop_body
          %v21 = vld [vmem:[%s19] sm:%s12]
          %22 = vst [vmem:[%s20] sm:%s12] %v21
        $region18: #{reverse.1} parent=12 // loop_footer
          %s18 = sadd.s32 1, %s14
        $region19: #{reverse.1} parent=12 // loop_footer_branch
          %13 = sbr.rel target = $region15
        $region20: #{reverse.1} parent=12 // loop_exit
          _
      $region13: #{reverse.1} parent=4 // pred_fallthru
        _
    $region5: #{reverse.1} parent=1 // pred_fallthru
      _
    %37 = vnop
    %s39 = ssub.s32 4, 1
    %v40 = vld [vmem:[#allocation1] sm:%s39]
    %41 = vst [vmem:[#allocation0] sm:%s39] %v40
    %v42 = vld [vmem:[#allocation0] sm:$0xff]
    %43 = vperm.xlu0 %4, %v42
    %v44 = vpop.permute.xlu0 %43
    %45 = vst [vmem:[#allocation2] sm:$0xff] %v44
    %s47 = ssub.s32 4, 1
    %v48 = vld [vmem:[#allocation2] sm:%s47]
    %s50 = ssub.s32 4, 1
    %51 = vst [vmem:[#allocation3] sm:%s50] %v48
    // Predicated region
    $region32: #{reverse.1} parent=1 // pred_check
      _
    $region33: #{reverse.1} parent=1 // pred_check_branch
      %53 = sbr.rel (0) target = $region35
    $region34: #{reverse.1} parent=1 // pred_region
      // Predicated region
      $region36: #{reverse.1} parent=34 // pred_check
        _
      $region37: #{reverse.1} parent=34 // pred_check_branch
        %55 = sbr.rel target = $region39
      $region38: #{reverse.1} parent=34 // pred_region
        // Predicated region
        $region51: #{reverse.1} parent=38 // pred_check
          _
        $region52: #{reverse.1} parent=38 // pred_check_branch
          %71 = sbr.rel (0) target = $region54
        $region53: #{reverse.1} parent=38 // pred_region
          %s73 = ssub.s32 4, 1
          loop: start=0, step=1, limit=1
          $region55: #{reverse.1} parent=53 // loop_pre_header
            _
          $region56: #{reverse.1} parent=53 // loop_header
            %s75 = sphi 0, %s79
            %p76 = scmp.ge.s32.totalorder %s75, 1
            %s80 = sphi [#allocation3], [#allocation3]
            %s81 = sphi %s1, %s1
          $region57: #{reverse.1} parent=53 // loop_header_branch
            %78 = sbr.rel (%p76) target = $region61
          $region58: #{reverse.1} parent=53 // loop_body
            %v82 = vld [vmem:[%s80] sm:%s73]
            %83 = vst [vmem:[%s81] sm:%s73] %v82
          $region59: #{reverse.1} parent=53 // loop_footer
            %s79 = sadd.s32 1, %s75
          $region60: #{reverse.1} parent=53 // loop_footer_branch
            %74 = sbr.rel target = $region56
          $region61: #{reverse.1} parent=53 // loop_exit
            _
        $region54: #{reverse.1} parent=38 // pred_fallthru
          _
      $region39: #{reverse.1} parent=34 // pred_fallthru
        _
      // Predicated region
      $region40: #{reverse.1} parent=34 // pred_check
        _
      $region41: #{reverse.1} parent=34 // pred_check_branch
        %57 = sbr.rel (0) target = $region43
      $region42: #{reverse.1} parent=34 // pred_region
        %s59 = ssub.s32 4, 1
        loop: start=0, step=1, limit=1
        $region44: #{reverse.1} parent=42 // loop_pre_header
          _
        $region45: #{reverse.1} parent=42 // loop_header
          %s61 = sphi 0, %s65
          %p62 = scmp.ge.s32.totalorder %s61, 1
          %s66 = sphi [#allocation3], [#allocation3]
          %s67 = sphi %s1, %s1
        $region46: #{reverse.1} parent=42 // loop_header_branch
          %64 = sbr.rel (%p62) target = $region50
        $region47: #{reverse.1} parent=42 // loop_body
          %v68 = vld [vmem:[%s66] sm:%s59]
          %69 = vst [vmem:[%s67] sm:%s59] %v68
        $region48: #{reverse.1} parent=42 // loop_footer
          %s65 = sadd.s32 1, %s61
        $region49: #{reverse.1} parent=42 // loop_footer_branch
          %60 = sbr.rel target = $region45
        $region50: #{reverse.1} parent=42 // loop_exit
          _
      $region43: #{reverse.1} parent=34 // pred_fallthru
        _
    $region35: #{reverse.1} parent=1 // pred_fallthru
      _
    %84 = vnop

// kernel: reverse.3
$region0: #{reverse.3}
  %s0 = inlined_call_operand.vmem [shape: s32[2,3], index: 0, kind: input, shape index: {}]
  %s1 = inlined_call_operand.vmem [shape: s32[2,3], index: 1, kind: output, shape index: {}]
  %v2 = vlaneseq
  %v3 = vsub.s32 2, %v2
  %4 = vset.pattern.permute.xlu0 %v3
  $region1: #{reverse.3} parent=0
    #allocation0 [shape = 'u8[4096]{0}', space=vmem, size = 0x1000, scoped, tag = 'operand span for operand 0']
    #allocation1 [shape = 'u8[1024]{0}', space=vmem, size = 0x400, scoped, tag = 'packed  for operand 0']
    #allocation2 [shape = 'u8[4096]{0}', space=vmem, size = 0x1000, scoped, tag = 'operand span for operand 1']
    #allocation3 [shape = 'u8[1024]{0}', space=vmem, size = 0x400, scoped, tag = 'packed  for operand 1']
    // Predicated region
    $region2: #{reverse.3} parent=1 // pred_check
      _
    $region3: #{reverse.3} parent=1 // pred_check_branch
      %6 = sbr.rel (0) target = $region5
    $region4: #{reverse.3} parent=1 // pred_region
      // Predicated region
      $region6: #{reverse.3} parent=4 // pred_check
        _
      $region7: #{reverse.3} parent=4 // pred_check_branch
        %8 = sbr.rel target = $region9
      $region8: #{reverse.3} parent=4 // pred_region
        // Predicated region
        $region21: #{reverse.3} parent=8 // pred_check
          _
        $region22: #{reverse.3} parent=8 // pred_check_branch
          %24 = sbr.rel (0) target = $region24
        $region23: #{reverse.3} parent=8 // pred_region
          %s26 = ssub.s32 4, 1
          loop: start=0, step=1, limit=1
          $region25: #{reverse.3} parent=23 // loop_pre_header
            _
          $region26: #{reverse.3} parent=23 // loop_header
            %s28 = sphi 0, %s32
            %p29 = scmp.ge.s32.totalorder %s28, 1
            %s33 = sphi %s0, %s0
            %s34 = sphi [#allocation1], [#allocation1]
          $region27: #{reverse.3} parent=23 // loop_header_branch
            %31 = sbr.rel (%p29) target = $region31
          $region28: #{reverse.3} parent=23 // loop_body
            %v35 = vld [vmem:[%s33] sm:%s26]
            %36 = vst [vmem:[%s34] sm:%s26] %v35
          $region29: #{reverse.3} parent=23 // loop_footer
            %s32 = sadd.s32 1, %s28
          $region30: #{reverse.3} parent=23 // loop_footer_branch
            %27 = sbr.rel target = $region26
          $region31: #{reverse.3} parent=23 // loop_exit
            _
        $region24: #{reverse.3} parent=8 // pred_fallthru
          _
      $region9: #{reverse.3} parent=4 // pred_fallthru
        _
      // Predicated region
      $region10: #{reverse.3} parent=4 // pred_check
        _
      $region11: #{reverse.3} parent=4 // pred_check_branch
        %10 = sbr.rel (0) target = $region13
      $region12: #{reverse.3} parent=4 // pred_region
        %s12 = ssub.s32 4, 1
        loop: start=0, step=1, limit=1
        $region14: #{reverse.3} parent=12 // loop_pre_header
          _
        $region15: #{reverse.3} parent=12 // loop_header
          %s14 = sphi 0, %s18
          %p15 = scmp.ge.s32.totalorder %s14, 1
          %s19 = sphi %s0, %s0
          %s20 = sphi [#allocation1], [#allocation1]
        $region16: #{reverse.3} parent=12 // loop_header_branch
          %17 = sbr.rel (%p15) target = $region20
        $region17: #{reverse.3} parent=12 // loop_body
          %v21 = vld [vmem:[%s19] sm:%s12]
          %22 = vst [vmem:[%s20] sm:%s12] %v21
        $region18: #{reverse.3} parent=12 // loop_footer
          %s18 = sadd.s32 1, %s14
        $region19: #{reverse.3} parent=12 // loop_footer_branch
          %13 = sbr.rel target = $region15
        $region20: #{reverse.3} parent=12 // loop_exit
          _
      $region13: #{reverse.3} parent=4 // pred_fallthru
        _
    $region5: #{reverse.3} parent=1 // pred_fallthru
      _
    %37 = vnop
    %s39 = ssub.s32 4, 1
    %v40 = vld [vmem:[#allocation1] sm:%s39]
    %41 = vst [vmem:[#allocation0] sm:%s39] %v40
    %v42 = vld [vmem:[#allocation0] sm:$0xff]
    %43 = vperm.xlu0 %4, %v42
    %v44 = vpop.permute.xlu0 %43
    %45 = vst [vmem:[#allocation2] sm:$0xff] %v44
    %s47 = ssub.s32 4, 1
    %v48 = vld [vmem:[#allocation2] sm:%s47]
    %s50 = ssub.s32 4, 1
    %51 = vst [vmem:[#allocation3] sm:%s50] %v48
    // Predicated region
    $region32: #{reverse.3} parent=1 // pred_check
      _
    $region33: #{reverse.3} parent=1 // pred_check_branch
      %53 = sbr.rel (0) target = $region35
    $region34: #{reverse.3} parent=1 // pred_region
      // Predicated region
      $region36: #{reverse.3} parent=34 // pred_check
        _
      $region37: #{reverse.3} parent=34 // pred_check_branch
        %55 = sbr.rel target = $region39
      $region38: #{reverse.3} parent=34 // pred_region
        // Predicated region
        $region51: #{reverse.3} parent=38 // pred_check
          _
        $region52: #{reverse.3} parent=38 // pred_check_branch
          %71 = sbr.rel (0) target = $region54
        $region53: #{reverse.3} parent=38 // pred_region
          %s73 = ssub.s32 4, 1
          loop: start=0, step=1, limit=1
          $region55: #{reverse.3} parent=53 // loop_pre_header
            _
          $region56: #{reverse.3} parent=53 // loop_header
            %s75 = sphi 0, %s79
            %p76 = scmp.ge.s32.totalorder %s75, 1
            %s80 = sphi [#allocation3], [#allocation3]
            %s81 = sphi %s1, %s1
          $region57: #{reverse.3} parent=53 // loop_header_branch
            %78 = sbr.rel (%p76) target = $region61
          $region58: #{reverse.3} parent=53 // loop_body
            %v82 = vld [vmem:[%s80] sm:%s73]
            %83 = vst [vmem:[%s81] sm:%s73] %v82
          $region59: #{reverse.3} parent=53 // loop_footer
            %s79 = sadd.s32 1, %s75
          $region60: #{reverse.3} parent=53 // loop_footer_branch
            %74 = sbr.rel target = $region56
          $region61: #{reverse.3} parent=53 // loop_exit
            _
        $region54: #{reverse.3} parent=38 // pred_fallthru
          _
      $region39: #{reverse.3} parent=34 // pred_fallthru
        _
      // Predicated region
      $region40: #{reverse.3} parent=34 // pred_check
        _
      $region41: #{reverse.3} parent=34 // pred_check_branch
        %57 = sbr.rel (0) target = $region43
      $region42: #{reverse.3} parent=34 // pred_region
        %s59 = ssub.s32 4, 1
        loop: start=0, step=1, limit=1
        $region44: #{reverse.3} parent=42 // loop_pre_header
          _
        $region45: #{reverse.3} parent=42 // loop_header
          %s61 = sphi 0, %s65
          %p62 = scmp.ge.s32.totalorder %s61, 1
          %s66 = sphi [#allocation3], [#allocation3]
          %s67 = sphi %s1, %s1
        $region46: #{reverse.3} parent=42 // loop_header_branch
          %64 = sbr.rel (%p62) target = $region50
        $region47: #{reverse.3} parent=42 // loop_body
          %v68 = vld [vmem:[%s66] sm:%s59]
          %69 = vst [vmem:[%s67] sm:%s59] %v68
        $region48: #{reverse.3} parent=42 // loop_footer
          %s65 = sadd.s32 1, %s61
        $region49: #{reverse.3} parent=42 // loop_footer_branch
          %60 = sbr.rel target = $region45
        $region50: #{reverse.3} parent=42 // loop_exit
          _
      $region43: #{reverse.3} parent=34 // pred_fallthru
        _
    $region35: #{reverse.3} parent=1 // pred_fallthru
      _
    %84 = vnop

// kernel: reverse.4
$region0: #{reverse.4}
  %s0 = inlined_call_operand.vmem [shape: s32[2,7], index: 0, kind: input, shape index: {}]
  %s1 = inlined_call_operand.vmem [shape: s32[2,7], index: 1, kind: output, shape index: {}]
  %v2 = vlaneseq
  %v3 = vsub.s32 6, %v2
  %4 = vset.pattern.permute.xlu0 %v3
  $region1: #{reverse.4} parent=0
    #allocation0 [shape = 'u8[4096]{0}', space=vmem, size = 0x1000, scoped, tag = 'operand span for operand 0']
    #allocation1 [shape = 'u8[1024]{0}', space=vmem, size = 0x400, scoped, tag = 'packed  for operand 0']
    #allocation2 [shape = 'u8[4096]{0}', space=vmem, size = 0x1000, scoped, tag = 'operand span for operand 1']
    #allocation3 [shape = 'u8[1024]{0}', space=vmem, size = 0x400, scoped, tag = 'packed  for operand 1']
    // Predicated region
    $region2: #{reverse.4} parent=1 // pred_check
      _
    $region3: #{reverse.4} parent=1 // pred_check_branch
      %6 = sbr.rel (0) target = $region5
    $region4: #{reverse.4} parent=1 // pred_region
      // Predicated region
      $region6: #{reverse.4} parent=4 // pred_check
        _
      $region7: #{reverse.4} parent=4 // pred_check_branch
        %8 = sbr.rel target = $region9
      $region8: #{reverse.4} parent=4 // pred_region
        // Predicated region
        $region21: #{reverse.4} parent=8 // pred_check
          _
        $region22: #{reverse.4} parent=8 // pred_check_branch
          %24 = sbr.rel (0) target = $region24
        $region23: #{reverse.4} parent=8 // pred_region
          %s26 = ssub.s32 4, 1
          loop: start=0, step=1, limit=1
          $region25: #{reverse.4} parent=23 // loop_pre_header
            _
          $region26: #{reverse.4} parent=23 // loop_header
            %s28 = sphi 0, %s32
            %p29 = scmp.ge.s32.totalorder %s28, 1
            %s33 = sphi %s0, %s0
            %s34 = sphi [#allocation1], [#allocation1]
          $region27: #{reverse.4} parent=23 // loop_header_branch
            %31 = sbr.rel (%p29) target = $region31
          $region28: #{reverse.4} parent=23 // loop_body
            %v35 = vld [vmem:[%s33] sm:%s26]
            %36 = vst [vmem:[%s34] sm:%s26] %v35
          $region29: #{reverse.4} parent=23 // loop_footer
            %s32 = sadd.s32 1, %s28
          $region30: #{reverse.4} parent=23 // loop_footer_branch
            %27 = sbr.rel target = $region26
          $region31: #{reverse.4} parent=23 // loop_exit
            _
        $region24: #{reverse.4} parent=8 // pred_fallthru
          _
      $region9: #{reverse.4} parent=4 // pred_fallthru
        _
      // Predicated region
      $region10: #{reverse.4} parent=4 // pred_check
        _
      $region11: #{reverse.4} parent=4 // pred_check_branch
        %10 = sbr.rel (0) target = $region13
      $region12: #{reverse.4} parent=4 // pred_region
        %s12 = ssub.s32 4, 1
        loop: start=0, step=1, limit=1
        $region14: #{reverse.4} parent=12 // loop_pre_header
          _
        $region15: #{reverse.4} parent=12 // loop_header
          %s14 = sphi 0, %s18
          %p15 = scmp.ge.s32.totalorder %s14, 1
          %s19 = sphi %s0, %s0
          %s20 = sphi [#allocation1], [#allocation1]
        $region16: #{reverse.4} parent=12 // loop_header_branch
          %17 = sbr.rel (%p15) target = $region20
        $region17: #{reverse.4} parent=12 // loop_body
          %v21 = vld [vmem:[%s19] sm:%s12]
          %22 = vst [vmem:[%s20] sm:%s12] %v21
        $region18: #{reverse.4} parent=12 // loop_footer
          %s18 = sadd.s32 1, %s14
        $region19: #{reverse.4} parent=12 // loop_footer_branch
          %13 = sbr.rel target = $region15
        $region20: #{reverse.4} parent=12 // loop_exit
          _
      $region13: #{reverse.4} parent=4 // pred_fallthru
        _
    $region5: #{reverse.4} parent=1 // pred_fallthru
      _
    %37 = vnop
    %s39 = ssub.s32 4, 1
    %v40 = vld [vmem:[#allocation1] sm:%s39]
    %41 = vst [vmem:[#allocation0] sm:%s39] %v40
    %v42 = vld [vmem:[#allocation0] sm:$0xff]
    %43 = vperm.xlu0 %4, %v42
    %v44 = vpop.permute.xlu0 %43
    %45 = vst [vmem:[#allocation2] sm:$0xff] %v44
    %s47 = ssub.s32 4, 1
    %v48 = vld [vmem:[#allocation2] sm:%s47]
    %s50 = ssub.s32 4, 1
    %51 = vst [vmem:[#allocation3] sm:%s50] %v48
    // Predicated region
    $region32: #{reverse.4} parent=1 // pred_check
      _
    $region33: #{reverse.4} parent=1 // pred_check_branch
      %53 = sbr.rel (0) target = $region35
    $region34: #{reverse.4} parent=1 // pred_region
      // Predicated region
      $region36: #{reverse.4} parent=34 // pred_check
        _
      $region37: #{reverse.4} parent=34 // pred_check_branch
        %55 = sbr.rel target = $region39
      $region38: #{reverse.4} parent=34 // pred_region
        // Predicated region
        $region51: #{reverse.4} parent=38 // pred_check
          _
        $region52: #{reverse.4} parent=38 // pred_check_branch
          %71 = sbr.rel (0) target = $region54
        $region53: #{reverse.4} parent=38 // pred_region
          %s73 = ssub.s32 4, 1
          loop: start=0, step=1, limit=1
          $region55: #{reverse.4} parent=53 // loop_pre_header
            _
          $region56: #{reverse.4} parent=53 // loop_header
            %s75 = sphi 0, %s79
            %p76 = scmp.ge.s32.totalorder %s75, 1
            %s80 = sphi [#allocation3], [#allocation3]
            %s81 = sphi %s1, %s1
          $region57: #{reverse.4} parent=53 // loop_header_branch
            %78 = sbr.rel (%p76) target = $region61
          $region58: #{reverse.4} parent=53 // loop_body
            %v82 = vld [vmem:[%s80] sm:%s73]
            %83 = vst [vmem:[%s81] sm:%s73] %v82
          $region59: #{reverse.4} parent=53 // loop_footer
            %s79 = sadd.s32 1, %s75
          $region60: #{reverse.4} parent=53 // loop_footer_branch
            %74 = sbr.rel target = $region56
          $region61: #{reverse.4} parent=53 // loop_exit
            _
        $region54: #{reverse.4} parent=38 // pred_fallthru
          _
      $region39: #{reverse.4} parent=34 // pred_fallthru
        _
      // Predicated region
      $region40: #{reverse.4} parent=34 // pred_check
        _
      $region41: #{reverse.4} parent=34 // pred_check_branch
        %57 = sbr.rel (0) target = $region43
      $region42: #{reverse.4} parent=34 // pred_region
        %s59 = ssub.s32 4, 1
        loop: start=0, step=1, limit=1
        $region44: #{reverse.4} parent=42 // loop_pre_header
          _
        $region45: #{reverse.4} parent=42 // loop_header
          %s61 = sphi 0, %s65
          %p62 = scmp.ge.s32.totalorder %s61, 1
          %s66 = sphi [#allocation3], [#allocation3]
          %s67 = sphi %s1, %s1
        $region46: #{reverse.4} parent=42 // loop_header_branch
          %64 = sbr.rel (%p62) target = $region50
        $region47: #{reverse.4} parent=42 // loop_body
          %v68 = vld [vmem:[%s66] sm:%s59]
          %69 = vst [vmem:[%s67] sm:%s59] %v68
        $region48: #{reverse.4} parent=42 // loop_footer
          %s65 = sadd.s32 1, %s61
        $region49: #{reverse.4} parent=42 // loop_footer_branch
          %60 = sbr.rel target = $region45
        $region50: #{reverse.4} parent=42 // loop_exit
          _
      $region43: #{reverse.4} parent=34 // pred_fallthru
        _
    $region35: #{reverse.4} parent=1 // pred_fallthru
      _
    %84 = vnop

// kernel: mambamim_forward.7
$region0: #{mambamim_forward.7}
  #allocation0 [shape = 'u32[]', space=smem, size = 0x4, offset = 0x4, fixed_abs, tag = 'smem constant byte address 0x4 - core index']
  #allocation1 [shape = 'u32[72,128]{1,0:T(1,128)}', space=vmem, size = 0x9000, scoped, tag = 'internal scratch']
  %s0 = inlined_call_operand.vmem [shape: f32[16,32], index: 0, kind: input, shape index: {}]
  %s1 = inlined_call_operand.vmem [shape: f32[32,256], index: 1, kind: input, shape index: {}]
  %s2 = inlined_call_operand.vmem [shape: f32[16,256], index: 2, kind: input, shape index: {}]
  %s3 = inlined_call_operand.vmem [shape: f32[256,32], index: 3, kind: input, shape index: {}]
  %s4 = inlined_call_operand.vmem [shape: f32[16,32], index: 4, kind: output, shape index: {}]
  %s5 = sld [smem:[#allocation0]]
  $region26: #{mambamim_forward.7} parent=0
    _
  %s7 = ssub.s32 1, %s5
  %s8 = scalar_select 0, %s7, %s5
  // Predicated region
  $region2: #{mambamim_forward.7} parent=0 // pred_check
    _
  $region3: #{mambamim_forward.7} parent=0 // pred_check_branch
    %10 = sbr.rel (0) target = $region5
  $region4: #{mambamim_forward.7} parent=0 // pred_region
    _
  $region5: #{mambamim_forward.7} parent=0 // pred_fallthru
    _
  // Predicated region
  $region6: #{mambamim_forward.7} parent=0 // pred_check
    _
  $region7: #{mambamim_forward.7} parent=0 // pred_check_branch
    %12 = sbr.rel (0) target = $region9
  $region8: #{mambamim_forward.7} parent=0 // pred_region
    _
  $region9: #{mambamim_forward.7} parent=0 // pred_fallthru
    _
  // Predicated region
  $region10: #{mambamim_forward.7} parent=0 // pred_check
    _
  $region11: #{mambamim_forward.7} parent=0 // pred_check_branch
    %14 = sbr.rel (0) target = $region13
  $region12: #{mambamim_forward.7} parent=0 // pred_region
    _
  $region13: #{mambamim_forward.7} parent=0 // pred_fallthru
    _
  // Predicated region
  $region14: #{mambamim_forward.7} parent=0 // pred_check
    _
  $region15: #{mambamim_forward.7} parent=0 // pred_check_branch
    %16 = sbr.rel (0) target = $region17
  $region16: #{mambamim_forward.7} parent=0 // pred_region
    _
  $region17: #{mambamim_forward.7} parent=0 // pred_fallthru
    _
  %v17 = vld [vmem:[%s0] sm:$0xff]
  %v18 = vld [vmem:[%s0 + $0x8] sm:$0xff]
  %v19 = vld [vmem:[%s1] sm:$0xff]
  %v20 = vld [vmem:[%s1 + $0x8] sm:$0xff]
  %v21 = vld [vmem:[%s1 + $0x10] sm:$0xff]
  %v22 = vld [vmem:[%s1 + $0x18] sm:$0xff]
  %v23 = vld [vmem:[%s1 + $0x20] sm:$0xff]
  %v24 = vld [vmem:[%s1 + $0x28] sm:$0xff]
  %v25 = vld [vmem:[%s1 + $0x30] sm:$0xff]
  %v26 = vld [vmem:[%s1 + $0x38] sm:$0xff]
  %vm27 = vcmask 261120
  %v29 = vsel %vm27, %v17, 0
  %v32 = vsel %vm27, %v18, 0
  %34 = vmatpush.msra.mxu0 0.0
  %35 = vmatpush.msra.mxu0 0.0
  %36 = vmatpush.msra.mxu0 0.0
  %37 = vmatpush.msra.mxu0 0.0
  %38 = vmatpush.msra.mxu0 0.0
  %39 = vmatpush.msra.mxu0 0.0
  %40 = vmatpush.msra.mxu0 0.0
  %41 = vmatpush.msra.mxu0 0.0
  %42 = vmatpush.msra.mxu0 0.0
  %43 = vmatpush.msra.mxu0 0.0
  %44 = vmatpush.msra.mxu0 0.0
  %45 = vmatpush.msra.mxu0 0.0
  %46 = vmatpush.msra.mxu0 %v25
  %47 = vmatpush.msra.mxu0 %v23
  %48 = vmatpush.msra.mxu0 %v21
  %49 = vmatpush.msra.mxu0 %v19
  %50 = vmatmul.f32.gmra.mxu0 %v29
  %v51 = vpop.f32.mrf.mxu0
  %v52 = vadd.f32 0.0, %v51
  %53 = vmatmul.f32.gmra.mxu0 %v32
  %v54 = vpop.f32.mrf.mxu0
  %v55 = vadd.f32 0.0, %v54
  %56 = vdwg.mxu0
  %57 = vmatpush.msra.mxu0 0.0
  %58 = vmatpush.msra.mxu0 0.0
  %59 = vmatpush.msra.mxu0 0.0
  %60 = vmatpush.msra.mxu0 0.0
  %61 = vmatpush.msra.mxu0 0.0
  %62 = vmatpush.msra.mxu0 0.0
  %63 = vmatpush.msra.mxu0 0.0
  %64 = vmatpush.msra.mxu0 0.0
  %65 = vmatpush.msra.mxu0 0.0
  %66 = vmatpush.msra.mxu0 0.0
  %67 = vmatpush.msra.mxu0 0.0
  %68 = vmatpush.msra.mxu0 0.0
  %69 = vmatpush.msra.mxu0 %v26
  %70 = vmatpush.msra.mxu0 %v24
  %71 = vmatpush.msra.mxu0 %v22
  %72 = vmatpush.msra.mxu0 %v20
  %73 = vmatmul.f32.gmra.mxu0 %v29
  %v74 = vpop.f32.mrf.mxu0
  %v75 = vadd.f32 0.0, %v74
  %76 = vmatmul.f32.gmra.mxu0 %v32
  %v77 = vpop.f32.mrf.mxu0
  %v78 = vadd.f32 0.0, %v77
  %79 = vdwg.mxu0
  %v80 = vld [vmem:[%s2] sm:$0xff]
  %v81 = vld [vmem:[%s2 + $0x8] sm:$0xff]
  %v82 = vld [vmem:[%s2 + $0x10] sm:$0xff]
  %v83 = vld [vmem:[%s2 + $0x18] sm:$0xff]
  %v84 = vmul.f32 %v52, %v80
  %v85 = vmul.f32 %v75, %v81
  %v86 = vmul.f32 %v55, %v82
  %v87 = vmul.f32 %v78, %v83
  %v88 = vld [vmem:[%s3] sm:$0xff]
  %v89 = vld [vmem:[%s3 + $0x8] sm:$0xff]
  %v90 = vld [vmem:[%s3 + $0x10] sm:$0xff]
  %v91 = vld [vmem:[%s3 + $0x18] sm:$0xff]
  %v92 = vld [vmem:[%s3 + $0x20] sm:$0xff]
  %v93 = vld [vmem:[%s3 + $0x28] sm:$0xff]
  %v94 = vld [vmem:[%s3 + $0x30] sm:$0xff]
  %v95 = vld [vmem:[%s3 + $0x38] sm:$0xff]
  %v96 = vld [vmem:[%s3 + $0x40] sm:$0xff]
  %v97 = vld [vmem:[%s3 + $0x48] sm:$0xff]
  %v98 = vld [vmem:[%s3 + $0x50] sm:$0xff]
  %v99 = vld [vmem:[%s3 + $0x58] sm:$0xff]
  %v100 = vld [vmem:[%s3 + $0x60] sm:$0xff]
  %v101 = vld [vmem:[%s3 + $0x68] sm:$0xff]
  %v102 = vld [vmem:[%s3 + $0x70] sm:$0xff]
  %v103 = vld [vmem:[%s3 + $0x78] sm:$0xff]
  %v104 = vld [vmem:[%s3 + $0x80] sm:$0xff]
  %v105 = vld [vmem:[%s3 + $0x88] sm:$0xff]
  %v106 = vld [vmem:[%s3 + $0x90] sm:$0xff]
  %v107 = vld [vmem:[%s3 + $0x98] sm:$0xff]
  %v108 = vld [vmem:[%s3 + $0xa0] sm:$0xff]
  %v109 = vld [vmem:[%s3 + $0xa8] sm:$0xff]
  %v110 = vld [vmem:[%s3 + $0xb0] sm:$0xff]
  %v111 = vld [vmem:[%s3 + $0xb8] sm:$0xff]
  %v112 = vld [vmem:[%s3 + $0xc0] sm:$0xff]
  %v113 = vld [vmem:[%s3 + $0xc8] sm:$0xff]
  %v114 = vld [vmem:[%s3 + $0xd0] sm:$0xff]
  %v115 = vld [vmem:[%s3 + $0xd8] sm:$0xff]
  %v116 = vld [vmem:[%s3 + $0xe0] sm:$0xff]
  %v117 = vld [vmem:[%s3 + $0xe8] sm:$0xff]
  %v118 = vld [vmem:[%s3 + $0xf0] sm:$0xff]
  %v119 = vld [vmem:[%s3 + $0xf8] sm:$0xff]
  %120 = vmatpush.msra.mxu0 %v103
  %121 = vmatpush.msra.mxu0 %v102
  %122 = vmatpush.msra.mxu0 %v101
  %123 = vmatpush.msra.mxu0 %v100
  %124 = vmatpush.msra.mxu0 %v99
  %125 = vmatpush.msra.mxu0 %v98
  %126 = vmatpush.msra.mxu0 %v97
  %127 = vmatpush.msra.mxu0 %v96
  %128 = vmatpush.msra.mxu0 %v95
  %129 = vmatpush.msra.mxu0 %v94
  %130 = vmatpush.msra.mxu0 %v93
  %131 = vmatpush.msra.mxu0 %v92
  %132 = vmatpush.msra.mxu0 %v91
  %133 = vmatpush.msra.mxu0 %v90
  %134 = vmatpush.msra.mxu0 %v89
  %135 = vmatpush.msra.mxu0 %v88
  %136 = vmatmul.f32.gmra.mxu0 %v84
  %v137 = vpop.f32.mrf.mxu0
  %v138 = vadd.f32 0.0, %v137
  %139 = vmatmul.f32.gmra.mxu0 %v86
  %v140 = vpop.f32.mrf.mxu0
  %v141 = vadd.f32 0.0, %v140
  %142 = vdwg.mxu0
  %143 = vmatpush.msra.mxu0 %v119
  %144 = vmatpush.msra.mxu0 %v118
  %145 = vmatpush.msra.mxu0 %v117
  %146 = vmatpush.msra.mxu0 %v116
  %147 = vmatpush.msra.mxu0 %v115
  %148 = vmatpush.msra.mxu0 %v114
  %149 = vmatpush.msra.mxu0 %v113
  %150 = vmatpush.msra.mxu0 %v112
  %151 = vmatpush.msra.mxu0 %v111
  %152 = vmatpush.msra.mxu0 %v110
  %153 = vmatpush.msra.mxu0 %v109
  %154 = vmatpush.msra.mxu0 %v108
  %155 = vmatpush.msra.mxu0 %v107
  %156 = vmatpush.msra.mxu0 %v106
  %157 = vmatpush.msra.mxu0 %v105
  %158 = vmatpush.msra.mxu0 %v104
  %159 = vmatmul.f32.gmra.mxu0 %v85
  %v160 = vpop.f32.mrf.mxu0
  %v161 = vadd.f32 %v138, %v160
  %162 = vmatmul.f32.gmra.mxu0 %v87
  %v163 = vpop.f32.mrf.mxu0
  %v164 = vadd.f32 %v141, %v163
  %165 = vdwg.mxu0
  %166 = vst.msk [vmem:[%s4] sm:$0xff] %vm27, %v161
  %167 = vst.msk [vmem:[%s4 + $0x8] sm:$0xff] %vm27, %v164
  // Predicated region
  $region18: #{mambamim_forward.7} parent=0 // pred_check
    _
  $region19: #{mambamim_forward.7} parent=0 // pred_check_branch
    %169 = sbr.rel (0) target = $region21
  $region20: #{mambamim_forward.7} parent=0 // pred_region
    _
  $region21: #{mambamim_forward.7} parent=0 // pred_fallthru
    _
  // Predicated region
  $region22: #{mambamim_forward.7} parent=0 // pred_check
    _
  $region23: #{mambamim_forward.7} parent=0 // pred_check_branch
    %171 = sbr.rel (0) target = $region25
  $region24: #{mambamim_forward.7} parent=0 // pred_region
    _
  $region25: #{mambamim_forward.7} parent=0 // pred_fallthru
    _

// kernel: mambamim_forward.9
$region0: #{mambamim_forward.9}
  #allocation0 [shape = 'u32[]', space=smem, size = 0x4, offset = 0x4, fixed_abs, tag = 'smem constant byte address 0x4 - core index']
  #allocation1 [shape = 'u32[72,128]{1,0:T(1,128)}', space=vmem, size = 0x9000, scoped, tag = 'internal scratch']
  %s0 = inlined_call_operand.vmem [shape: f32[16,32], index: 0, kind: input, shape index: {}]
  %s1 = inlined_call_operand.vmem [shape: f32[16,32], index: 1, kind: input, shape index: {}]
  %s2 = inlined_call_operand.vmem [shape: f32[16,1], index: 2, kind: input, shape index: {}]
  %s3 = inlined_call_operand.vmem [shape: bf16[32,24], index: 3, kind: input, shape index: {}]
  %s4 = inlined_call_operand.vmem [shape: f32[1,24], index: 4, kind: input, shape index: {}]
  %s5 = inlined_call_operand.vmem [shape: f32[16,768], index: 5, kind: input, shape index: {}]
  %s6 = inlined_call_operand.vmem [shape: bf16[24,768], index: 6, kind: input, shape index: {}]
  %s7 = inlined_call_operand.vmem [shape: f32[1,768], index: 7, kind: input, shape index: {}]
  %s8 = inlined_call_operand.vmem [shape: bf16[768,384], index: 8, kind: input, shape index: {}]
  %s9 = inlined_call_operand.vmem [shape: f32[1,384], index: 9, kind: input, shape index: {}]
  %s10 = inlined_call_operand.vmem [shape: bf16[384,192], index: 10, kind: input, shape index: {}]
  %s11 = inlined_call_operand.vmem [shape: f32[1,192], index: 11, kind: input, shape index: {}]
  %s12 = inlined_call_operand.vmem [shape: bf16[192,64], index: 12, kind: input, shape index: {}]
  %s13 = inlined_call_operand.vmem [shape: f32[1,64], index: 13, kind: input, shape index: {}]
  %s14 = inlined_call_operand.vmem [shape: f32[16,512], index: 14, kind: input, shape index: {}]
  %s15 = inlined_call_operand.hbm [shape: f32[1,1], index: 15, kind: output, shape index: {}]
  %s16 = sld [smem:[#allocation0]]
  $region70: #{mambamim_forward.9} parent=0
    _
  %s18 = ssub.s32 1, %s16
  %s19 = scalar_select 0, %s18, %s16
  $region1: #{mambamim_forward.9} parent=0
    #allocation2 [shape = 'u8[512]{0}', space=vmem, size = 0x400, scoped, tag = 'output window, operand 0, single buffered']
    #allocation3 [shape = 's32[1]{0}', space=sflag, size = 0x4, scoped, tag = 'scoped memory for mambamim_forward.9']
    %20 = vsyncpa [#allocation3], 0
    // Predicated region
    $region2: #{mambamim_forward.9} parent=1 // pred_check
      _
    $region3: #{mambamim_forward.9} parent=1 // pred_check_branch
      %22 = sbr.rel (0) target = $region5
    $region4: #{mambamim_forward.9} parent=1 // pred_region
      _
    $region5: #{mambamim_forward.9} parent=1 // pred_fallthru
      _
    // Predicated region
    $region6: #{mambamim_forward.9} parent=1 // pred_check
      _
    $region7: #{mambamim_forward.9} parent=1 // pred_check_branch
      %24 = sbr.rel (0) target = $region9
    $region8: #{mambamim_forward.9} parent=1 // pred_region
      _
    $region9: #{mambamim_forward.9} parent=1 // pred_fallthru
      _
    // Predicated region
    $region10: #{mambamim_forward.9} parent=1 // pred_check
      _
    $region11: #{mambamim_forward.9} parent=1 // pred_check_branch
      %26 = sbr.rel (0) target = $region13
    $region12: #{mambamim_forward.9} parent=1 // pred_region
      _
    $region13: #{mambamim_forward.9} parent=1 // pred_fallthru
      _
    // Predicated region
    $region14: #{mambamim_forward.9} parent=1 // pred_check
      _
    $region15: #{mambamim_forward.9} parent=1 // pred_check_branch
      %28 = sbr.rel (0) target = $region17
    $region16: #{mambamim_forward.9} parent=1 // pred_region
      _
    $region17: #{mambamim_forward.9} parent=1 // pred_fallthru
      _
    // Predicated region
    $region18: #{mambamim_forward.9} parent=1 // pred_check
      _
    $region19: #{mambamim_forward.9} parent=1 // pred_check_branch
      %30 = sbr.rel (0) target = $region21
    $region20: #{mambamim_forward.9} parent=1 // pred_region
      _
    $region21: #{mambamim_forward.9} parent=1 // pred_fallthru
      _
    // Predicated region
    $region22: #{mambamim_forward.9} parent=1 // pred_check
      _
    $region23: #{mambamim_forward.9} parent=1 // pred_check_branch
      %32 = sbr.rel (0) target = $region25
    $region24: #{mambamim_forward.9} parent=1 // pred_region
      _
    $region25: #{mambamim_forward.9} parent=1 // pred_fallthru
      _
    // Predicated region
    $region26: #{mambamim_forward.9} parent=1 // pred_check
      _
    $region27: #{mambamim_forward.9} parent=1 // pred_check_branch
      %34 = sbr.rel (0) target = $region29
    $region28: #{mambamim_forward.9} parent=1 // pred_region
      _
    $region29: #{mambamim_forward.9} parent=1 // pred_fallthru
      _
    // Predicated region
    $region30: #{mambamim_forward.9} parent=1 // pred_check
      _
    $region31: #{mambamim_forward.9} parent=1 // pred_check_branch
      %36 = sbr.rel (0) target = $region33
    $region32: #{mambamim_forward.9} parent=1 // pred_region
      _
    $region33: #{mambamim_forward.9} parent=1 // pred_fallthru
      _
    // Predicated region
    $region34: #{mambamim_forward.9} parent=1 // pred_check
      _
    $region35: #{mambamim_forward.9} parent=1 // pred_check_branch
      %38 = sbr.rel (0) target = $region37
    $region36: #{mambamim_forward.9} parent=1 // pred_region
      _
    $region37: #{mambamim_forward.9} parent=1 // pred_fallthru
      _
    // Predicated region
    $region38: #{mambamim_forward.9} parent=1 // pred_check
      _
    $region39: #{mambamim_forward.9} parent=1 // pred_check_branch
      %40 = sbr.rel (0) target = $region41
    $region40: #{mambamim_forward.9} parent=1 // pred_region
      _
    $region41: #{mambamim_forward.9} parent=1 // pred_fallthru
      _
    // Predicated region
    $region42: #{mambamim_forward.9} parent=1 // pred_check
      _
    $region43: #{mambamim_forward.9} parent=1 // pred_check_branch
      %42 = sbr.rel (0) target = $region45
    $region44: #{mambamim_forward.9} parent=1 // pred_region
      _
    $region45: #{mambamim_forward.9} parent=1 // pred_fallthru
      _
    // Predicated region
    $region46: #{mambamim_forward.9} parent=1 // pred_check
      _
    $region47: #{mambamim_forward.9} parent=1 // pred_check_branch
      %44 = sbr.rel (0) target = $region49
    $region48: #{mambamim_forward.9} parent=1 // pred_region
      _
    $region49: #{mambamim_forward.9} parent=1 // pred_fallthru
      _
    // Predicated region
    $region50: #{mambamim_forward.9} parent=1 // pred_check
      _
    $region51: #{mambamim_forward.9} parent=1 // pred_check_branch
      %46 = sbr.rel (0) target = $region53
    $region52: #{mambamim_forward.9} parent=1 // pred_region
      _
    $region53: #{mambamim_forward.9} parent=1 // pred_fallthru
      _
    // Predicated region
    $region54: #{mambamim_forward.9} parent=1 // pred_check
      _
    $region55: #{mambamim_forward.9} parent=1 // pred_check_branch
      %48 = sbr.rel (0) target = $region57
    $region56: #{mambamim_forward.9} parent=1 // pred_region
      _
    $region57: #{mambamim_forward.9} parent=1 // pred_fallthru
      _
    // Predicated region
    $region58: #{mambamim_forward.9} parent=1 // pred_check
      _
    $region59: #{mambamim_forward.9} parent=1 // pred_check_branch
      %50 = sbr.rel (0) target = $region61
    $region60: #{mambamim_forward.9} parent=1 // pred_region
      _
    $region61: #{mambamim_forward.9} parent=1 // pred_fallthru
      _
    %v52 = vld [vmem:[%s2] sm:$0xff]
    %v53 = vld [vmem:[%s2 + $0x8] sm:$0xff]
    %vm54 = vcmp.ne.f32.partialorder %v52, 0.0
    %vm55 = vcmp.ne.f32.partialorder %v53, 0.0
    %v56 = vld [vmem:[%s0] sm:$0xff]
    %v57 = vld [vmem:[%s0 + $0x8] sm:$0xff]
    %v58 = vld [vmem:[%s1] sm:$0xff]
    %v59 = vld [vmem:[%s1 + $0x8] sm:$0xff]
    %v60 = vsel %vm54, 1, 0
    %v61 = vsel %vm55, 1, 0
    %62 = vset.pattern.permute.xlu0 0
    %63 = vperm.xlu0 %62, %v60
    %v64 = vpop.permute.xlu0 %63
    %65 = vset.pattern.permute.xlu0 0
    %66 = vperm.xlu0 %65, %v61
    %v67 = vpop.permute.xlu0 %66
    %vm68 = vcmp.eq.s32.totalorder %v64, 1
    %vm69 = vcmp.eq.s32.totalorder %v67, 1
    %v70 = vsel %vm68, %v56, %v58
    %v71 = vsel %vm69, %v57, %v59
    %v72 = vpack.c.bf16 %v71, %v70
    %v73 = vld [vmem:[%s3] sm:$0xf]
    %v74 = vld [vmem:[%s3 + $0x4] sm:$0xf]
    %v75 = vld [vmem:[%s3 + $0x8] sm:$0xf]
    %v76 = vld [vmem:[%s3 + $0xc] sm:$0xf]
    %v77 = vld [vmem:[%s4] sm:$0x1]
    %v79 = vperm.slane %v77, 0
    %v85 = vunpack.c.l.b16 %v73
    %v86 = vunpack.c.l.b16 %v74
    %v87 = vunpack.c.l.b16 %v75
    %v88 = vunpack.c.l.b16 %v76
    %v89 = vpack.c.b16 %v86, %v85
    %v90 = vpack.c.b16 %v88, %v87
    %vm93 = vcmask 261120
    %v95 = vsel %vm93, %v72, 0
    %97 = vmatpush.bf16.msra.mxu0 0
    %98 = vmatpush.bf16.msra.mxu0 0
    %99 = vmatpush.bf16.msra.mxu0 0
    %100 = vmatpush.bf16.msra.mxu0 0
    %101 = vmatpush.bf16.msra.mxu0 0
    %102 = vmatpush.bf16.msra.mxu0 0
    %103 = vmatpush.bf16.msra.mxu0 %v90
    %104 = vmatpush.bf16.msra.mxu0 %v89
    %105 = vmatmul.bf16.gmra.mxu0 %v95
    %v106 = vpop.f32.mrf.mxu0
    %v107 = vadd.f32 %v79, %v106
    %v108 = vpop.f32.mrf.mxu0
    %v109 = vadd.f32 %v79, %v108
    %110 = vdwg.mxu0
    %v111 = vpack.c.bf16 %v109, %v107
    %v112 = vld [vmem:[%s6] sm:$0xff]
    %v113 = vld [vmem:[%s6 + $0x8] sm:$0xff]
    %v114 = vld [vmem:[%s6 + $0x10] sm:$0xff]
    %v115 = vld [vmem:[%s6 + $0x18] sm:$0xff]
    %v116 = vld [vmem:[%s6 + $0x20] sm:$0xff]
    %v117 = vld [vmem:[%s6 + $0x28] sm:$0xff]
    %v118 = vld [vmem:[%s6 + $0x30] sm:$0xff]
    %v119 = vld [vmem:[%s6 + $0x38] sm:$0xff]
    %v120 = vld [vmem:[%s6 + $0x40] sm:$0xff]
    %v121 = vld [vmem:[%s7] sm:$0x3f]
    %v123 = vperm.slane %v121, 0
    %v124 = vperm.slane %v121, 1
    %v125 = vperm.slane %v121, 2
    %v126 = vperm.slane %v121, 3
    %v127 = vperm.slane %v121, 4
    %v128 = vperm.slane %v121, 5
    %v144 = vunpack.c.l.b16 %v112
    %v145 = vunpack.c.h.b16 %v112
    %v146 = vunpack.c.l.b16 %v113
    %v147 = vunpack.c.h.b16 %v113
    %v148 = vunpack.c.l.b16 %v114
    %v149 = vunpack.c.h.b16 %v114
    %v150 = vunpack.c.l.b16 %v115
    %v151 = vunpack.c.h.b16 %v115
    %v152 = vunpack.c.l.b16 %v116
    %v153 = vunpack.c.h.b16 %v116
    %v154 = vunpack.c.l.b16 %v117
    %v155 = vunpack.c.h.b16 %v117
    %v156 = vunpack.c.l.b16 %v118
    %v157 = vunpack.c.h.b16 %v118
    %v158 = vunpack.c.l.b16 %v119
    %v159 = vunpack.c.h.b16 %v119
    %v160 = vunpack.c.l.b16 %v120
    %v161 = vunpack.c.h.b16 %v120
    %v162 = vpack.c.b16 %v150, %v144
    %v163 = vpack.c.b16 %v151, %v145
    %v164 = vpack.c.b16 %v152, %v146
    %v165 = vpack.c.b16 %v153, %v147
    %v166 = vpack.c.b16 %v154, %v148
    %v167 = vpack.c.b16 %v155, %v149
    %v168 = vpack.c.b16 %v156, %v156
    %v169 = vpack.c.b16 %v157, %v157
    %v170 = vpack.c.b16 %v158, %v158
    %v171 = vpack.c.b16 %v159, %v159
    %v172 = vpack.c.b16 %v160, %v160
    %v173 = vpack.c.b16 %v161, %v161
    %vm180 = vcmask 195584
    %v182 = vsel %vm180, %v111, 0
    %vm184 = vcmask 1043456
    %v186 = vsel %vm184, %v168, 0
    %v189 = vsel %vm184, %v169, 0
    %v192 = vsel %vm184, %v170, 0
    %v195 = vsel %vm184, %v171, 0
    %v198 = vsel %vm184, %v172, 0
    %v201 = vsel %vm184, %v173, 0
    %203 = vmatpush.bf16.msra.mxu0 0
    %204 = vmatpush.bf16.msra.mxu0 0
    %205 = vmatpush.bf16.msra.mxu0 0
    %206 = vmatpush.bf16.msra.mxu0 0
    %207 = vmatpush.bf16.msra.mxu0 0
    %208 = vmatpush.bf16.msra.mxu0 0
    %209 = vmatpush.bf16.msra.mxu0 %v186
    %210 = vmatpush.bf16.msra.mxu0 %v162
    %211 = vmatmul.bf16.gmra.mxu0 %v182
    %v212 = vpop.f32.mrf.mxu0
    %v213 = vadd.f32 %v123, %v212
    %v214 = vpop.f32.mrf.mxu0
    %v215 = vadd.f32 %v123, %v214
    %216 = vdwg.mxu0
    %217 = vmatpush.bf16.msra.mxu0 0
    %218 = vmatpush.bf16.msra.mxu0 0
    %219 = vmatpush.bf16.msra.mxu0 0
    %220 = vmatpush.bf16.msra.mxu0 0
    %221 = vmatpush.bf16.msra.mxu0 0
    %222 = vmatpush.bf16.msra.mxu0 0
    %223 = vmatpush.bf16.msra.mxu0 %v189
    %224 = vmatpush.bf16.msra.mxu0 %v163
    %225 = vmatmul.bf16.gmra.mxu0 %v182
    %v226 = vpop.f32.mrf.mxu0
    %v227 = vadd.f32 %v124, %v226
    %v228 = vpop.f32.mrf.mxu0
    %v229 = vadd.f32 %v124, %v228
    %230 = vdwg.mxu0
    %231 = vmatpush.bf16.msra.mxu0 0
    %232 = vmatpush.bf16.msra.mxu0 0
    %233 = vmatpush.bf16.msra.mxu0 0
    %234 = vmatpush.bf16.msra.mxu0 0
    %235 = vmatpush.bf16.msra.mxu0 0
    %236 = vmatpush.bf16.msra.mxu0 0
    %237 = vmatpush.bf16.msra.mxu0 %v192
    %238 = vmatpush.bf16.msra.mxu0 %v164
    %239 = vmatmul.bf16.gmra.mxu0 %v182
    %v240 = vpop.f32.mrf.mxu0
    %v241 = vadd.f32 %v125, %v240
    %v242 = vpop.f32.mrf.mxu0
    %v243 = vadd.f32 %v125, %v242
    %244 = vdwg.mxu0
    %245 = vmatpush.bf16.msra.mxu0 0
    %246 = vmatpush.bf16.msra.mxu0 0
    %247 = vmatpush.bf16.msra.mxu0 0
    %248 = vmatpush.bf16.msra.mxu0 0
    %249 = vmatpush.bf16.msra.mxu0 0
    %250 = vmatpush.bf16.msra.mxu0 0
    %251 = vmatpush.bf16.msra.mxu0 %v195
    %252 = vmatpush.bf16.msra.mxu0 %v165
    %253 = vmatmul.bf16.gmra.mxu0 %v182
    %v254 = vpop.f32.mrf.mxu0
    %v255 = vadd.f32 %v126, %v254
    %v256 = vpop.f32.mrf.mxu0
    %v257 = vadd.f32 %v126, %v256
    %258 = vdwg.mxu0
    %259 = vmatpush.bf16.msra.mxu0 0
    %260 = vmatpush.bf16.msra.mxu0 0
    %261 = vmatpush.bf16.msra.mxu0 0
    %262 = vmatpush.bf16.msra.mxu0 0
    %263 = vmatpush.bf16.msra.mxu0 0
    %264 = vmatpush.bf16.msra.mxu0 0
    %265 = vmatpush.bf16.msra.mxu0 %v198
    %266 = vmatpush.bf16.msra.mxu0 %v166
    %267 = vmatmul.bf16.gmra.mxu0 %v182
    %v268 = vpop.f32.mrf.mxu0
    %v269 = vadd.f32 %v127, %v268
    %v270 = vpop.f32.mrf.mxu0
    %v271 = vadd.f32 %v127, %v270
    %272 = vdwg.mxu0
    %273 = vmatpush.bf16.msra.mxu0 0
    %274 = vmatpush.bf16.msra.mxu0 0
    %275 = vmatpush.bf16.msra.mxu0 0
    %276 = vmatpush.bf16.msra.mxu0 0
    %277 = vmatpush.bf16.msra.mxu0 0
    %278 = vmatpush.bf16.msra.mxu0 0
    %279 = vmatpush.bf16.msra.mxu0 %v201
    %280 = vmatpush.bf16.msra.mxu0 %v167
    %281 = vmatmul.bf16.gmra.mxu0 %v182
    %v282 = vpop.f32.mrf.mxu0
    %v283 = vadd.f32 %v128, %v282
    %v284 = vpop.f32.mrf.mxu0
    %v285 = vadd.f32 %v128, %v284
    %286 = vdwg.mxu0
    %v287 = vmax.f32 %v213, 0.0
    %v288 = vmax.f32 %v227, 0.0
    %v289 = vmax.f32 %v241, 0.0
    %v290 = vmax.f32 %v255, 0.0
    %v291 = vmax.f32 %v269, 0.0
    %v292 = vmax.f32 %v283, 0.0
    %v293 = vmax.f32 %v215, 0.0
    %v294 = vmax.f32 %v229, 0.0
    %v295 = vmax.f32 %v243, 0.0
    %v296 = vmax.f32 %v257, 0.0
    %v297 = vmax.f32 %v271, 0.0
    %v298 = vmax.f32 %v285, 0.0
    %v299 = vld [vmem:[%s5] sm:$0xff]
    %v300 = vld [vmem:[%s5 + $0x8] sm:$0xff]
    %v301 = vld [vmem:[%s5 + $0x10] sm:$0xff]
    %v302 = vld [vmem:[%s5 + $0x18] sm:$0xff]
    %v303 = vld [vmem:[%s5 + $0x20] sm:$0xff]
    %v304 = vld [vmem:[%s5 + $0x28] sm:$0xff]
    %v305 = vld [vmem:[%s5 + $0x30] sm:$0xff]
    %v306 = vld [vmem:[%s5 + $0x38] sm:$0xff]
    %v307 = vld [vmem:[%s5 + $0x40] sm:$0xff]
    %v308 = vld [vmem:[%s5 + $0x48] sm:$0xff]
    %v309 = vld [vmem:[%s5 + $0x50] sm:$0xff]
    %v310 = vld [vmem:[%s5 + $0x58] sm:$0xff]
    %v311 = vadd.f32 %v287, %v299
    %v312 = vadd.f32 %v288, %v300
    %v313 = vadd.f32 %v289, %v301
    %v314 = vadd.f32 %v290, %v302
    %v315 = vadd.f32 %v291, %v303
    %v316 = vadd.f32 %v292, %v304
    %v317 = vadd.f32 %v293, %v305
    %v318 = vadd.f32 %v294, %v306
    %v319 = vadd.f32 %v295, %v307
    %v320 = vadd.f32 %v296, %v308
    %v321 = vadd.f32 %v297, %v309
    %v322 = vadd.f32 %v298, %v310
    %v323 = vpack.c.bf16 %v317, %v311
    %v324 = vpack.c.bf16 %v318, %v312
    %v325 = vpack.c.bf16 %v319, %v313
    %v326 = vpack.c.bf16 %v320, %v314
    %v327 = vpack.c.bf16 %v321, %v315
    %v328 = vpack.c.bf16 %v322, %v316
    %v329 = vld [vmem:[%s8] sm:$0xff]
    %v330 = vld [vmem:[%s8 + $0x8] sm:$0xf]
    %v331 = vld [vmem:[%s8 + $0xc] sm:$0xff]
    %v332 = vld [vmem:[%s8 + $0x14] sm:$0xf]
    %v333 = vld [vmem:[%s8 + $0x18] sm:$0xff]
    %v334 = vld [vmem:[%s8 + $0x20] sm:$0xf]
    %v335 = vld [vmem:[%s8 + $0x24] sm:$0xff]
    %v336 = vld [vmem:[%s8 + $0x2c] sm:$0xf]
    %v337 = vld [vmem:[%s8 + $0x30] sm:$0xff]
    %v338 = vld [vmem:[%s8 + $0x38] sm:$0xf]
    %v339 = vld [vmem:[%s8 + $0x3c] sm:$0xff]
    %v340 = vld [vmem:[%s8 + $0x44] sm:$0xf]
    %v341 = vld [vmem:[%s8 + $0x48] sm:$0xff]
    %v342 = vld [vmem:[%s8 + $0x50] sm:$0xf]
    %v343 = vld [vmem:[%s8 + $0x54] sm:$0xff]
    %v344 = vld [vmem:[%s8 + $0x5c] sm:$0xf]
    %v345 = vld [vmem:[%s8 + $0x60] sm:$0xff]
    %v346 = vld [vmem:[%s8 + $0x68] sm:$0xf]
    %v347 = vld [vmem:[%s8 + $0x6c] sm:$0xff]
    %v348 = vld [vmem:[%s8 + $0x74] sm:$0xf]
    %v349 = vld [vmem:[%s8 + $0x78] sm:$0xff]
    %v350 = vld [vmem:[%s8 + $0x80] sm:$0xf]
    %v351 = vld [vmem:[%s8 + $0x84] sm:$0xff]
    %v352 = vld [vmem:[%s8 + $0x8c] sm:$0xf]
    %v353 = vld [vmem:[%s8 + $0x90] sm:$0xff]
    %v354 = vld [vmem:[%s8 + $0x98] sm:$0xf]
    %v355 = vld [vmem:[%s8 + $0x9c] sm:$0xff]
    %v356 = vld [vmem:[%s8 + $0xa4] sm:$0xf]
    %v357 = vld [vmem:[%s8 + $0xa8] sm:$0xff]
    %v358 = vld [vmem:[%s8 + $0xb0] sm:$0xf]
    %v359 = vld [vmem:[%s8 + $0xb4] sm:$0xff]
    %v360 = vld [vmem:[%s8 + $0xbc] sm:$0xf]
    %v361 = vld [vmem:[%s8 + $0xc0] sm:$0xff]
    %v362 = vld [vmem:[%s8 + $0xc8] sm:$0xf]
    %v363 = vld [vmem:[%s8 + $0xcc] sm:$0xff]
    %v364 = vld [vmem:[%s8 + $0xd4] sm:$0xf]
    %v365 = vld [vmem:[%s8 + $0xd8] sm:$0xff]
    %v366 = vld [vmem:[%s8 + $0xe0] sm:$0xf]
    %v367 = vld [vmem:[%s8 + $0xe4] sm:$0xff]
    %v368 = vld [vmem:[%s8 + $0xec] sm:$0xf]
    %v369 = vld [vmem:[%s8 + $0xf0] sm:$0xff]
    %v370 = vld [vmem:[%s8 + $0xf8] sm:$0xf]
    %v371 = vld [vmem:[%s8 + $0xfc] sm:$0xff]
    %v372 = vld [vmem:[%s8 + $0x104] sm:$0xf]
    %v373 = vld [vmem:[%s8 + $0x108] sm:$0xff]
    %v374 = vld [vmem:[%s8 + $0x110] sm:$0xf]
    %v375 = vld [vmem:[%s8 + $0x114] sm:$0xff]
    %v376 = vld [vmem:[%s8 + $0x11c] sm:$0xf]
    %v377 = vld [vmem:[%s8 + $0x120] sm:$0xff]
    %v378 = vld [vmem:[%s8 + $0x128] sm:$0xf]
    %v379 = vld [vmem:[%s8 + $0x12c] sm:$0xff]
    %v380 = vld [vmem:[%s8 + $0x134] sm:$0xf]
    %v381 = vld [vmem:[%s8 + $0x138] sm:$0xff]
    %v382 = vld [vmem:[%s8 + $0x140] sm:$0xf]
    %v383 = vld [vmem:[%s8 + $0x144] sm:$0xff]
    %v384 = vld [vmem:[%s8 + $0x14c] sm:$0xf]
    %v385 = vld [vmem:[%s8 + $0x150] sm:$0xff]
    %v386 = vld [vmem:[%s8 + $0x158] sm:$0xf]
    %v387 = vld [vmem:[%s8 + $0x15c] sm:$0xff]
    %v388 = vld [vmem:[%s8 + $0x164] sm:$0xf]
    %v389 = vld [vmem:[%s8 + $0x168] sm:$0xff]
    %v390 = vld [vmem:[%s8 + $0x170] sm:$0xf]
    %v391 = vld [vmem:[%s8 + $0x174] sm:$0xff]
    %v392 = vld [vmem:[%s8 + $0x17c] sm:$0xf]
    %v393 = vld [vmem:[%s8 + $0x180] sm:$0xff]
    %v394 = vld [vmem:[%s8 + $0x188] sm:$0xf]
    %v395 = vld [vmem:[%s8 + $0x18c] sm:$0xff]
    %v396 = vld [vmem:[%s8 + $0x194] sm:$0xf]
    %v397 = vld [vmem:[%s8 + $0x198] sm:$0xff]
    %v398 = vld [vmem:[%s8 + $0x1a0] sm:$0xf]
    %v399 = vld [vmem:[%s8 + $0x1a4] sm:$0xff]
    %v400 = vld [vmem:[%s8 + $0x1ac] sm:$0xf]
    %v401 = vld [vmem:[%s8 + $0x1b0] sm:$0xff]
    %v402 = vld [vmem:[%s8 + $0x1b8] sm:$0xf]
    %v403 = vld [vmem:[%s8 + $0x1bc] sm:$0xff]
    %v404 = vld [vmem:[%s8 + $0x1c4] sm:$0xf]
    %v405 = vld [vmem:[%s8 + $0x1c8] sm:$0xff]
    %v406 = vld [vmem:[%s8 + $0x1d0] sm:$0xf]
    %v407 = vld [vmem:[%s8 + $0x1d4] sm:$0xff]
    %v408 = vld [vmem:[%s8 + $0x1dc] sm:$0xf]
    %v409 = vld [vmem:[%s8 + $0x1e0] sm:$0xff]
    %v410 = vld [vmem:[%s8 + $0x1e8] sm:$0xf]
    %v411 = vld [vmem:[%s8 + $0x1ec] sm:$0xff]
    %v412 = vld [vmem:[%s8 + $0x1f4] sm:$0xf]
    %v413 = vld [vmem:[%s8 + $0x1f8] sm:$0xff]
    %v414 = vld [vmem:[%s8 + $0x200] sm:$0xf]
    %v415 = vld [vmem:[%s8 + $0x204] sm:$0xff]
    %v416 = vld [vmem:[%s8 + $0x20c] sm:$0xf]
    %v417 = vld [vmem:[%s8 + $0x210] sm:$0xff]
    %v418 = vld [vmem:[%s8 + $0x218] sm:$0xf]
    %v419 = vld [vmem:[%s8 + $0x21c] sm:$0xff]
    %v420 = vld [vmem:[%s8 + $0x224] sm:$0xf]
    %v421 = vld [vmem:[%s8 + $0x228] sm:$0xff]
    %v422 = vld [vmem:[%s8 + $0x230] sm:$0xf]
    %v423 = vld [vmem:[%s8 + $0x234] sm:$0xff]
    %v424 = vld [vmem:[%s8 + $0x23c] sm:$0xf]
    %v425 = vld [vmem:[%s8 + $0x240] sm:$0xff]
    %v426 = vld [vmem:[%s8 + $0x248] sm:$0xf]
    %v427 = vld [vmem:[%s8 + $0x24c] sm:$0xff]
    %v428 = vld [vmem:[%s8 + $0x254] sm:$0xf]
    %v429 = vld [vmem:[%s8 + $0x258] sm:$0xff]
    %v430 = vld [vmem:[%s8 + $0x260] sm:$0xf]
    %v431 = vld [vmem:[%s8 + $0x264] sm:$0xff]
    %v432 = vld [vmem:[%s8 + $0x26c] sm:$0xf]
    %v433 = vld [vmem:[%s8 + $0x270] sm:$0xff]
    %v434 = vld [vmem:[%s8 + $0x278] sm:$0xf]
    %v435 = vld [vmem:[%s8 + $0x27c] sm:$0xff]
    %v436 = vld [vmem:[%s8 + $0x284] sm:$0xf]
    %v437 = vld [vmem:[%s8 + $0x288] sm:$0xff]
    %v438 = vld [vmem:[%s8 + $0x290] sm:$0xf]
    %v439 = vld [vmem:[%s8 + $0x294] sm:$0xff]
    %v440 = vld [vmem:[%s8 + $0x29c] sm:$0xf]
    %v441 = vld [vmem:[%s8 + $0x2a0] sm:$0xff]
    %v442 = vld [vmem:[%s8 + $0x2a8] sm:$0xf]
    %v443 = vld [vmem:[%s8 + $0x2ac] sm:$0xff]
    %v444 = vld [vmem:[%s8 + $0x2b4] sm:$0xf]
    %v445 = vld [vmem:[%s8 + $0x2b8] sm:$0xff]
    %v446 = vld [vmem:[%s8 + $0x2c0] sm:$0xf]
    %v447 = vld [vmem:[%s8 + $0x2c4] sm:$0xff]
    %v448 = vld [vmem:[%s8 + $0x2cc] sm:$0xf]
    %v449 = vld [vmem:[%s8 + $0x2d0] sm:$0xff]
    %v450 = vld [vmem:[%s8 + $0x2d8] sm:$0xf]
    %v451 = vld [vmem:[%s8 + $0x2dc] sm:$0xff]
    %v452 = vld [vmem:[%s8 + $0x2e4] sm:$0xf]
    %v453 = vld [vmem:[%s8 + $0x2e8] sm:$0xff]
    %v454 = vld [vmem:[%s8 + $0x2f0] sm:$0xf]
    %v455 = vld [vmem:[%s8 + $0x2f4] sm:$0xff]
    %v456 = vld [vmem:[%s8 + $0x2fc] sm:$0xf]
    %v457 = vld [vmem:[%s8 + $0x300] sm:$0xff]
    %v458 = vld [vmem:[%s8 + $0x308] sm:$0xf]
    %v459 = vld [vmem:[%s8 + $0x30c] sm:$0xff]
    %v460 = vld [vmem:[%s8 + $0x314] sm:$0xf]
    %v461 = vld [vmem:[%s8 + $0x318] sm:$0xff]
    %v462 = vld [vmem:[%s8 + $0x320] sm:$0xf]
    %v463 = vld [vmem:[%s8 + $0x324] sm:$0xff]
    %v464 = vld [vmem:[%s8 + $0x32c] sm:$0xf]
    %v465 = vld [vmem:[%s8 + $0x330] sm:$0xff]
    %v466 = vld [vmem:[%s8 + $0x338] sm:$0xf]
    %v467 = vld [vmem:[%s8 + $0x33c] sm:$0xff]
    %v468 = vld [vmem:[%s8 + $0x344] sm:$0xf]
    %v469 = vld [vmem:[%s8 + $0x348] sm:$0xff]
    %v470 = vld [vmem:[%s8 + $0x350] sm:$0xf]
    %v471 = vld [vmem:[%s8 + $0x354] sm:$0xff]
    %v472 = vld [vmem:[%s8 + $0x35c] sm:$0xf]
    %v473 = vld [vmem:[%s8 + $0x360] sm:$0xff]
    %v474 = vld [vmem:[%s8 + $0x368] sm:$0xf]
    %v475 = vld [vmem:[%s8 + $0x36c] sm:$0xff]
    %v476 = vld [vmem:[%s8 + $0x374] sm:$0xf]
    %v477 = vld [vmem:[%s8 + $0x378] sm:$0xff]
    %v478 = vld [vmem:[%s8 + $0x380] sm:$0xf]
    %v479 = vld [vmem:[%s8 + $0x384] sm:$0xff]
    %v480 = vld [vmem:[%s8 + $0x38c] sm:$0xf]
    %v481 = vld [vmem:[%s8 + $0x390] sm:$0xff]
    %v482 = vld [vmem:[%s8 + $0x398] sm:$0xf]
    %v483 = vld [vmem:[%s8 + $0x39c] sm:$0xff]
    %v484 = vld [vmem:[%s8 + $0x3a4] sm:$0xf]
    %v485 = vld [vmem:[%s8 + $0x3a8] sm:$0xff]
    %v486 = vld [vmem:[%s8 + $0x3b0] sm:$0xf]
    %v487 = vld [vmem:[%s8 + $0x3b4] sm:$0xff]
    %v488 = vld [vmem:[%s8 + $0x3bc] sm:$0xf]
    %v489 = vld [vmem:[%s8 + $0x3c0] sm:$0xff]
    %v490 = vld [vmem:[%s8 + $0x3c8] sm:$0xf]
    %v491 = vld [vmem:[%s8 + $0x3cc] sm:$0xff]
    %v492 = vld [vmem:[%s8 + $0x3d4] sm:$0xf]
    %v493 = vld [vmem:[%s8 + $0x3d8] sm:$0xff]
    %v494 = vld [vmem:[%s8 + $0x3e0] sm:$0xf]
    %v495 = vld [vmem:[%s8 + $0x3e4] sm:$0xff]
    %v496 = vld [vmem:[%s8 + $0x3ec] sm:$0xf]
    %v497 = vld [vmem:[%s8 + $0x3f0] sm:$0xff]
    %v498 = vld [vmem:[%s8 + $0x3f8] sm:$0xf]
    %v499 = vld [vmem:[%s8 + $0x3fc] sm:$0xff]
    %v500 = vld [vmem:[%s8 + $0x404] sm:$0xf]
    %v501 = vld [vmem:[%s8 + $0x408] sm:$0xff]
    %v502 = vld [vmem:[%s8 + $0x410] sm:$0xf]
    %v503 = vld [vmem:[%s8 + $0x414] sm:$0xff]
    %v504 = vld [vmem:[%s8 + $0x41c] sm:$0xf]
    %v505 = vld [vmem:[%s8 + $0x420] sm:$0xff]
    %v506 = vld [vmem:[%s8 + $0x428] sm:$0xf]
    %v507 = vld [vmem:[%s8 + $0x42c] sm:$0xff]
    %v508 = vld [vmem:[%s8 + $0x434] sm:$0xf]
    %v509 = vld [vmem:[%s8 + $0x438] sm:$0xff]
    %v510 = vld [vmem:[%s8 + $0x440] sm:$0xf]
    %v511 = vld [vmem:[%s8 + $0x444] sm:$0xff]
    %v512 = vld [vmem:[%s8 + $0x44c] sm:$0xf]
    %v513 = vld [vmem:[%s8 + $0x450] sm:$0xff]
    %v514 = vld [vmem:[%s8 + $0x458] sm:$0xf]
    %v515 = vld [vmem:[%s8 + $0x45c] sm:$0xff]
    %v516 = vld [vmem:[%s8 + $0x464] sm:$0xf]
    %v517 = vld [vmem:[%s8 + $0x468] sm:$0xff]
    %v518 = vld [vmem:[%s8 + $0x470] sm:$0xf]
    %v519 = vld [vmem:[%s8 + $0x474] sm:$0xff]
    %v520 = vld [vmem:[%s8 + $0x47c] sm:$0xf]
    %v521 = vld [vmem:[%s9] sm:$0x7]
    %v523 = vperm.slane %v521, 0
    %v524 = vperm.slane %v521, 1
    %v525 = vperm.slane %v521, 2
    %v721 = vunpack.c.l.b16 %v329
    %v722 = vunpack.c.h.b16 %v329
    %v723 = vunpack.c.l.b16 %v330
    %v724 = vunpack.c.l.b16 %v331
    %v725 = vunpack.c.h.b16 %v331
    %v726 = vunpack.c.l.b16 %v332
    %v727 = vunpack.c.l.b16 %v333
    %v728 = vunpack.c.h.b16 %v333
    %v729 = vunpack.c.l.b16 %v334
    %v730 = vunpack.c.l.b16 %v335
    %v731 = vunpack.c.h.b16 %v335
    %v732 = vunpack.c.l.b16 %v336
    %v733 = vunpack.c.l.b16 %v337
    %v734 = vunpack.c.h.b16 %v337
    %v735 = vunpack.c.l.b16 %v338
    %v736 = vunpack.c.l.b16 %v339
    %v737 = vunpack.c.h.b16 %v339
    %v738 = vunpack.c.l.b16 %v340
    %v739 = vunpack.c.l.b16 %v341
    %v740 = vunpack.c.h.b16 %v341
    %v741 = vunpack.c.l.b16 %v342
    %v742 = vunpack.c.l.b16 %v343
    %v743 = vunpack.c.h.b16 %v343
    %v744 = vunpack.c.l.b16 %v344
    %v745 = vunpack.c.l.b16 %v345
    %v746 = vunpack.c.h.b16 %v345
    %v747 = vunpack.c.l.b16 %v346
    %v748 = vunpack.c.l.b16 %v347
    %v749 = vunpack.c.h.b16 %v347
    %v750 = vunpack.c.l.b16 %v348
    %v751 = vunpack.c.l.b16 %v349
    %v752 = vunpack.c.h.b16 %v349
    %v753 = vunpack.c.l.b16 %v350
    %v754 = vunpack.c.l.b16 %v351
    %v755 = vunpack.c.h.b16 %v351
    %v756 = vunpack.c.l.b16 %v352
    %v757 = vunpack.c.l.b16 %v353
    %v758 = vunpack.c.h.b16 %v353
    %v759 = vunpack.c.l.b16 %v354
    %v760 = vunpack.c.l.b16 %v355
    %v761 = vunpack.c.h.b16 %v355
    %v762 = vunpack.c.l.b16 %v356
    %v763 = vunpack.c.l.b16 %v357
    %v764 = vunpack.c.h.b16 %v357
    %v765 = vunpack.c.l.b16 %v358
    %v766 = vunpack.c.l.b16 %v359
    %v767 = vunpack.c.h.b16 %v359
    %v768 = vunpack.c.l.b16 %v360
    %v769 = vunpack.c.l.b16 %v361
    %v770 = vunpack.c.h.b16 %v361
    %v771 = vunpack.c.l.b16 %v362
    %v772 = vunpack.c.l.b16 %v363
    %v773 = vunpack.c.h.b16 %v363
    %v774 = vunpack.c.l.b16 %v364
    %v775 = vunpack.c.l.b16 %v365
    %v776 = vunpack.c.h.b16 %v365
    %v777 = vunpack.c.l.b16 %v366
    %v778 = vunpack.c.l.b16 %v367
    %v779 = vunpack.c.h.b16 %v367
    %v780 = vunpack.c.l.b16 %v368
    %v781 = vunpack.c.l.b16 %v369
    %v782 = vunpack.c.h.b16 %v369
    %v783 = vunpack.c.l.b16 %v370
    %v784 = vunpack.c.l.b16 %v371
    %v785 = vunpack.c.h.b16 %v371
    %v786 = vunpack.c.l.b16 %v372
    %v787 = vunpack.c.l.b16 %v373
    %v788 = vunpack.c.h.b16 %v373
    %v789 = vunpack.c.l.b16 %v374
    %v790 = vunpack.c.l.b16 %v375
    %v791 = vunpack.c.h.b16 %v375
    %v792 = vunpack.c.l.b16 %v376
    %v793 = vunpack.c.l.b16 %v377
    %v794 = vunpack.c.h.b16 %v377
    %v795 = vunpack.c.l.b16 %v378
    %v796 = vunpack.c.l.b16 %v379
    %v797 = vunpack.c.h.b16 %v379
    %v798 = vunpack.c.l.b16 %v380
    %v799 = vunpack.c.l.b16 %v381
    %v800 = vunpack.c.h.b16 %v381
    %v801 = vunpack.c.l.b16 %v382
    %v802 = vunpack.c.l.b16 %v383
    %v803 = vunpack.c.h.b16 %v383
    %v804 = vunpack.c.l.b16 %v384
    %v805 = vunpack.c.l.b16 %v385
    %v806 = vunpack.c.h.b16 %v385
    %v807 = vunpack.c.l.b16 %v386
    %v808 = vunpack.c.l.b16 %v387
    %v809 = vunpack.c.h.b16 %v387
    %v810 = vunpack.c.l.b16 %v388
    %v811 = vunpack.c.l.b16 %v389
    %v812 = vunpack.c.h.b16 %v389
    %v813 = vunpack.c.l.b16 %v390
    %v814 = vunpack.c.l.b16 %v391
    %v815 = vunpack.c.h.b16 %v391
    %v816 = vunpack.c.l.b16 %v392
    %v817 = vunpack.c.l.b16 %v393
    %v818 = vunpack.c.h.b16 %v393
    %v819 = vunpack.c.l.b16 %v394
    %v820 = vunpack.c.l.b16 %v395
    %v821 = vunpack.c.h.b16 %v395
    %v822 = vunpack.c.l.b16 %v396
    %v823 = vunpack.c.l.b16 %v397
    %v824 = vunpack.c.h.b16 %v397
    %v825 = vunpack.c.l.b16 %v398
    %v826 = vunpack.c.l.b16 %v399
    %v827 = vunpack.c.h.b16 %v399
    %v828 = vunpack.c.l.b16 %v400
    %v829 = vunpack.c.l.b16 %v401
    %v830 = vunpack.c.h.b16 %v401
    %v831 = vunpack.c.l.b16 %v402
    %v832 = vunpack.c.l.b16 %v403
    %v833 = vunpack.c.h.b16 %v403
    %v834 = vunpack.c.l.b16 %v404
    %v835 = vunpack.c.l.b16 %v405
    %v836 = vunpack.c.h.b16 %v405
    %v837 = vunpack.c.l.b16 %v406
    %v838 = vunpack.c.l.b16 %v407
    %v839 = vunpack.c.h.b16 %v407
    %v840 = vunpack.c.l.b16 %v408
    %v841 = vunpack.c.l.b16 %v409
    %v842 = vunpack.c.h.b16 %v409
    %v843 = vunpack.c.l.b16 %v410
    %v844 = vunpack.c.l.b16 %v411
    %v845 = vunpack.c.h.b16 %v411
    %v846 = vunpack.c.l.b16 %v412
    %v847 = vunpack.c.l.b16 %v413
    %v848 = vunpack.c.h.b16 %v413
    %v849 = vunpack.c.l.b16 %v414
    %v850 = vunpack.c.l.b16 %v415
    %v851 = vunpack.c.h.b16 %v415
    %v852 = vunpack.c.l.b16 %v416
    %v853 = vunpack.c.l.b16 %v417
    %v854 = vunpack.c.h.b16 %v417
    %v855 = vunpack.c.l.b16 %v418
    %v856 = vunpack.c.l.b16 %v419
    %v857 = vunpack.c.h.b16 %v419
    %v858 = vunpack.c.l.b16 %v420
    %v859 = vunpack.c.l.b16 %v421
    %v860 = vunpack.c.h.b16 %v421
    %v861 = vunpack.c.l.b16 %v422
    %v862 = vunpack.c.l.b16 %v423
    %v863 = vunpack.c.h.b16 %v423
    %v864 = vunpack.c.l.b16 %v424
    %v865 = vunpack.c.l.b16 %v425
    %v866 = vunpack.c.h.b16 %v425
    %v867 = vunpack.c.l.b16 %v426
    %v868 = vunpack.c.l.b16 %v427
    %v869 = vunpack.c.h.b16 %v427
    %v870 = vunpack.c.l.b16 %v428
    %v871 = vunpack.c.l.b16 %v429
    %v872 = vunpack.c.h.b16 %v429
    %v873 = vunpack.c.l.b16 %v430
    %v874 = vunpack.c.l.b16 %v431
    %v875 = vunpack.c.h.b16 %v431
    %v876 = vunpack.c.l.b16 %v432
    %v877 = vunpack.c.l.b16 %v433
    %v878 = vunpack.c.h.b16 %v433
    %v879 = vunpack.c.l.b16 %v434
    %v880 = vunpack.c.l.b16 %v435
    %v881 = vunpack.c.h.b16 %v435
    %v882 = vunpack.c.l.b16 %v436
    %v883 = vunpack.c.l.b16 %v437
    %v884 = vunpack.c.h.b16 %v437
    %v885 = vunpack.c.l.b16 %v438
    %v886 = vunpack.c.l.b16 %v439
    %v887 = vunpack.c.h.b16 %v439
    %v888 = vunpack.c.l.b16 %v440
    %v889 = vunpack.c.l.b16 %v441
    %v890 = vunpack.c.h.b16 %v441
    %v891 = vunpack.c.l.b16 %v442
    %v892 = vunpack.c.l.b16 %v443
    %v893 = vunpack.c.h.b16 %v443
    %v894 = vunpack.c.l.b16 %v444
    %v895 = vunpack.c.l.b16 %v445
    %v896 = vunpack.c.h.b16 %v445
    %v897 = vunpack.c.l.b16 %v446
    %v898 = vunpack.c.l.b16 %v447
    %v899 = vunpack.c.h.b16 %v447
    %v900 = vunpack.c.l.b16 %v448
    %v901 = vunpack.c.l.b16 %v449
    %v902 = vunpack.c.h.b16 %v449
    %v903 = vunpack.c.l.b16 %v450
    %v904 = vunpack.c.l.b16 %v451
    %v905 = vunpack.c.h.b16 %v451
    %v906 = vunpack.c.l.b16 %v452
    %v907 = vunpack.c.l.b16 %v453
    %v908 = vunpack.c.h.b16 %v453
    %v909 = vunpack.c.l.b16 %v454
    %v910 = vunpack.c.l.b16 %v455
    %v911 = vunpack.c.h.b16 %v455
    %v912 = vunpack.c.l.b16 %v456
    %v913 = vunpack.c.l.b16 %v457
    %v914 = vunpack.c.h.b16 %v457
    %v915 = vunpack.c.l.b16 %v458
    %v916 = vunpack.c.l.b16 %v459
    %v917 = vunpack.c.h.b16 %v459
    %v918 = vunpack.c.l.b16 %v460
    %v919 = vunpack.c.l.b16 %v461
    %v920 = vunpack.c.h.b16 %v461
    %v921 = vunpack.c.l.b16 %v462
    %v922 = vunpack.c.l.b16 %v463
    %v923 = vunpack.c.h.b16 %v463
    %v924 = vunpack.c.l.b16 %v464
    %v925 = vunpack.c.l.b16 %v465
    %v926 = vunpack.c.h.b16 %v465
    %v927 = vunpack.c.l.b16 %v466
    %v928 = vunpack.c.l.b16 %v467
    %v929 = vunpack.c.h.b16 %v467
    %v930 = vunpack.c.l.b16 %v468
    %v931 = vunpack.c.l.b16 %v469
    %v932 = vunpack.c.h.b16 %v469
    %v933 = vunpack.c.l.b16 %v470
    %v934 = vunpack.c.l.b16 %v471
    %v935 = vunpack.c.h.b16 %v471
    %v936 = vunpack.c.l.b16 %v472
    %v937 = vunpack.c.l.b16 %v473
    %v938 = vunpack.c.h.b16 %v473
    %v939 = vunpack.c.l.b16 %v474
    %v940 = vunpack.c.l.b16 %v475
    %v941 = vunpack.c.h.b16 %v475
    %v942 = vunpack.c.l.b16 %v476
    %v943 = vunpack.c.l.b16 %v477
    %v944 = vunpack.c.h.b16 %v477
    %v945 = vunpack.c.l.b16 %v478
    %v946 = vunpack.c.l.b16 %v479
    %v947 = vunpack.c.h.b16 %v479
    %v948 = vunpack.c.l.b16 %v480
    %v949 = vunpack.c.l.b16 %v481
    %v950 = vunpack.c.h.b16 %v481
    %v951 = vunpack.c.l.b16 %v482
    %v952 = vunpack.c.l.b16 %v483
    %v953 = vunpack.c.h.b16 %v483
    %v954 = vunpack.c.l.b16 %v484
    %v955 = vunpack.c.l.b16 %v485
    %v956 = vunpack.c.h.b16 %v485
    %v957 = vunpack.c.l.b16 %v486
    %v958 = vunpack.c.l.b16 %v487
    %v959 = vunpack.c.h.b16 %v487
    %v960 = vunpack.c.l.b16 %v488
    %v961 = vunpack.c.l.b16 %v489
    %v962 = vunpack.c.h.b16 %v489
    %v963 = vunpack.c.l.b16 %v490
    %v964 = vunpack.c.l.b16 %v491
    %v965 = vunpack.c.h.b16 %v491
    %v966 = vunpack.c.l.b16 %v492
    %v967 = vunpack.c.l.b16 %v493
    %v968 = vunpack.c.h.b16 %v493
    %v969 = vunpack.c.l.b16 %v494
    %v970 = vunpack.c.l.b16 %v495
    %v971 = vunpack.c.h.b16 %v495
    %v972 = vunpack.c.l.b16 %v496
    %v973 = vunpack.c.l.b16 %v497
    %v974 = vunpack.c.h.b16 %v497
    %v975 = vunpack.c.l.b16 %v498
    %v976 = vunpack.c.l.b16 %v499
    %v977 = vunpack.c.h.b16 %v499
    %v978 = vunpack.c.l.b16 %v500
    %v979 = vunpack.c.l.b16 %v501
    %v980 = vunpack.c.h.b16 %v501
    %v981 = vunpack.c.l.b16 %v502
    %v982 = vunpack.c.l.b16 %v503
    %v983 = vunpack.c.h.b16 %v503
    %v984 = vunpack.c.l.b16 %v504
    %v985 = vunpack.c.l.b16 %v505
    %v986 = vunpack.c.h.b16 %v505
    %v987 = vunpack.c.l.b16 %v506
    %v988 = vunpack.c.l.b16 %v507
    %v989 = vunpack.c.h.b16 %v507
    %v990 = vunpack.c.l.b16 %v508
    %v991 = vunpack.c.l.b16 %v509
    %v992 = vunpack.c.h.b16 %v509
    %v993 = vunpack.c.l.b16 %v510
    %v994 = vunpack.c.l.b16 %v511
    %v995 = vunpack.c.h.b16 %v511
    %v996 = vunpack.c.l.b16 %v512
    %v997 = vunpack.c.l.b16 %v513
    %v998 = vunpack.c.h.b16 %v513
    %v999 = vunpack.c.l.b16 %v514
    %v1000 = vunpack.c.l.b16 %v515
    %v1001 = vunpack.c.h.b16 %v515
    %v1002 = vunpack.c.l.b16 %v516
    %v1003 = vunpack.c.l.b16 %v517
    %v1004 = vunpack.c.h.b16 %v517
    %v1005 = vunpack.c.l.b16 %v518
    %v1006 = vunpack.c.l.b16 %v519
    %v1007 = vunpack.c.h.b16 %v519
    %v1008 = vunpack.c.l.b16 %v520
    %v1009 = vpack.c.b16 %v724, %v721
    %v1010 = vpack.c.b16 %v725, %v722
    %v1011 = vpack.c.b16 %v726, %v723
    %v1012 = vpack.c.b16 %v730, %v727
    %v1013 = vpack.c.b16 %v731, %v728
    %v1014 = vpack.c.b16 %v732, %v729
    %v1015 = vpack.c.b16 %v736, %v733
    %v1016 = vpack.c.b16 %v737, %v734
    %v1017 = vpack.c.b16 %v738, %v735
    %v1018 = vpack.c.b16 %v742, %v739
    %v1019 = vpack.c.b16 %v743, %v740
    %v1020 = vpack.c.b16 %v744, %v741
    %v1021 = vpack.c.b16 %v748, %v745
    %v1022 = vpack.c.b16 %v749, %v746
    %v1023 = vpack.c.b16 %v750, %v747
    %v1024 = vpack.c.b16 %v754, %v751
    %v1025 = vpack.c.b16 %v755, %v752
    %v1026 = vpack.c.b16 %v756, %v753
    %v1027 = vpack.c.b16 %v760, %v757
    %v1028 = vpack.c.b16 %v761, %v758
    %v1029 = vpack.c.b16 %v762, %v759
    %v1030 = vpack.c.b16 %v766, %v763
    %v1031 = vpack.c.b16 %v767, %v764
    %v1032 = vpack.c.b16 %v768, %v765
    %v1033 = vpack.c.b16 %v772, %v769
    %v1034 = vpack.c.b16 %v773, %v770
    %v1035 = vpack.c.b16 %v774, %v771
    %v1036 = vpack.c.b16 %v778, %v775
    %v1037 = vpack.c.b16 %v779, %v776
    %v1038 = vpack.c.b16 %v780, %v777
    %v1039 = vpack.c.b16 %v784, %v781
    %v1040 = vpack.c.b16 %v785, %v782
    %v1041 = vpack.c.b16 %v786, %v783
    %v1042 = vpack.c.b16 %v790, %v787
    %v1043 = vpack.c.b16 %v791, %v788
    %v1044 = vpack.c.b16 %v792, %v789
    %v1045 = vpack.c.b16 %v796, %v793
    %v1046 = vpack.c.b16 %v797, %v794
    %v1047 = vpack.c.b16 %v798, %v795
    %v1048 = vpack.c.b16 %v802, %v799
    %v1049 = vpack.c.b16 %v803, %v800
    %v1050 = vpack.c.b16 %v804, %v801
    %v1051 = vpack.c.b16 %v808, %v805
    %v1052 = vpack.c.b16 %v809, %v806
    %v1053 = vpack.c.b16 %v810, %v807
    %v1054 = vpack.c.b16 %v814, %v811
    %v1055 = vpack.c.b16 %v815, %v812
    %v1056 = vpack.c.b16 %v816, %v813
    %v1057 = vpack.c.b16 %v820, %v817
    %v1058 = vpack.c.b16 %v821, %v818
    %v1059 = vpack.c.b16 %v822, %v819
    %v1060 = vpack.c.b16 %v826, %v823
    %v1061 = vpack.c.b16 %v827, %v824
    %v1062 = vpack.c.b16 %v828, %v825
    %v1063 = vpack.c.b16 %v832, %v829
    %v1064 = vpack.c.b16 %v833, %v830
    %v1065 = vpack.c.b16 %v834, %v831
    %v1066 = vpack.c.b16 %v838, %v835
    %v1067 = vpack.c.b16 %v839, %v836
    %v1068 = vpack.c.b16 %v840, %v837
    %v1069 = vpack.c.b16 %v844, %v841
    %v1070 = vpack.c.b16 %v845, %v842
    %v1071 = vpack.c.b16 %v846, %v843
    %v1072 = vpack.c.b16 %v850, %v847
    %v1073 = vpack.c.b16 %v851, %v848
    %v1074 = vpack.c.b16 %v852, %v849
    %v1075 = vpack.c.b16 %v856, %v853
    %v1076 = vpack.c.b16 %v857, %v854
    %v1077 = vpack.c.b16 %v858, %v855
    %v1078 = vpack.c.b16 %v862, %v859
    %v1079 = vpack.c.b16 %v863, %v860
    %v1080 = vpack.c.b16 %v864, %v861
    %v1081 = vpack.c.b16 %v868, %v865
    %v1082 = vpack.c.b16 %v869, %v866
    %v1083 = vpack.c.b16 %v870, %v867
    %v1084 = vpack.c.b16 %v874, %v871
    %v1085 = vpack.c.b16 %v875, %v872
    %v1086 = vpack.c.b16 %v876, %v873
    %v1087 = vpack.c.b16 %v880, %v877
    %v1088 = vpack.c.b16 %v881, %v878
    %v1089 = vpack.c.b16 %v882, %v879
    %v1090 = vpack.c.b16 %v886, %v883
    %v1091 = vpack.c.b16 %v887, %v884
    %v1092 = vpack.c.b16 %v888, %v885
    %v1093 = vpack.c.b16 %v892, %v889
    %v1094 = vpack.c.b16 %v893, %v890
    %v1095 = vpack.c.b16 %v894, %v891
    %v1096 = vpack.c.b16 %v898, %v895
    %v1097 = vpack.c.b16 %v899, %v896
    %v1098 = vpack.c.b16 %v900, %v897
    %v1099 = vpack.c.b16 %v904, %v901
    %v1100 = vpack.c.b16 %v905, %v902
    %v1101 = vpack.c.b16 %v906, %v903
    %v1102 = vpack.c.b16 %v910, %v907
    %v1103 = vpack.c.b16 %v911, %v908
    %v1104 = vpack.c.b16 %v912, %v909
    %v1105 = vpack.c.b16 %v916, %v913
    %v1106 = vpack.c.b16 %v917, %v914
    %v1107 = vpack.c.b16 %v918, %v915
    %v1108 = vpack.c.b16 %v922, %v919
    %v1109 = vpack.c.b16 %v923, %v920
    %v1110 = vpack.c.b16 %v924, %v921
    %v1111 = vpack.c.b16 %v928, %v925
    %v1112 = vpack.c.b16 %v929, %v926
    %v1113 = vpack.c.b16 %v930, %v927
    %v1114 = vpack.c.b16 %v934, %v931
    %v1115 = vpack.c.b16 %v935, %v932
    %v1116 = vpack.c.b16 %v936, %v933
    %v1117 = vpack.c.b16 %v940, %v937
    %v1118 = vpack.c.b16 %v941, %v938
    %v1119 = vpack.c.b16 %v942, %v939
    %v1120 = vpack.c.b16 %v946, %v943
    %v1121 = vpack.c.b16 %v947, %v944
    %v1122 = vpack.c.b16 %v948, %v945
    %v1123 = vpack.c.b16 %v952, %v949
    %v1124 = vpack.c.b16 %v953, %v950
    %v1125 = vpack.c.b16 %v954, %v951
    %v1126 = vpack.c.b16 %v958, %v955
    %v1127 = vpack.c.b16 %v959, %v956
    %v1128 = vpack.c.b16 %v960, %v957
    %v1129 = vpack.c.b16 %v964, %v961
    %v1130 = vpack.c.b16 %v965, %v962
    %v1131 = vpack.c.b16 %v966, %v963
    %v1132 = vpack.c.b16 %v970, %v967
    %v1133 = vpack.c.b16 %v971, %v968
    %v1134 = vpack.c.b16 %v972, %v969
    %v1135 = vpack.c.b16 %v976, %v973
    %v1136 = vpack.c.b16 %v977, %v974
    %v1137 = vpack.c.b16 %v978, %v975
    %v1138 = vpack.c.b16 %v982, %v979
    %v1139 = vpack.c.b16 %v983, %v980
    %v1140 = vpack.c.b16 %v984, %v981
    %v1141 = vpack.c.b16 %v988, %v985
    %v1142 = vpack.c.b16 %v989, %v986
    %v1143 = vpack.c.b16 %v990, %v987
    %v1144 = vpack.c.b16 %v994, %v991
    %v1145 = vpack.c.b16 %v995, %v992
    %v1146 = vpack.c.b16 %v996, %v993
    %v1147 = vpack.c.b16 %v1000, %v997
    %v1148 = vpack.c.b16 %v1001, %v998
    %v1149 = vpack.c.b16 %v1002, %v999
    %v1150 = vpack.c.b16 %v1006, %v1003
    %v1151 = vpack.c.b16 %v1007, %v1004
    %v1152 = vpack.c.b16 %v1008, %v1005
    %1297 = vmatpush.bf16.msra.mxu0 %v1030
    %1298 = vmatpush.bf16.msra.mxu0 %v1027
    %1299 = vmatpush.bf16.msra.mxu0 %v1024
    %1300 = vmatpush.bf16.msra.mxu0 %v1021
    %1301 = vmatpush.bf16.msra.mxu0 %v1018
    %1302 = vmatpush.bf16.msra.mxu0 %v1015
    %1303 = vmatpush.bf16.msra.mxu0 %v1012
    %1304 = vmatpush.bf16.msra.mxu0 %v1009
    %1305 = vmatmul.bf16.gmra.mxu0 %v323
    %v1306 = vpop.f32.mrf.mxu0
    %v1307 = vadd.f32 %v523, %v1306
    %v1308 = vpop.f32.mrf.mxu0
    %v1309 = vadd.f32 %v523, %v1308
    %1310 = vdwg.mxu0
    %1311 = vmatpush.bf16.msra.mxu0 %v1054
    %1312 = vmatpush.bf16.msra.mxu0 %v1051
    %1313 = vmatpush.bf16.msra.mxu0 %v1048
    %1314 = vmatpush.bf16.msra.mxu0 %v1045
    %1315 = vmatpush.bf16.msra.mxu0 %v1042
    %1316 = vmatpush.bf16.msra.mxu0 %v1039
    %1317 = vmatpush.bf16.msra.mxu0 %v1036
    %1318 = vmatpush.bf16.msra.mxu0 %v1033
    %1319 = vmatmul.bf16.gmra.mxu0 %v324
    %v1320 = vpop.f32.mrf.mxu0
    %v1321 = vadd.f32 %v1307, %v1320
    %v1322 = vpop.f32.mrf.mxu0
    %v1323 = vadd.f32 %v1309, %v1322
    %1324 = vdwg.mxu0
    %1325 = vmatpush.bf16.msra.mxu0 %v1078
    %1326 = vmatpush.bf16.msra.mxu0 %v1075
    %1327 = vmatpush.bf16.msra.mxu0 %v1072
    %1328 = vmatpush.bf16.msra.mxu0 %v1069
    %1329 = vmatpush.bf16.msra.mxu0 %v1066
    %1330 = vmatpush.bf16.msra.mxu0 %v1063
    %1331 = vmatpush.bf16.msra.mxu0 %v1060
    %1332 = vmatpush.bf16.msra.mxu0 %v1057
    %1333 = vmatmul.bf16.gmra.mxu0 %v325
    %v1334 = vpop.f32.mrf.mxu0
    %v1335 = vadd.f32 %v1321, %v1334
    %v1336 = vpop.f32.mrf.mxu0
    %v1337 = vadd.f32 %v1323, %v1336
    %1338 = vdwg.mxu0
    %1339 = vmatpush.bf16.msra.mxu0 %v1102
    %1340 = vmatpush.bf16.msra.mxu0 %v1099
    %1341 = vmatpush.bf16.msra.mxu0 %v1096
    %1342 = vmatpush.bf16.msra.mxu0 %v1093
    %1343 = vmatpush.bf16.msra.mxu0 %v1090
    %1344 = vmatpush.bf16.msra.mxu0 %v1087
    %1345 = vmatpush.bf16.msra.mxu0 %v1084
    %1346 = vmatpush.bf16.msra.mxu0 %v1081
    %1347 = vmatmul.bf16.gmra.mxu0 %v326
    %v1348 = vpop.f32.mrf.mxu0
    %v1349 = vadd.f32 %v1335, %v1348
    %v1350 = vpop.f32.mrf.mxu0
    %v1351 = vadd.f32 %v1337, %v1350
    %1352 = vdwg.mxu0
    %1353 = vmatpush.bf16.msra.mxu0 %v1126
    %1354 = vmatpush.bf16.msra.mxu0 %v1123
    %1355 = vmatpush.bf16.msra.mxu0 %v1120
    %1356 = vmatpush.bf16.msra.mxu0 %v1117
    %1357 = vmatpush.bf16.msra.mxu0 %v1114
    %1358 = vmatpush.bf16.msra.mxu0 %v1111
    %1359 = vmatpush.bf16.msra.mxu0 %v1108
    %1360 = vmatpush.bf16.msra.mxu0 %v1105
    %1361 = vmatmul.bf16.gmra.mxu0 %v327
    %v1362 = vpop.f32.mrf.mxu0
    %v1363 = vadd.f32 %v1349, %v1362
    %v1364 = vpop.f32.mrf.mxu0
    %v1365 = vadd.f32 %v1351, %v1364
    %1366 = vdwg.mxu0
    %1367 = vmatpush.bf16.msra.mxu0 %v1150
    %1368 = vmatpush.bf16.msra.mxu0 %v1147
    %1369 = vmatpush.bf16.msra.mxu0 %v1144
    %1370 = vmatpush.bf16.msra.mxu0 %v1141
    %1371 = vmatpush.bf16.msra.mxu0 %v1138
    %1372 = vmatpush.bf16.msra.mxu0 %v1135
    %1373 = vmatpush.bf16.msra.mxu0 %v1132
    %1374 = vmatpush.bf16.msra.mxu0 %v1129
    %1375 = vmatmul.bf16.gmra.mxu0 %v328
    %v1376 = vpop.f32.mrf.mxu0
    %v1377 = vadd.f32 %v1363, %v1376
    %v1378 = vpop.f32.mrf.mxu0
    %v1379 = vadd.f32 %v1365, %v1378
    %1380 = vdwg.mxu0
    %1381 = vmatpush.bf16.msra.mxu0 %v1031
    %1382 = vmatpush.bf16.msra.mxu0 %v1028
    %1383 = vmatpush.bf16.msra.mxu0 %v1025
    %1384 = vmatpush.bf16.msra.mxu0 %v1022
    %1385 = vmatpush.bf16.msra.mxu0 %v1019
    %1386 = vmatpush.bf16.msra.mxu0 %v1016
    %1387 = vmatpush.bf16.msra.mxu0 %v1013
    %1388 = vmatpush.bf16.msra.mxu0 %v1010
    %1389 = vmatmul.bf16.gmra.mxu0 %v323
    %v1390 = vpop.f32.mrf.mxu0
    %v1391 = vadd.f32 %v524, %v1390
    %v1392 = vpop.f32.mrf.mxu0
    %v1393 = vadd.f32 %v524, %v1392
    %1394 = vdwg.mxu0
    %1395 = vmatpush.bf16.msra.mxu0 %v1055
    %1396 = vmatpush.bf16.msra.mxu0 %v1052
    %1397 = vmatpush.bf16.msra.mxu0 %v1049
    %1398 = vmatpush.bf16.msra.mxu0 %v1046
    %1399 = vmatpush.bf16.msra.mxu0 %v1043
    %1400 = vmatpush.bf16.msra.mxu0 %v1040
    %1401 = vmatpush.bf16.msra.mxu0 %v1037
    %1402 = vmatpush.bf16.msra.mxu0 %v1034
    %1403 = vmatmul.bf16.gmra.mxu0 %v324
    %v1404 = vpop.f32.mrf.mxu0
    %v1405 = vadd.f32 %v1391, %v1404
    %v1406 = vpop.f32.mrf.mxu0
    %v1407 = vadd.f32 %v1393, %v1406
    %1408 = vdwg.mxu0
    %1409 = vmatpush.bf16.msra.mxu0 %v1079
    %1410 = vmatpush.bf16.msra.mxu0 %v1076
    %1411 = vmatpush.bf16.msra.mxu0 %v1073
    %1412 = vmatpush.bf16.msra.mxu0 %v1070
    %1413 = vmatpush.bf16.msra.mxu0 %v1067
    %1414 = vmatpush.bf16.msra.mxu0 %v1064
    %1415 = vmatpush.bf16.msra.mxu0 %v1061
    %1416 = vmatpush.bf16.msra.mxu0 %v1058
    %1417 = vmatmul.bf16.gmra.mxu0 %v325
    %v1418 = vpop.f32.mrf.mxu0
    %v1419 = vadd.f32 %v1405, %v1418
    %v1420 = vpop.f32.mrf.mxu0
    %v1421 = vadd.f32 %v1407, %v1420
    %1422 = vdwg.mxu0
    %1423 = vmatpush.bf16.msra.mxu0 %v1103
    %1424 = vmatpush.bf16.msra.mxu0 %v1100
    %1425 = vmatpush.bf16.msra.mxu0 %v1097
    %1426 = vmatpush.bf16.msra.mxu0 %v1094
    %1427 = vmatpush.bf16.msra.mxu0 %v1091
    %1428 = vmatpush.bf16.msra.mxu0 %v1088
    %1429 = vmatpush.bf16.msra.mxu0 %v1085
    %1430 = vmatpush.bf16.msra.mxu0 %v1082
    %1431 = vmatmul.bf16.gmra.mxu0 %v326
    %v1432 = vpop.f32.mrf.mxu0
    %v1433 = vadd.f32 %v1419, %v1432
    %v1434 = vpop.f32.mrf.mxu0
    %v1435 = vadd.f32 %v1421, %v1434
    %1436 = vdwg.mxu0
    %1437 = vmatpush.bf16.msra.mxu0 %v1127
    %1438 = vmatpush.bf16.msra.mxu0 %v1124
    %1439 = vmatpush.bf16.msra.mxu0 %v1121
    %1440 = vmatpush.bf16.msra.mxu0 %v1118
    %1441 = vmatpush.bf16.msra.mxu0 %v1115
    %1442 = vmatpush.bf16.msra.mxu0 %v1112
    %1443 = vmatpush.bf16.msra.mxu0 %v1109
    %1444 = vmatpush.bf16.msra.mxu0 %v1106
    %1445 = vmatmul.bf16.gmra.mxu0 %v327
    %v1446 = vpop.f32.mrf.mxu0
    %v1447 = vadd.f32 %v1433, %v1446
    %v1448 = vpop.f32.mrf.mxu0
    %v1449 = vadd.f32 %v1435, %v1448
    %1450 = vdwg.mxu0
    %1451 = vmatpush.bf16.msra.mxu0 %v1151
    %1452 = vmatpush.bf16.msra.mxu0 %v1148
    %1453 = vmatpush.bf16.msra.mxu0 %v1145
    %1454 = vmatpush.bf16.msra.mxu0 %v1142
    %1455 = vmatpush.bf16.msra.mxu0 %v1139
    %1456 = vmatpush.bf16.msra.mxu0 %v1136
    %1457 = vmatpush.bf16.msra.mxu0 %v1133
    %1458 = vmatpush.bf16.msra.mxu0 %v1130
    %1459 = vmatmul.bf16.gmra.mxu0 %v328
    %v1460 = vpop.f32.mrf.mxu0
    %v1461 = vadd.f32 %v1447, %v1460
    %v1462 = vpop.f32.mrf.mxu0
    %v1463 = vadd.f32 %v1449, %v1462
    %1464 = vdwg.mxu0
    %1465 = vmatpush.bf16.msra.mxu0 %v1032
    %1466 = vmatpush.bf16.msra.mxu0 %v1029
    %1467 = vmatpush.bf16.msra.mxu0 %v1026
    %1468 = vmatpush.bf16.msra.mxu0 %v1023
    %1469 = vmatpush.bf16.msra.mxu0 %v1020
    %1470 = vmatpush.bf16.msra.mxu0 %v1017
    %1471 = vmatpush.bf16.msra.mxu0 %v1014
    %1472 = vmatpush.bf16.msra.mxu0 %v1011
    %1473 = vmatmul.bf16.gmra.mxu0 %v323
    %v1474 = vpop.f32.mrf.mxu0
    %v1475 = vadd.f32 %v525, %v1474
    %v1476 = vpop.f32.mrf.mxu0
    %v1477 = vadd.f32 %v525, %v1476
    %1478 = vdwg.mxu0
    %1479 = vmatpush.bf16.msra.mxu0 %v1056
    %1480 = vmatpush.bf16.msra.mxu0 %v1053
    %1481 = vmatpush.bf16.msra.mxu0 %v1050
    %1482 = vmatpush.bf16.msra.mxu0 %v1047
    %1483 = vmatpush.bf16.msra.mxu0 %v1044
    %1484 = vmatpush.bf16.msra.mxu0 %v1041
    %1485 = vmatpush.bf16.msra.mxu0 %v1038
    %1486 = vmatpush.bf16.msra.mxu0 %v1035
    %1487 = vmatmul.bf16.gmra.mxu0 %v324
    %v1488 = vpop.f32.mrf.mxu0
    %v1489 = vadd.f32 %v1475, %v1488
    %v1490 = vpop.f32.mrf.mxu0
    %v1491 = vadd.f32 %v1477, %v1490
    %1492 = vdwg.mxu0
    %1493 = vmatpush.bf16.msra.mxu0 %v1080
    %1494 = vmatpush.bf16.msra.mxu0 %v1077
    %1495 = vmatpush.bf16.msra.mxu0 %v1074
    %1496 = vmatpush.bf16.msra.mxu0 %v1071
    %1497 = vmatpush.bf16.msra.mxu0 %v1068
    %1498 = vmatpush.bf16.msra.mxu0 %v1065
    %1499 = vmatpush.bf16.msra.mxu0 %v1062
    %1500 = vmatpush.bf16.msra.mxu0 %v1059
    %1501 = vmatmul.bf16.gmra.mxu0 %v325
    %v1502 = vpop.f32.mrf.mxu0
    %v1503 = vadd.f32 %v1489, %v1502
    %v1504 = vpop.f32.mrf.mxu0
    %v1505 = vadd.f32 %v1491, %v1504
    %1506 = vdwg.mxu0
    %1507 = vmatpush.bf16.msra.mxu0 %v1104
    %1508 = vmatpush.bf16.msra.mxu0 %v1101
    %1509 = vmatpush.bf16.msra.mxu0 %v1098
    %1510 = vmatpush.bf16.msra.mxu0 %v1095
    %1511 = vmatpush.bf16.msra.mxu0 %v1092
    %1512 = vmatpush.bf16.msra.mxu0 %v1089
    %1513 = vmatpush.bf16.msra.mxu0 %v1086
    %1514 = vmatpush.bf16.msra.mxu0 %v1083
    %1515 = vmatmul.bf16.gmra.mxu0 %v326
    %v1516 = vpop.f32.mrf.mxu0
    %v1517 = vadd.f32 %v1503, %v1516
    %v1518 = vpop.f32.mrf.mxu0
    %v1519 = vadd.f32 %v1505, %v1518
    %1520 = vdwg.mxu0
    %1521 = vmatpush.bf16.msra.mxu0 %v1128
    %1522 = vmatpush.bf16.msra.mxu0 %v1125
    %1523 = vmatpush.bf16.msra.mxu0 %v1122
    %1524 = vmatpush.bf16.msra.mxu0 %v1119
    %1525 = vmatpush.bf16.msra.mxu0 %v1116
    %1526 = vmatpush.bf16.msra.mxu0 %v1113
    %1527 = vmatpush.bf16.msra.mxu0 %v1110
    %1528 = vmatpush.bf16.msra.mxu0 %v1107
    %1529 = vmatmul.bf16.gmra.mxu0 %v327
    %v1530 = vpop.f32.mrf.mxu0
    %v1531 = vadd.f32 %v1517, %v1530
    %v1532 = vpop.f32.mrf.mxu0
    %v1533 = vadd.f32 %v1519, %v1532
    %1534 = vdwg.mxu0
    %1535 = vmatpush.bf16.msra.mxu0 %v1152
    %1536 = vmatpush.bf16.msra.mxu0 %v1149
    %1537 = vmatpush.bf16.msra.mxu0 %v1146
    %1538 = vmatpush.bf16.msra.mxu0 %v1143
    %1539 = vmatpush.bf16.msra.mxu0 %v1140
    %1540 = vmatpush.bf16.msra.mxu0 %v1137
    %1541 = vmatpush.bf16.msra.mxu0 %v1134
    %1542 = vmatpush.bf16.msra.mxu0 %v1131
    %1543 = vmatmul.bf16.gmra.mxu0 %v328
    %v1544 = vpop.f32.mrf.mxu0
    %v1545 = vadd.f32 %v1531, %v1544
    %v1546 = vpop.f32.mrf.mxu0
    %v1547 = vadd.f32 %v1533, %v1546
    %1548 = vdwg.mxu0
    %v1549 = vmax.f32 %v1377, 0.0
    %v1550 = vmax.f32 %v1461, 0.0
    %v1551 = vmax.f32 %v1545, 0.0
    %v1552 = vmax.f32 %v1379, 0.0
    %v1553 = vmax.f32 %v1463, 0.0
    %v1554 = vmax.f32 %v1547, 0.0
    %v1555 = vpack.c.bf16 %v1552, %v1549
    %v1556 = vpack.c.bf16 %v1553, %v1550
    %v1557 = vpack.c.bf16 %v1554, %v1551
    %v1558 = vld [vmem:[%s10] sm:$0xff]
    %v1559 = vld [vmem:[%s10 + $0x8] sm:$0xff]
    %v1560 = vld [vmem:[%s10 + $0x10] sm:$0xff]
    %v1561 = vld [vmem:[%s10 + $0x18] sm:$0xff]
    %v1562 = vld [vmem:[%s10 + $0x20] sm:$0xff]
    %v1563 = vld [vmem:[%s10 + $0x28] sm:$0xff]
    %v1564 = vld [vmem:[%s10 + $0x30] sm:$0xff]
    %v1565 = vld [vmem:[%s10 + $0x38] sm:$0xff]
    %v1566 = vld [vmem:[%s10 + $0x40] sm:$0xff]
    %v1567 = vld [vmem:[%s10 + $0x48] sm:$0xff]
    %v1568 = vld [vmem:[%s10 + $0x50] sm:$0xff]
    %v1569 = vld [vmem:[%s10 + $0x58] sm:$0xff]
    %v1570 = vld [vmem:[%s10 + $0x60] sm:$0xff]
    %v1571 = vld [vmem:[%s10 + $0x68] sm:$0xff]
    %v1572 = vld [vmem:[%s10 + $0x70] sm:$0xff]
    %v1573 = vld [vmem:[%s10 + $0x78] sm:$0xff]
    %v1574 = vld [vmem:[%s10 + $0x80] sm:$0xff]
    %v1575 = vld [vmem:[%s10 + $0x88] sm:$0xff]
    %v1576 = vld [vmem:[%s10 + $0x90] sm:$0xff]
    %v1577 = vld [vmem:[%s10 + $0x98] sm:$0xff]
    %v1578 = vld [vmem:[%s10 + $0xa0] sm:$0xff]
    %v1579 = vld [vmem:[%s10 + $0xa8] sm:$0xff]
    %v1580 = vld [vmem:[%s10 + $0xb0] sm:$0xff]
    %v1581 = vld [vmem:[%s10 + $0xb8] sm:$0xff]
    %v1582 = vld [vmem:[%s10 + $0xc0] sm:$0xff]
    %v1583 = vld [vmem:[%s10 + $0xc8] sm:$0xff]
    %v1584 = vld [vmem:[%s10 + $0xd0] sm:$0xff]
    %v1585 = vld [vmem:[%s10 + $0xd8] sm:$0xff]
    %v1586 = vld [vmem:[%s10 + $0xe0] sm:$0xff]
    %v1587 = vld [vmem:[%s10 + $0xe8] sm:$0xff]
    %v1588 = vld [vmem:[%s10 + $0xf0] sm:$0xff]
    %v1589 = vld [vmem:[%s10 + $0xf8] sm:$0xff]
    %v1590 = vld [vmem:[%s10 + $0x100] sm:$0xff]
    %v1591 = vld [vmem:[%s10 + $0x108] sm:$0xff]
    %v1592 = vld [vmem:[%s10 + $0x110] sm:$0xff]
    %v1593 = vld [vmem:[%s10 + $0x118] sm:$0xff]
    %v1594 = vld [vmem:[%s10 + $0x120] sm:$0xff]
    %v1595 = vld [vmem:[%s10 + $0x128] sm:$0xff]
    %v1596 = vld [vmem:[%s10 + $0x130] sm:$0xff]
    %v1597 = vld [vmem:[%s10 + $0x138] sm:$0xff]
    %v1598 = vld [vmem:[%s10 + $0x140] sm:$0xff]
    %v1599 = vld [vmem:[%s10 + $0x148] sm:$0xff]
    %v1600 = vld [vmem:[%s10 + $0x150] sm:$0xff]
    %v1601 = vld [vmem:[%s10 + $0x158] sm:$0xff]
    %v1602 = vld [vmem:[%s10 + $0x160] sm:$0xff]
    %v1603 = vld [vmem:[%s10 + $0x168] sm:$0xff]
    %v1604 = vld [vmem:[%s10 + $0x170] sm:$0xff]
    %v1605 = vld [vmem:[%s10 + $0x178] sm:$0xff]
    %v1606 = vld [vmem:[%s11] sm:$0x3]
    %v1608 = vperm.slane %v1606, 0
    %v1609 = vperm.slane %v1606, 1
    %v1660 = vunpack.c.l.b16 %v1558
    %v1661 = vunpack.c.h.b16 %v1558
    %v1662 = vunpack.c.l.b16 %v1559
    %v1663 = vunpack.c.h.b16 %v1559
    %v1664 = vunpack.c.l.b16 %v1560
    %v1665 = vunpack.c.h.b16 %v1560
    %v1666 = vunpack.c.l.b16 %v1561
    %v1667 = vunpack.c.h.b16 %v1561
    %v1668 = vunpack.c.l.b16 %v1562
    %v1669 = vunpack.c.h.b16 %v1562
    %v1670 = vunpack.c.l.b16 %v1563
    %v1671 = vunpack.c.h.b16 %v1563
    %v1672 = vunpack.c.l.b16 %v1564
    %v1673 = vunpack.c.h.b16 %v1564
    %v1674 = vunpack.c.l.b16 %v1565
    %v1675 = vunpack.c.h.b16 %v1565
    %v1676 = vunpack.c.l.b16 %v1566
    %v1677 = vunpack.c.h.b16 %v1566
    %v1678 = vunpack.c.l.b16 %v1567
    %v1679 = vunpack.c.h.b16 %v1567
    %v1680 = vunpack.c.l.b16 %v1568
    %v1681 = vunpack.c.h.b16 %v1568
    %v1682 = vunpack.c.l.b16 %v1569
    %v1683 = vunpack.c.h.b16 %v1569
    %v1684 = vunpack.c.l.b16 %v1570
    %v1685 = vunpack.c.h.b16 %v1570
    %v1686 = vunpack.c.l.b16 %v1571
    %v1687 = vunpack.c.h.b16 %v1571
    %v1688 = vunpack.c.l.b16 %v1572
    %v1689 = vunpack.c.h.b16 %v1572
    %v1690 = vunpack.c.l.b16 %v1573
    %v1691 = vunpack.c.h.b16 %v1573
    %v1692 = vunpack.c.l.b16 %v1574
    %v1693 = vunpack.c.h.b16 %v1574
    %v1694 = vunpack.c.l.b16 %v1575
    %v1695 = vunpack.c.h.b16 %v1575
    %v1696 = vunpack.c.l.b16 %v1576
    %v1697 = vunpack.c.h.b16 %v1576
    %v1698 = vunpack.c.l.b16 %v1577
    %v1699 = vunpack.c.h.b16 %v1577
    %v1700 = vunpack.c.l.b16 %v1578
    %v1701 = vunpack.c.h.b16 %v1578
    %v1702 = vunpack.c.l.b16 %v1579
    %v1703 = vunpack.c.h.b16 %v1579
    %v1704 = vunpack.c.l.b16 %v1580
    %v1705 = vunpack.c.h.b16 %v1580
    %v1706 = vunpack.c.l.b16 %v1581
    %v1707 = vunpack.c.h.b16 %v1581
    %v1708 = vunpack.c.l.b16 %v1582
    %v1709 = vunpack.c.h.b16 %v1582
    %v1710 = vunpack.c.l.b16 %v1583
    %v1711 = vunpack.c.h.b16 %v1583
    %v1712 = vunpack.c.l.b16 %v1584
    %v1713 = vunpack.c.h.b16 %v1584
    %v1714 = vunpack.c.l.b16 %v1585
    %v1715 = vunpack.c.h.b16 %v1585
    %v1716 = vunpack.c.l.b16 %v1586
    %v1717 = vunpack.c.h.b16 %v1586
    %v1718 = vunpack.c.l.b16 %v1587
    %v1719 = vunpack.c.h.b16 %v1587
    %v1720 = vunpack.c.l.b16 %v1588
    %v1721 = vunpack.c.h.b16 %v1588
    %v1722 = vunpack.c.l.b16 %v1589
    %v1723 = vunpack.c.h.b16 %v1589
    %v1724 = vunpack.c.l.b16 %v1590
    %v1725 = vunpack.c.h.b16 %v1590
    %v1726 = vunpack.c.l.b16 %v1591
    %v1727 = vunpack.c.h.b16 %v1591
    %v1728 = vunpack.c.l.b16 %v1592
    %v1729 = vunpack.c.h.b16 %v1592
    %v1730 = vunpack.c.l.b16 %v1593
    %v1731 = vunpack.c.h.b16 %v1593
    %v1732 = vunpack.c.l.b16 %v1594
    %v1733 = vunpack.c.h.b16 %v1594
    %v1734 = vunpack.c.l.b16 %v1595
    %v1735 = vunpack.c.h.b16 %v1595
    %v1736 = vunpack.c.l.b16 %v1596
    %v1737 = vunpack.c.h.b16 %v1596
    %v1738 = vunpack.c.l.b16 %v1597
    %v1739 = vunpack.c.h.b16 %v1597
    %v1740 = vunpack.c.l.b16 %v1598
    %v1741 = vunpack.c.h.b16 %v1598
    %v1742 = vunpack.c.l.b16 %v1599
    %v1743 = vunpack.c.h.b16 %v1599
    %v1744 = vunpack.c.l.b16 %v1600
    %v1745 = vunpack.c.h.b16 %v1600
    %v1746 = vunpack.c.l.b16 %v1601
    %v1747 = vunpack.c.h.b16 %v1601
    %v1748 = vunpack.c.l.b16 %v1602
    %v1749 = vunpack.c.h.b16 %v1602
    %v1750 = vunpack.c.l.b16 %v1603
    %v1751 = vunpack.c.h.b16 %v1603
    %v1752 = vunpack.c.l.b16 %v1604
    %v1753 = vunpack.c.h.b16 %v1604
    %v1754 = vunpack.c.l.b16 %v1605
    %v1755 = vunpack.c.h.b16 %v1605
    %v1756 = vpack.c.b16 %v1662, %v1660
    %v1757 = vpack.c.b16 %v1663, %v1661
    %v1758 = vpack.c.b16 %v1666, %v1664
    %v1759 = vpack.c.b16 %v1667, %v1665
    %v1760 = vpack.c.b16 %v1670, %v1668
    %v1761 = vpack.c.b16 %v1671, %v1669
    %v1762 = vpack.c.b16 %v1674, %v1672
    %v1763 = vpack.c.b16 %v1675, %v1673
    %v1764 = vpack.c.b16 %v1678, %v1676
    %v1765 = vpack.c.b16 %v1679, %v1677
    %v1766 = vpack.c.b16 %v1682, %v1680
    %v1767 = vpack.c.b16 %v1683, %v1681
    %v1768 = vpack.c.b16 %v1686, %v1684
    %v1769 = vpack.c.b16 %v1687, %v1685
    %v1770 = vpack.c.b16 %v1690, %v1688
    %v1771 = vpack.c.b16 %v1691, %v1689
    %v1772 = vpack.c.b16 %v1694, %v1692
    %v1773 = vpack.c.b16 %v1695, %v1693
    %v1774 = vpack.c.b16 %v1698, %v1696
    %v1775 = vpack.c.b16 %v1699, %v1697
    %v1776 = vpack.c.b16 %v1702, %v1700
    %v1777 = vpack.c.b16 %v1703, %v1701
    %v1778 = vpack.c.b16 %v1706, %v1704
    %v1779 = vpack.c.b16 %v1707, %v1705
    %v1780 = vpack.c.b16 %v1710, %v1708
    %v1781 = vpack.c.b16 %v1711, %v1709
    %v1782 = vpack.c.b16 %v1714, %v1712
    %v1783 = vpack.c.b16 %v1715, %v1713
    %v1784 = vpack.c.b16 %v1718, %v1716
    %v1785 = vpack.c.b16 %v1719, %v1717
    %v1786 = vpack.c.b16 %v1722, %v1720
    %v1787 = vpack.c.b16 %v1723, %v1721
    %v1788 = vpack.c.b16 %v1726, %v1724
    %v1789 = vpack.c.b16 %v1727, %v1725
    %v1790 = vpack.c.b16 %v1730, %v1728
    %v1791 = vpack.c.b16 %v1731, %v1729
    %v1792 = vpack.c.b16 %v1734, %v1732
    %v1793 = vpack.c.b16 %v1735, %v1733
    %v1794 = vpack.c.b16 %v1738, %v1736
    %v1795 = vpack.c.b16 %v1739, %v1737
    %v1796 = vpack.c.b16 %v1742, %v1740
    %v1797 = vpack.c.b16 %v1743, %v1741
    %v1798 = vpack.c.b16 %v1746, %v1744
    %v1799 = vpack.c.b16 %v1747, %v1745
    %v1800 = vpack.c.b16 %v1750, %v1748
    %v1801 = vpack.c.b16 %v1751, %v1749
    %v1802 = vpack.c.b16 %v1754, %v1752
    %v1803 = vpack.c.b16 %v1755, %v1753
    %1852 = vmatpush.bf16.msra.mxu0 %v1770
    %1853 = vmatpush.bf16.msra.mxu0 %v1768
    %1854 = vmatpush.bf16.msra.mxu0 %v1766
    %1855 = vmatpush.bf16.msra.mxu0 %v1764
    %1856 = vmatpush.bf16.msra.mxu0 %v1762
    %1857 = vmatpush.bf16.msra.mxu0 %v1760
    %1858 = vmatpush.bf16.msra.mxu0 %v1758
    %1859 = vmatpush.bf16.msra.mxu0 %v1756
    %1860 = vmatmul.bf16.gmra.mxu0 %v1555
    %v1861 = vpop.f32.mrf.mxu0
    %v1862 = vadd.f32 %v1608, %v1861
    %v1863 = vpop.f32.mrf.mxu0
    %v1864 = vadd.f32 %v1608, %v1863
    %1865 = vdwg.mxu0
    %1866 = vmatpush.bf16.msra.mxu0 %v1786
    %1867 = vmatpush.bf16.msra.mxu0 %v1784
    %1868 = vmatpush.bf16.msra.mxu0 %v1782
    %1869 = vmatpush.bf16.msra.mxu0 %v1780
    %1870 = vmatpush.bf16.msra.mxu0 %v1778
    %1871 = vmatpush.bf16.msra.mxu0 %v1776
    %1872 = vmatpush.bf16.msra.mxu0 %v1774
    %1873 = vmatpush.bf16.msra.mxu0 %v1772
    %1874 = vmatmul.bf16.gmra.mxu0 %v1556
    %v1875 = vpop.f32.mrf.mxu0
    %v1876 = vadd.f32 %v1862, %v1875
    %v1877 = vpop.f32.mrf.mxu0
    %v1878 = vadd.f32 %v1864, %v1877
    %1879 = vdwg.mxu0
    %1880 = vmatpush.bf16.msra.mxu0 %v1802
    %1881 = vmatpush.bf16.msra.mxu0 %v1800
    %1882 = vmatpush.bf16.msra.mxu0 %v1798
    %1883 = vmatpush.bf16.msra.mxu0 %v1796
    %1884 = vmatpush.bf16.msra.mxu0 %v1794
    %1885 = vmatpush.bf16.msra.mxu0 %v1792
    %1886 = vmatpush.bf16.msra.mxu0 %v1790
    %1887 = vmatpush.bf16.msra.mxu0 %v1788
    %1888 = vmatmul.bf16.gmra.mxu0 %v1557
    %v1889 = vpop.f32.mrf.mxu0
    %v1890 = vadd.f32 %v1876, %v1889
    %v1891 = vpop.f32.mrf.mxu0
    %v1892 = vadd.f32 %v1878, %v1891
    %1893 = vdwg.mxu0
    %1894 = vmatpush.bf16.msra.mxu0 %v1771
    %1895 = vmatpush.bf16.msra.mxu0 %v1769
    %1896 = vmatpush.bf16.msra.mxu0 %v1767
    %1897 = vmatpush.bf16.msra.mxu0 %v1765
    %1898 = vmatpush.bf16.msra.mxu0 %v1763
    %1899 = vmatpush.bf16.msra.mxu0 %v1761
    %1900 = vmatpush.bf16.msra.mxu0 %v1759
    %1901 = vmatpush.bf16.msra.mxu0 %v1757
    %1902 = vmatmul.bf16.gmra.mxu0 %v1555
    %v1903 = vpop.f32.mrf.mxu0
    %v1904 = vadd.f32 %v1609, %v1903
    %v1905 = vpop.f32.mrf.mxu0
    %v1906 = vadd.f32 %v1609, %v1905
    %1907 = vdwg.mxu0
    %1908 = vmatpush.bf16.msra.mxu0 %v1787
    %1909 = vmatpush.bf16.msra.mxu0 %v1785
    %1910 = vmatpush.bf16.msra.mxu0 %v1783
    %1911 = vmatpush.bf16.msra.mxu0 %v1781
    %1912 = vmatpush.bf16.msra.mxu0 %v1779
    %1913 = vmatpush.bf16.msra.mxu0 %v1777
    %1914 = vmatpush.bf16.msra.mxu0 %v1775
    %1915 = vmatpush.bf16.msra.mxu0 %v1773
    %1916 = vmatmul.bf16.gmra.mxu0 %v1556
    %v1917 = vpop.f32.mrf.mxu0
    %v1918 = vadd.f32 %v1904, %v1917
    %v1919 = vpop.f32.mrf.mxu0
    %v1920 = vadd.f32 %v1906, %v1919
    %1921 = vdwg.mxu0
    %1922 = vmatpush.bf16.msra.mxu0 %v1803
    %1923 = vmatpush.bf16.msra.mxu0 %v1801
    %1924 = vmatpush.bf16.msra.mxu0 %v1799
    %1925 = vmatpush.bf16.msra.mxu0 %v1797
    %1926 = vmatpush.bf16.msra.mxu0 %v1795
    %1927 = vmatpush.bf16.msra.mxu0 %v1793
    %1928 = vmatpush.bf16.msra.mxu0 %v1791
    %1929 = vmatpush.bf16.msra.mxu0 %v1789
    %1930 = vmatmul.bf16.gmra.mxu0 %v1557
    %v1931 = vpop.f32.mrf.mxu0
    %v1932 = vadd.f32 %v1918, %v1931
    %v1933 = vpop.f32.mrf.mxu0
    %v1934 = vadd.f32 %v1920, %v1933
    %1935 = vdwg.mxu0
    %v1936 = vmax.f32 %v1890, 0.0
    %v1937 = vmax.f32 %v1932, 0.0
    %v1938 = vmax.f32 %v1892, 0.0
    %v1939 = vmax.f32 %v1934, 0.0
    %v1940 = vpack.c.bf16 %v1938, %v1936
    %v1941 = vpack.c.bf16 %v1939, %v1937
    %v1942 = vld [vmem:[%s12] sm:$0xf]
    %v1943 = vld [vmem:[%s12 + $0x4] sm:$0xf]
    %v1944 = vld [vmem:[%s12 + $0x8] sm:$0xf]
    %v1945 = vld [vmem:[%s12 + $0xc] sm:$0xf]
    %v1946 = vld [vmem:[%s12 + $0x10] sm:$0xf]
    %v1947 = vld [vmem:[%s12 + $0x14] sm:$0xf]
    %v1948 = vld [vmem:[%s12 + $0x18] sm:$0xf]
    %v1949 = vld [vmem:[%s12 + $0x1c] sm:$0xf]
    %v1950 = vld [vmem:[%s12 + $0x20] sm:$0xf]
    %v1951 = vld [vmem:[%s12 + $0x24] sm:$0xf]
    %v1952 = vld [vmem:[%s12 + $0x28] sm:$0xf]
    %v1953 = vld [vmem:[%s12 + $0x2c] sm:$0xf]
    %v1954 = vld [vmem:[%s12 + $0x30] sm:$0xf]
    %v1955 = vld [vmem:[%s12 + $0x34] sm:$0xf]
    %v1956 = vld [vmem:[%s12 + $0x38] sm:$0xf]
    %v1957 = vld [vmem:[%s12 + $0x3c] sm:$0xf]
    %v1958 = vld [vmem:[%s12 + $0x40] sm:$0xf]
    %v1959 = vld [vmem:[%s12 + $0x44] sm:$0xf]
    %v1960 = vld [vmem:[%s12 + $0x48] sm:$0xf]
    %v1961 = vld [vmem:[%s12 + $0x4c] sm:$0xf]
    %v1962 = vld [vmem:[%s12 + $0x50] sm:$0xf]
    %v1963 = vld [vmem:[%s12 + $0x54] sm:$0xf]
    %v1964 = vld [vmem:[%s12 + $0x58] sm:$0xf]
    %v1965 = vld [vmem:[%s12 + $0x5c] sm:$0xf]
    %v1966 = vld [vmem:[%s13] sm:$0x1]
    %v1968 = vperm.slane %v1966, 0
    %v1994 = vunpack.c.l.b16 %v1942
    %v1995 = vunpack.c.l.b16 %v1943
    %v1996 = vunpack.c.l.b16 %v1944
    %v1997 = vunpack.c.l.b16 %v1945
    %v1998 = vunpack.c.l.b16 %v1946
    %v1999 = vunpack.c.l.b16 %v1947
    %v2000 = vunpack.c.l.b16 %v1948
    %v2001 = vunpack.c.l.b16 %v1949
    %v2002 = vunpack.c.l.b16 %v1950
    %v2003 = vunpack.c.l.b16 %v1951
    %v2004 = vunpack.c.l.b16 %v1952
    %v2005 = vunpack.c.l.b16 %v1953
    %v2006 = vunpack.c.l.b16 %v1954
    %v2007 = vunpack.c.l.b16 %v1955
    %v2008 = vunpack.c.l.b16 %v1956
    %v2009 = vunpack.c.l.b16 %v1957
    %v2010 = vunpack.c.l.b16 %v1958
    %v2011 = vunpack.c.l.b16 %v1959
    %v2012 = vunpack.c.l.b16 %v1960
    %v2013 = vunpack.c.l.b16 %v1961
    %v2014 = vunpack.c.l.b16 %v1962
    %v2015 = vunpack.c.l.b16 %v1963
    %v2016 = vunpack.c.l.b16 %v1964
    %v2017 = vunpack.c.l.b16 %v1965
    %v2018 = vpack.c.b16 %v1995, %v1994
    %v2019 = vpack.c.b16 %v1997, %v1996
    %v2020 = vpack.c.b16 %v1999, %v1998
    %v2021 = vpack.c.b16 %v2001, %v2000
    %v2022 = vpack.c.b16 %v2003, %v2002
    %v2023 = vpack.c.b16 %v2005, %v2004
    %v2024 = vpack.c.b16 %v2007, %v2006
    %v2025 = vpack.c.b16 %v2009, %v2008
    %v2026 = vpack.c.b16 %v2011, %v2010
    %v2027 = vpack.c.b16 %v2013, %v2012
    %v2028 = vpack.c.b16 %v2015, %v2014
    %v2029 = vpack.c.b16 %v2017, %v2016
    %vm2042 = vcmask 523264
    %v2044 = vsel %vm2042, %v1941, 0
    %2046 = vmatpush.bf16.msra.mxu0 %v2025
    %2047 = vmatpush.bf16.msra.mxu0 %v2024
    %2048 = vmatpush.bf16.msra.mxu0 %v2023
    %2049 = vmatpush.bf16.msra.mxu0 %v2022
    %2050 = vmatpush.bf16.msra.mxu0 %v2021
    %2051 = vmatpush.bf16.msra.mxu0 %v2020
    %2052 = vmatpush.bf16.msra.mxu0 %v2019
    %2053 = vmatpush.bf16.msra.mxu0 %v2018
    %2054 = vmatmul.bf16.gmra.mxu0 %v1940
    %v2055 = vpop.f32.mrf.mxu0
    %v2056 = vadd.f32 %v1968, %v2055
    %v2057 = vpop.f32.mrf.mxu0
    %v2058 = vadd.f32 %v1968, %v2057
    %2059 = vdwg.mxu0
    %2060 = vmatpush.bf16.msra.mxu0 0
    %2061 = vmatpush.bf16.msra.mxu0 0
    %2062 = vmatpush.bf16.msra.mxu0 0
    %2063 = vmatpush.bf16.msra.mxu0 0
    %2064 = vmatpush.bf16.msra.mxu0 %v2029
    %2065 = vmatpush.bf16.msra.mxu0 %v2028
    %2066 = vmatpush.bf16.msra.mxu0 %v2027
    %2067 = vmatpush.bf16.msra.mxu0 %v2026
    %2068 = vmatmul.bf16.gmra.mxu0 %v2044
    %v2069 = vpop.f32.mrf.mxu0
    %v2070 = vadd.f32 %v2056, %v2069
    %v2071 = vpop.f32.mrf.mxu0
    %v2072 = vadd.f32 %v2058, %v2071
    %2073 = vdwg.mxu0
    %2076 = vrot.lane.b32.xlu0 %v2070, 64
    %v2077 = vpop.permute.xlu0 %2076
    %2078 = vrot.lane.b32.xlu0 %v2072, 64
    %v2079 = vpop.permute.xlu0 %2078
    %v2082 = vsel %vm2042, %v2070, %v2077
    %v2083 = vsel %vm2042, %v2072, %v2079
    %v2084 = vld [vmem:[%s14] sm:$0xff]
    %v2085 = vld [vmem:[%s14 + $0x8] sm:$0xff]
    %v2086 = vld [vmem:[%s14 + $0x10] sm:$0xff]
    %v2087 = vld [vmem:[%s14 + $0x18] sm:$0xff]
    %v2088 = vld [vmem:[%s14 + $0x20] sm:$0xff]
    %v2089 = vld [vmem:[%s14 + $0x28] sm:$0xff]
    %v2090 = vld [vmem:[%s14 + $0x30] sm:$0xff]
    %v2091 = vld [vmem:[%s14 + $0x38] sm:$0xff]
    %v2092 = vadd.f32 %v2084, %v2085
    %v2093 = vadd.f32 %v2092, %v2086
    %v2094 = vadd.f32 %v2093, %v2087
    %2095 = vadd.xlane.f32.xlu0 %v2094
    %v2096 = vpop.xlane.xlu0 %2095
    %v2097 = vadd.f32 %v2088, %v2089
    %v2098 = vadd.f32 %v2097, %v2090
    %v2099 = vadd.f32 %v2098, %v2091
    %2100 = vadd.xlane.f32.xlu0 %v2099
    %v2101 = vpop.xlane.xlu0 %2100
    %v2102 = vmul.f32 %v2096, 0.001953125
    %v2103 = vmul.f32 %v2101, 0.001953125
    %v2104 = vsub.f32 %v2084, %v2102
    %v2105 = vsub.f32 %v2085, %v2102
    %v2106 = vsub.f32 %v2086, %v2102
    %v2107 = vsub.f32 %v2087, %v2102
    %v2108 = vsub.f32 %v2088, %v2103
    %v2109 = vsub.f32 %v2089, %v2103
    %v2110 = vsub.f32 %v2090, %v2103
    %v2111 = vsub.f32 %v2091, %v2103
    %v2112 = vmul.f32 %v2104, %v2104
    %v2113 = vmul.f32 %v2105, %v2105
    %v2114 = vmul.f32 %v2106, %v2106
    %v2115 = vmul.f32 %v2107, %v2107
    %v2116 = vmul.f32 %v2108, %v2108
    %v2117 = vmul.f32 %v2109, %v2109
    %v2118 = vmul.f32 %v2110, %v2110
    %v2119 = vmul.f32 %v2111, %v2111
    %v2120 = vadd.f32 %v2112, %v2113
    %v2121 = vadd.f32 %v2120, %v2114
    %v2122 = vadd.f32 %v2121, %v2115
    %2123 = vadd.xlane.f32.xlu0 %v2122
    %v2124 = vpop.xlane.xlu0 %2123
    %v2125 = vadd.f32 %v2116, %v2117
    %v2126 = vadd.f32 %v2125, %v2118
    %v2127 = vadd.f32 %v2126, %v2119
    %2128 = vadd.xlane.f32.xlu0 %v2127
    %v2129 = vpop.xlane.xlu0 %2128
    %v2130 = vmul.f32 %v2124, 0.0019569471
    %v2131 = vmul.f32 %v2129, 0.0019569471
    %v2132 = vadd.f32 %v2130, 1e-06
    %v2133 = vadd.f32 %v2131, 1e-06
    %v2134 = vrsqrt.pop %v2132
    %v2135 = vmul.f32 %v2134, %v2132
    %v2136 = vmul.f32 %v2135, %v2134
    %v2137 = vmul.f32 0.5, %v2136
    %v2138 = vsub.f32 1.5, %v2137
    %v2139 = vmul.f32 %v2134, %v2138
    %vm2140 = vweird.f32 %v2132
    %vm2141 = vweird.f32 %v2134
    %vm2142 = vmor %vm2140, %vm2141
    %v2143 = vsel %vm2142, %v2134, %v2139
    %v2144 = vrsqrt.pop %v2133
    %v2145 = vmul.f32 %v2144, %v2133
    %v2146 = vmul.f32 %v2145, %v2144
    %v2147 = vmul.f32 0.5, %v2146
    %v2148 = vsub.f32 1.5, %v2147
    %v2149 = vmul.f32 %v2144, %v2148
    %vm2150 = vweird.f32 %v2133
    %vm2151 = vweird.f32 %v2144
    %vm2152 = vmor %vm2150, %vm2151
    %v2153 = vsel %vm2152, %v2144, %v2149
    %v2154 = vmul.f32 %v2104, %v2143
    %v2155 = vmul.f32 %v2105, %v2143
    %v2156 = vmul.f32 %v2106, %v2143
    %v2157 = vmul.f32 %v2107, %v2143
    %v2158 = vmul.f32 %v2108, %v2153
    %v2159 = vmul.f32 %v2109, %v2153
    %v2160 = vmul.f32 %v2110, %v2153
    %v2161 = vmul.f32 %v2111, %v2153
    %v2162 = vsub.f32 %v2082, %v2154
    %v2163 = vsub.f32 %v2082, %v2155
    %v2164 = vsub.f32 %v2082, %v2156
    %v2165 = vsub.f32 %v2082, %v2157
    %v2166 = vsub.f32 %v2083, %v2158
    %v2167 = vsub.f32 %v2083, %v2159
    %v2168 = vsub.f32 %v2083, %v2160
    %v2169 = vsub.f32 %v2083, %v2161
    %v2170 = vmul.f32 %v2162, %v2162
    %v2171 = vmul.f32 %v2163, %v2163
    %v2172 = vmul.f32 %v2164, %v2164
    %v2173 = vmul.f32 %v2165, %v2165
    %v2174 = vmul.f32 %v2166, %v2166
    %v2175 = vmul.f32 %v2167, %v2167
    %v2176 = vmul.f32 %v2168, %v2168
    %v2177 = vmul.f32 %v2169, %v2169
    %v2178 = vadd.f32 %v2170, %v2171
    %v2179 = vadd.f32 %v2178, %v2172
    %v2180 = vadd.f32 %v2179, %v2173
    %2181 = vadd.xlane.f32.xlu0 %v2180
    %v2182 = vpop.xlane.xlu0 %2181
    %v2183 = vadd.f32 %v2174, %v2175
    %v2184 = vadd.f32 %v2183, %v2176
    %v2185 = vadd.f32 %v2184, %v2177
    %2186 = vadd.xlane.f32.xlu0 %v2185
    %v2187 = vpop.xlane.xlu0 %2186
    %v2188 = vmul.f32 %v2182, 0.001953125
    %v2189 = vmul.f32 %v2187, 0.001953125
    %v2190 = vsub.f32 1.0, %v52
    %v2191 = vsub.f32 1.0, %v53
    %v2192 = vmul.f32 %v2188, %v2190
    %v2193 = vmul.f32 %v2189, %v2191
    %vm2194 = vcmask 7168
    %v2195 = vsel %vm2194, %v2192, 0.0
    %v2196 = vsel %vm2194, %v2193, 0.0
    %v2197 = vadd.f32 %v2195, %v2196
    %2198 = vadd.xlane.f32.xlu0 %v2197
    %v2199 = vpop.xlane.xlu0 %2198
    %v2200 = vrot.slane %v2199, 4
    %v2201 = vadd.f32 %v2199, %v2200
    %v2202 = vrot.slane %v2201, 2
    %v2203 = vadd.f32 %v2201, %v2202
    %v2204 = vrot.slane %v2203, 1
    %v2205 = vadd.f32 %v2203, %v2204
    %s2206 = vtos %v2205
    %v2207 = vsel %vm2194, %v2190, 0.0
    %v2208 = vsel %vm2194, %v2191, 0.0
    %v2209 = vadd.f32 %v2207, %v2208
    %2210 = vadd.xlane.f32.xlu0 %v2209
    %v2211 = vpop.xlane.xlu0 %2210
    %v2212 = vrot.slane %v2211, 4
    %v2213 = vadd.f32 %v2211, %v2212
    %v2214 = vrot.slane %v2213, 2
    %v2215 = vadd.f32 %v2213, %v2214
    %v2216 = vrot.slane %v2215, 1
    %v2217 = vadd.f32 %v2215, %v2216
    %s2218 = vtos %v2217
    %s2219 = sadd.f32 %s2218, 1e-08
    %v2220 = vstv %s2219
    %v2221 = vrcp.pop %v2220
    %v2222 = vmul.f32 %v2220, %v2221
    %v2223 = vsub.f32 1.0, %v2222
    %v2224 = vmul.f32 %v2221, %v2223
    %v2225 = vadd.f32 %v2221, %v2224
    %vm2226 = vweird.f32 %v2220
    %vm2227 = vweird.f32 %v2221
    %vm2228 = vmor %vm2226, %vm2227
    %v2229 = vsel %vm2228, %v2221, %v2225
    %v2230 = vand.u32 2147483647, %v2220
    %vm2231 = vcmp.eq.f32.partialorder %v2230, 8.507059e+37
    %v2232 = vand.u32 %v2220, 2147483648
    %v2233 = vor.u32 1.1754944e-38, %v2232
    %v2234 = vsel %vm2231, %v2233, %v2229
    %s2235 = vtos %v2234
    %s2236 = smul.f32 %s2206, %s2235
    %v2237 = vstv %s2236
    %vm2238 = vcmask 0
    %2239 = vst.msk [vmem:[#allocation2] sm:$0x1] %vm2238, %v2237
    // Predicated region
    $region62: #{mambamim_forward.9} parent=1 // pred_check
      _
    $region63: #{mambamim_forward.9} parent=1 // pred_check_branch
      %2241 = sbr.rel (0) target = $region65
    $region64: #{mambamim_forward.9} parent=1 // pred_region
      %2243 = vsyncadd [#allocation3], 0
      %s2245 = sshll.u32 [#allocation2], 4
      %s2246 = int_to_ptr.vmem [resolvable:$true] %s2245
      %s2247 = sshll.u32 %s15, 4
      %s2248 = int_to_ptr.hbm [resolvable:$true] %s2247
      %2250 = dma.vmem_to_hbm [thread:$0]  %s2246, 16, %s2248, [#allocation3]
    $region65: #{mambamim_forward.9} parent=1 // pred_fallthru
      _
    // Predicated region
    $region66: #{mambamim_forward.9} parent=1 // pred_check
      _
    $region67: #{mambamim_forward.9} parent=1 // pred_check_branch
      %2252 = sbr.rel (0) target = $region69
    $region68: #{mambamim_forward.9} parent=1 // pred_region
      %2254 = dma.done [#allocation3], 16
    $region69: #{mambamim_forward.9} parent=1 // pred_fallthru
      _
    %2255 = vsyncpa [#allocation3], 1

</llo_original>
